<compile_context>
chip_gen: v6e
topology: v6e:2x2x1
jax: 0.10.0
libtpu: 0.0.40
codegen_flags: <defaults>
</compile_context>

<pallas_src>
import functools

import numpy as np

import jax
import jax.numpy as jnp
from jax import lax
from jax.experimental import pallas as pl
from jax.experimental.pallas import tpu as pltpu

EPS = 1e-5


# ----------------------- constant stacked gather / scatter matrices ---------------------- #
# Built with numpy at trace time (shape-only), embedded as constants: no runtime cost.

def _conv_gather_stacked(B, L_in, K, stride):
    """Row block k of (G @ x) holds rows x[b, stride*t + k, :] (strided Conv1d windows)."""
    L_out = (L_in - K) // stride + 1
    g = np.zeros((K * B * L_out, B * L_in), np.float32)
    for k in range(K):
        for b in range(B):
            for t in range(L_out):
                g[(k * B + b) * L_out + t, b * L_in + stride * t + k] = 1.0
    return g, L_out


def _convT_scatter_stacked(B, L_in, K, stride):
    """S @ vstack_k(x @ W_k) scatter-adds rows t into output rows stride*t + k (ConvTranspose1d)."""
    L_out = (L_in - 1) * stride + K
    s = np.zeros((B * L_out, K * B * L_in), np.float32)
    for k in range(K):
        for b in range(B):
            for t in range(L_in):
                s[b * L_out + stride * t + k, (k * B + b) * L_in + t] = 1.0
    return s, L_out


# --------------------------------- slab packing helpers --------------------------------- #

def _pack_rows(entries, width):
    """Stack 2-D arrays into one zero-padded (rows, width) slab, each entry 8-row aligned.
    Returns (numpy slab, {name: (row_off, rows, cols)})."""
    lay, off = {}, 0
    for name, a in entries:
        r, c = a.shape
        assert c <= width
        lay[name] = (off, r, c)
        off += r
        off += (-off) % 8
    slab = np.zeros((off, width), np.float32)
    for name, a in entries:
        o, r, c = lay[name]
        slab[o:o + r, :c] = np.asarray(a, np.float32)
    return slab, lay


# --------------------------------------- kernel ----------------------------------------- #

def _ae_kernel(x_ref, sel_ref, s3_ref, w128_ref, w320_ref, fd4_ref, bias_ref, o_ref,
               *, B, lay, slay, brow):
    wrefs = (w128_ref, w320_ref, fd4_ref)

    def W(name):                                   # weight matrix from a packed slab
        s, off, r, c = lay[name]
        return wrefs[s][off:off + r, 0:c]

    def BV(name):                                  # (1, C) bias / BN vector
        i, c = brow[name]
        return bias_ref[i:i + 1, 0:c]

    def S(name):                                   # stacked gather / scatter matrix
        off, r, c = slay[name]
        return sel_ref[off:off + r, 0:c]

    def mm(a, b):
        return jnp.dot(a, b, preferred_element_type=jnp.float32)

    def leaky(v, alpha):
        return jnp.where(v >= 0, v, alpha * v)

    def bn(v, gname, bname):
        # Training-mode BatchNorm1d: per-channel batch stats over all B*L rows.
        mean = jnp.mean(v, axis=0, keepdims=True)
        var = jnp.mean(jnp.square(v - mean), axis=0, keepdims=True)
        return (v - mean) * (lax.rsqrt(var + EPS) * BV(gname)) + BV(bname)

    def conv_bn(v, gname, K, wname, bname, bn_g, bn_b):
        # Strided Conv1d = 1 stacked gather dot + tiny relayout + 1 im2col dot.
        gat = mm(S(gname), v)                                       # (K*R, C_in)
        R = gat.shape[0] // K
        cols = jnp.concatenate([gat[k * R:(k + 1) * R, :] for k in range(K)], axis=1)
        return bn(mm(cols, W(wname)) + BV(bname), bn_g, bn_b)

    def convT(v, sname, K, wname, bname):
        # ConvTranspose1d = 1 hstacked-weight dot + tiny relayout + 1 stacked scatter dot.
        u = mm(v, W(wname))                                         # (R, K*C_out)
        C = u.shape[1] // K
        ust = jnp.concatenate([u[:, k * C:(k + 1) * C] for k in range(K)], axis=0)
        return mm(S(sname), ust) + BV(bname)

    # ------------------------------ conv1d_encoder ------------------------------ #
    h = x_ref[...]                                                  # (B*40, 1)
    h = conv_bn(h, "G1", 4, "c1_w", "c1_b", "bn1_g", "bn1_b")       # (B*19, 32)
    h = conv_bn(h, "G2", 4, "c2_w", "c2_b", "bn2_g", "bn2_b")       # (B*8,  64)
    h = conv_bn(h, "G3", 4, "c3_w", "c3_b", "bn3_g", "bn3_b")       # (B*5, 128)

    # x.view(-1, 640): (B*5, 128) -> (B, 640); fe1_w rows are pre-permuted to (l*128 + c).
    z = jnp.concatenate(
        [jnp.concatenate([h[b * 5 + l:b * 5 + l + 1, :] for l in range(5)], axis=1)
         for b in range(B)], axis=0)                                # (B, 640)

    # -------------------------------- fc encoder -------------------------------- #
    z = leaky(mm(z, W("fe1_w")) + BV("fe1_b"), 0.1)                 # (B, 320)
    z = leaky(mm(z, W("fe2_w")) + BV("fe2_b"), 0.1)                 # (B, 80)
    z = leaky(mm(z, W("fe3_w")) + BV("fe3_b"), 0.01)                # (B, 16)
    z = mm(z, W("fe4_w")) + BV("fe4_b")                             # (B, 8)   latent code

    # -------------------------------- fc decoder -------------------------------- #
    z = leaky(mm(z, W("fd1_w")) + BV("fd1_b"), 0.01)                # (B, 16)
    z = leaky(mm(z, W("fd2_w")) + BV("fd2_b"), 0.01)                # (B, 80)
    z = leaky(mm(z, W("fd3_w")) + BV("fd3_b"), 0.01)                # (B, 320)
    z = jnp.tanh(mm(z, W("fd4_w")) + BV("fd4_b"))                   # (B, 640), cols l*128+c

    # x.view(-1, 128, 5): (B, 640) -> (B*5, 128) (lane-aligned 128-wide column blocks).
    h = jnp.concatenate(
        [z[b:b + 1, l * 128:(l + 1) * 128] for b in range(B) for l in range(5)], axis=0)

    # ------------------------------ conv1d_decoder ------------------------------ #
    h = bn(convT(h, "S1", 4, "d1_w", "d1_b"), "dbn1_g", "dbn1_b")   # (B*12, 64)
    h = bn(convT(h, "S2", 4, "d2_w", "d2_b"), "dbn2_g", "dbn2_b")   # (B*37, 32)

    u = mm(h, W("d3_w"))                                            # (B*37, 5)
    ust = jnp.concatenate([u[:, k:k + 1] for k in range(5)], axis=0)  # (5*B*37, 1)
    y = mm(s3_ref[...], ust)                                        # (B*41, 1)
    # Lane-dense output: (1, B*41) row; (B,1,41) restored by a metadata reshape outside.
    o_ref[...] = jnp.tanh(jnp.transpose(y) + BV("d3_b"))


# ------------------------------------ forward wrapper ------------------------------------ #

def conv1d_ae_forward(x, w128, w320, fd4, bias, *, lay, brow):
    B, c_in, L = x.shape
    assert c_in == 1 and L == 40, "Conv1D_AE expects input of shape (B, 1, 40)"

    g1, l1 = _conv_gather_stacked(B, 40, 4, 2)       # 40 -> 19
    g2, l2 = _conv_gather_stacked(B, l1, 4, 2)       # 19 -> 8
    g3, l3 = _conv_gather_stacked(B, l2, 4, 1)       # 8  -> 5
    s1, d1 = _convT_scatter_stacked(B, l3, 4, 2)     # 5  -> 12
    s2, d2 = _convT_scatter_stacked(B, d1, 4, 3)     # 12 -> 37
    s3, d3 = _convT_scatter_stacked(B, d2, 5, 1)     # 37 -> 41

    sel_np, slay = _pack_rows(
        [("G1", g1), ("G2", g2), ("G3", g3), ("S1", s1), ("S2", s2)],
        width=max(a.shape[1] for a in (g1, g2, g3, s1, s2)))
    sel = jnp.asarray(sel_np)
    s3c = jnp.asarray(s3)                            # widest selector kept standalone

    kernel = functools.partial(_ae_kernel, B=B, lay=lay, slay=slay, brow=brow)

    args = (x.reshape(B * 40, 1), sel, s3c, w128, w320, fd4, bias)
    vmem = pl.BlockSpec(memory_space=pltpu.MemorySpace.VMEM)

    out = pl.pallas_call(
        kernel,
        out_shape=jax.ShapeDtypeStruct((1, B * d3), jnp.float32),
        in_specs=[vmem] * len(args),
        out_specs=vmem,
    )(*args)

    return out.reshape(B, 1, d3)


# ------------------------------ parameters (PyTorch layout) ------------------------------ #

def init_params(key):
    p = {}

    def nrm(k, shape, fan_in):
        return (jax.random.normal(k, shape, dtype=jnp.float32)
                / jnp.sqrt(jnp.float32(fan_in)))

    keys = iter(jax.random.split(key, 32))

    # encoder convs (C_out, C_in, K) + BN
    p["c1_w"] = nrm(next(keys), (32, 1, 4), 1 * 4);    p["c1_b"] = jnp.zeros((32,), jnp.float32)
    p["bn1_g"] = jnp.ones((32,), jnp.float32);         p["bn1_b"] = jnp.zeros((32,), jnp.float32)
    p["c2_w"] = nrm(next(keys), (64, 32, 4), 32 * 4);  p["c2_b"] = jnp.zeros((64,), jnp.float32)
    p["bn2_g"] = jnp.ones((64,), jnp.float32);         p["bn2_b"] = jnp.zeros((64,), jnp.float32)
    p["c3_w"] = nrm(next(keys), (128, 64, 4), 64 * 4); p["c3_b"] = jnp.zeros((128,), jnp.float32)
    p["bn3_g"] = jnp.ones((128,), jnp.float32);        p["bn3_b"] = jnp.zeros((128,), jnp.float32)

    # fc encoder / decoder, stored as (in, out) for direct right-matmul
    for name, (fi, fo) in {"fe1": (640, 320), "fe2": (320, 80),
                           "fe3": (80, 16), "fe4": (16, 8),
                           "fd1": (8, 16), "fd2": (16, 80),
                           "fd3": (80, 320), "fd4": (320, 640)}.items():
        p[name + "_w"] = nrm(next(keys), (fi, fo), fi)
        p[name + "_b"] = jnp.zeros((fo,), jnp.float32)

    # decoder transposed convs (C_in, C_out, K) + BN
    p["d1_w"] = nrm(next(keys), (128, 64, 4), 128 * 4); p["d1_b"] = jnp.zeros((64,), jnp.float32)
    p["dbn1_g"] = jnp.ones((64,), jnp.float32);         p["dbn1_b"] = jnp.zeros((64,), jnp.float32)
    p["d2_w"] = nrm(next(keys), (64, 32, 4), 64 * 4);   p["d2_b"] = jnp.zeros((32,), jnp.float32)
    p["dbn2_g"] = jnp.ones((32,), jnp.float32);         p["dbn2_b"] = jnp.zeros((32,), jnp.float32)
    p["d3_w"] = nrm(next(keys), (32, 1, 5), 32 * 5);    p["d3_b"] = jnp.zeros((1,), jnp.float32)
    return p


_W128_ORDER = ["c1_w", "c2_w", "c3_w", "d2_w", "d3_w",
               "fe2_w", "fe3_w", "fe4_w", "fd1_w", "fd2_w"]
_W320_ORDER = ["d1_w", "fd3_w", "fe1_w"]
_BIAS_ORDER = ["c1_b", "bn1_g", "bn1_b", "c2_b", "bn2_g", "bn2_b", "c3_b", "bn3_g", "bn3_b",
               "fe1_b", "fe2_b", "fe3_b", "fe4_b", "fd1_b", "fd2_b", "fd3_b", "fd4_b",
               "d1_b", "dbn1_g", "dbn1_b", "d2_b", "dbn2_g", "dbn2_b", "d3_b"]


def prepare_params(p):
    """Re-lay out PyTorch-convention params into the fused kernel's layouts and pack them
    into a few VMEM slabs.  Done once, outside the jitted hot path."""
    n = {k: np.asarray(v, np.float32) for k, v in p.items()}
    t = {}

    # encoder convs -> im2col weights (K*C_in, C_out), rows ordered (k, c_in)
    for i in (1, 2, 3):
        w = n[f"c{i}_w"]                                             # (C_out, C_in, K)
        t[f"c{i}_w"] = np.transpose(w, (2, 1, 0)).reshape(w.shape[2] * w.shape[1], w.shape[0])
    # decoder convT -> hstacked weights (C_in, K*C_out), cols ordered (k, c_out)
    for i in (1, 2, 3):
        w = n[f"d{i}_w"]                                             # (C_in, C_out, K)
        t[f"d{i}_w"] = np.transpose(w, (0, 2, 1)).reshape(w.shape[0], w.shape[2] * w.shape[1])

    # Linear(640, 320): regroup input rows from (c*5 + l) to (l*128 + c) so the
    # x.view(-1, 128*5) flatten is a plain (b, l)-ordered in-kernel relayout.
    t["fe1_w"] = np.transpose(n["fe1_w"].reshape(128, 5, 320), (1, 0, 2)).reshape(640, 320)
    for name in ("fe2", "fe3", "fe4", "fd1", "fd2", "fd3"):
        t[name + "_w"] = n[name + "_w"]
    # Linear(320, 640): permute output columns from (c*5 + l) to (l*128 + c) so that
    # x.view(-1, 128, 5) becomes a lane-aligned in-kernel column-block scatter.
    t["fd4_w"] = np.transpose(n["fd4_w"].reshape(320, 128, 5), (0, 2, 1)).reshape(320, 640)

    w128_np, lay128 = _pack_rows([(k, t[k]) for k in _W128_ORDER], 128)
    w320_np, lay320 = _pack_rows([(k, t[k]) for k in _W320_ORDER], 320)
    lay = {}
    for k, v in lay128.items():
        lay[k] = (0,) + v
    for k, v in lay320.items():
        lay[k] = (1,) + v
    lay["fd4_w"] = (2, 0, 320, 640)                  # fd4 passed standalone (no padding)

    bias_np = np.zeros((len(_BIAS_ORDER), 640), np.float32)
    brow = {}
    for i, name in enumerate(_BIAS_ORDER):
        v = (np.transpose(n["fd4_b"].reshape(128, 5)).reshape(-1)
             if name == "fd4_b" else n[name].reshape(-1))
        bias_np[i, :v.size] = v
        brow[name] = (i, int(v.size))

    slabs = {"w128": jnp.asarray(w128_np), "w320": jnp.asarray(w320_np),
             "fd4": jnp.asarray(t["fd4_w"]), "bias": jnp.asarray(bias_np)}
    return slabs, lay, brow


# --------------------------- plain-JAX reference (numerical guard) ------------------------ #

def _reference_forward(x, p):
    hi = lax.Precision.HIGHEST

    def conv(x, w, b, stride):
        y = lax.conv_general_dilated(
            x, w, window_strides=(stride,), padding="VALID",
            dimension_numbers=("NCH", "OIH", "NCH"), precision=hi)
        return y + b[None, :, None]

    def convT(x, w, b, stride):
        k = w.shape[2]
        y = lax.conv_general_dilated(
            x, jnp.transpose(w[:, :, ::-1], (1, 0, 2)),
            window_strides=(1,), padding=[(k - 1, k - 1)], lhs_dilation=(stride,),
            dimension_numbers=("NCH", "OIH", "NCH"), precision=hi)
        return y + b[None, :, None]

    def bn(x, g, b):
        mean = jnp.mean(x, axis=(0, 2), keepdims=True)
        var = jnp.mean(jnp.square(x - mean), axis=(0, 2), keepdims=True)
        return (x - mean) * lax.rsqrt(var + EPS) * g[None, :, None] + b[None, :, None]

    def dense(x, w, b):
        return jnp.dot(x, w, precision=hi) + b

    def leaky(v, a):
        return jnp.where(v >= 0, v, a * v)

    B = x.shape[0]
    h = bn(conv(x, p["c1_w"], p["c1_b"], 2), p["bn1_g"], p["bn1_b"])
    h = bn(conv(h, p["c2_w"], p["c2_b"], 2), p["bn2_g"], p["bn2_b"])
    h = bn(conv(h, p["c3_w"], p["c3_b"], 1), p["bn3_g"], p["bn3_b"])
    z = h.reshape(B, 640)
    z = leaky(dense(z, p["fe1_w"], p["fe1_b"]), 0.1)
    z = leaky(dense(z, p["fe2_w"], p["fe2_b"]), 0.1)
    z = leaky(dense(z, p["fe3_w"], p["fe3_b"]), 0.01)
    z = dense(z, p["fe4_w"], p["fe4_b"])
    z = leaky(dense(z, p["fd1_w"], p["fd1_b"]), 0.01)
    z = leaky(dense(z, p["fd2_w"], p["fd2_b"]), 0.01)
    z = leaky(dense(z, p["fd3_w"], p["fd3_b"]), 0.01)
    z = jnp.tanh(dense(z, p["fd4_w"], p["fd4_b"]))
    h = z.reshape(B, 128, 5)
    h = bn(convT(h, p["d1_w"], p["d1_b"], 2), p["dbn1_g"], p["dbn1_b"])
    h = bn(convT(h, p["d2_w"], p["d2_b"], 3), p["dbn2_g"], p["dbn2_b"])
    return jnp.tanh(convT(h, p["d3_w"], p["d3_b"], 1))


# --------------------------------------------- main --------------------------------------------- #

if __name__ == "__main__":
    key = jax.random.PRNGKey(0)
    k_param, k_x = jax.random.split(key)

    torch_layout_params = init_params(k_param)
    slabs, lay, brow = prepare_params(torch_layout_params)

    # Input length 40 -> encoder lengths 19 -> 8 -> 5, matching view(-1, 128*5).
    x = jax.random.normal(k_x, (2, 1, 40), dtype=jnp.float32)

    fwd = jax.jit(functools.partial(conv1d_ae_forward, lay=lay, brow=brow))
    y = jax.block_until_ready(
        fwd(x, slabs["w128"], slabs["w320"], slabs["fd4"], slabs["bias"]))

    assert y.shape == (2, 1, 41), y.shape
    assert bool(jnp.all(jnp.isfinite(y)))

    # Numerical guard against a plain-JAX/XLA reference of the same forward semantics
    # (tolerance tightened vs. previous version per review; gathers/scatters are exact).
    y_ref = jax.block_until_ready(jax.jit(_reference_forward)(x, torch_layout_params))
    err = float(jnp.max(jnp.abs(y - y_ref)))
    assert jnp.allclose(y, y_ref, atol=2e-3, rtol=2e-3), err

    print("KERNEL_OK")
</pallas_src>

<mosaic_0001>
module attributes {stable_mosaic.version = 11 : i64} {
  func.func @_ae_kernel(%arg0: memref<80x1xf32, #tpu.memory_space<vmem>>, %arg1: memref<360x96xf32, #tpu.memory_space<vmem>>, %arg2: memref<82x370xf32, #tpu.memory_space<vmem>>, %arg3: memref<928x128xf32, #tpu.memory_space<vmem>>, %arg4: memref<848x320xf32, #tpu.memory_space<vmem>>, %arg5: memref<320x640xf32, #tpu.memory_space<vmem>>, %arg6: memref<24x640xf32, #tpu.memory_space<vmem>>, %arg7: memref<1x82xf32, #tpu.memory_space<vmem>>) attributes {dimension_semantics = [], scalar_prefetch = 0 : i64, scratch_operands = 0 : i64, tpu.core_type = #tpu.core_type<tc>} {
    %c0 = arith.constant 0 : index
    %c0_0 = arith.constant 0 : index
    %0 = vector.load %arg0[%c0, %c0_0] : memref<80x1xf32, #tpu.memory_space<vmem>>, vector<80x1xf32>
    %c0_1 = arith.constant 0 : index
    %c0_2 = arith.constant 0 : index
    %1 = vector.load %arg1[%c0_1, %c0_2] : memref<360x96xf32, #tpu.memory_space<vmem>>, vector<152x80xf32>
    %cst = arith.constant dense<0.000000e+00> : vector<152x1xf32>
    %2 = tpu.matmul %1, %0, %cst {dimension_numbers = #tpu.dot_dimension_numbers<[1], [0], [0], [1], [0, 0, 1, 1], [], []>} : vector<152x80xf32>, vector<80x1xf32>, vector<152x1xf32> -> vector<152x1xf32>
    %3 = vector.extract_strided_slice %2 {offsets = [0, 0], sizes = [38, 1], strides = [1, 1]} : vector<152x1xf32> to vector<38x1xf32>
    %4 = vector.extract_strided_slice %2 {offsets = [38, 0], sizes = [38, 1], strides = [1, 1]} : vector<152x1xf32> to vector<38x1xf32>
    %5 = vector.extract_strided_slice %2 {offsets = [76, 0], sizes = [38, 1], strides = [1, 1]} : vector<152x1xf32> to vector<38x1xf32>
    %6 = vector.extract_strided_slice %2 {offsets = [114, 0], sizes = [38, 1], strides = [1, 1]} : vector<152x1xf32> to vector<38x1xf32>
    %7 = tpu.concatenate %3, %4, %5, %6 in 1 : vector<38x1xf32>, vector<38x1xf32>, vector<38x1xf32>, vector<38x1xf32> -> vector<38x4xf32>
    %c0_3 = arith.constant 0 : index
    %c0_4 = arith.constant 0 : index
    %8 = vector.load %arg3[%c0_3, %c0_4] : memref<928x128xf32, #tpu.memory_space<vmem>>, vector<4x32xf32>
    %cst_5 = arith.constant dense<0.000000e+00> : vector<38x32xf32>
    %9 = tpu.matmul %7, %8, %cst_5 {dimension_numbers = #tpu.dot_dimension_numbers<[1], [0], [0], [1], [0, 0, 1, 1], [], []>} : vector<38x4xf32>, vector<4x32xf32>, vector<38x32xf32> -> vector<38x32xf32>
    %c0_6 = arith.constant 0 : index
    %c0_7 = arith.constant 0 : index
    %10 = vector.load %arg6[%c0_6, %c0_7] : memref<24x640xf32, #tpu.memory_space<vmem>>, vector<1x32xf32>
    %11 = vector.broadcast %10 : vector<1x32xf32> to vector<38x32xf32>
    %12 = arith.addf %9, %11 : vector<38x32xf32>
    %cst_8 = arith.constant dense<0.000000e+00> : vector<32xf32>
    %13 = vector.multi_reduction <add>, %12, %cst_8 [0] : vector<38x32xf32> to vector<32xf32>
    %14 = vector.shape_cast %13 : vector<32xf32> to vector<1x32xf32>
    %cst_9 = arith.constant 3.800000e+01 : f32
    %15 = vector.broadcast %cst_9 : f32 to vector<1x32xf32>
    %16 = arith.divf %14, %15 : vector<1x32xf32>
    %17 = vector.broadcast %16 : vector<1x32xf32> to vector<38x32xf32>
    %18 = arith.subf %12, %17 : vector<38x32xf32>
    %19 = arith.mulf %18, %18 : vector<38x32xf32>
    %cst_10 = arith.constant dense<0.000000e+00> : vector<32xf32>
    %20 = vector.multi_reduction <add>, %19, %cst_10 [0] : vector<38x32xf32> to vector<32xf32>
    %21 = vector.shape_cast %20 : vector<32xf32> to vector<1x32xf32>
    %cst_11 = arith.constant 3.800000e+01 : f32
    %22 = vector.broadcast %cst_11 : f32 to vector<1x32xf32>
    %23 = arith.divf %21, %22 : vector<1x32xf32>
    %24 = vector.broadcast %16 : vector<1x32xf32> to vector<38x32xf32>
    %25 = arith.subf %12, %24 : vector<38x32xf32>
    %cst_12 = arith.constant 9.99999974E-6 : f32
    %26 = vector.broadcast %cst_12 : f32 to vector<1x32xf32>
    %27 = arith.addf %23, %26 : vector<1x32xf32>
    %28 = math.rsqrt %27 : vector<1x32xf32>
    %c1 = arith.constant 1 : index
    %c0_13 = arith.constant 0 : index
    %29 = vector.load %arg6[%c1, %c0_13] : memref<24x640xf32, #tpu.memory_space<vmem>>, vector<1x32xf32>
    %30 = arith.mulf %28, %29 : vector<1x32xf32>
    %31 = vector.broadcast %30 : vector<1x32xf32> to vector<38x32xf32>
    %32 = arith.mulf %25, %31 : vector<38x32xf32>
    %c2 = arith.constant 2 : index
    %c0_14 = arith.constant 0 : index
    %33 = vector.load %arg6[%c2, %c0_14] : memref<24x640xf32, #tpu.memory_space<vmem>>, vector<1x32xf32>
    %34 = vector.broadcast %33 : vector<1x32xf32> to vector<38x32xf32>
    %35 = arith.addf %32, %34 : vector<38x32xf32>
    %c152 = arith.constant 152 : index
    %c0_15 = arith.constant 0 : index
    %36 = vector.load %arg1[%c152, %c0_15] : memref<360x96xf32, #tpu.memory_space<vmem>>, vector<64x38xf32>
    %cst_16 = arith.constant dense<0.000000e+00> : vector<64x32xf32>
    %37 = tpu.matmul %36, %35, %cst_16 {dimension_numbers = #tpu.dot_dimension_numbers<[1], [0], [0], [1], [0, 0, 1, 1], [], []>} : vector<64x38xf32>, vector<38x32xf32>, vector<64x32xf32> -> vector<64x32xf32>
    %38 = vector.extract_strided_slice %37 {offsets = [0, 0], sizes = [16, 32], strides = [1, 1]} : vector<64x32xf32> to vector<16x32xf32>
    %39 = vector.extract_strided_slice %37 {offsets = [16, 0], sizes = [16, 32], strides = [1, 1]} : vector<64x32xf32> to vector<16x32xf32>
    %40 = vector.extract_strided_slice %37 {offsets = [32, 0], sizes = [16, 32], strides = [1, 1]} : vector<64x32xf32> to vector<16x32xf32>
    %41 = vector.extract_strided_slice %37 {offsets = [48, 0], sizes = [16, 32], strides = [1, 1]} : vector<64x32xf32> to vector<16x32xf32>
    %42 = tpu.concatenate %38, %39, %40, %41 in 1 : vector<16x32xf32>, vector<16x32xf32>, vector<16x32xf32>, vector<16x32xf32> -> vector<16x128xf32>
    %c8 = arith.constant 8 : index
    %c0_17 = arith.constant 0 : index
    %43 = vector.load %arg3[%c8, %c0_17] : memref<928x128xf32, #tpu.memory_space<vmem>>, vector<128x64xf32>
    %cst_18 = arith.constant dense<0.000000e+00> : vector<16x64xf32>
    %44 = tpu.matmul %42, %43, %cst_18 {dimension_numbers = #tpu.dot_dimension_numbers<[1], [0], [0], [1], [0, 0, 1, 1], [], []>} : vector<16x128xf32>, vector<128x64xf32>, vector<16x64xf32> -> vector<16x64xf32>
    %c3 = arith.constant 3 : index
    %c0_19 = arith.constant 0 : index
    %45 = vector.load %arg6[%c3, %c0_19] : memref<24x640xf32, #tpu.memory_space<vmem>>, vector<1x64xf32>
    %46 = vector.broadcast %45 : vector<1x64xf32> to vector<16x64xf32>
    %47 = arith.addf %44, %46 : vector<16x64xf32>
    %cst_20 = arith.constant dense<0.000000e+00> : vector<64xf32>
    %48 = vector.multi_reduction <add>, %47, %cst_20 [0] : vector<16x64xf32> to vector<64xf32>
    %49 = vector.shape_cast %48 : vector<64xf32> to vector<1x64xf32>
    %cst_21 = arith.constant 1.600000e+01 : f32
    %50 = vector.broadcast %cst_21 : f32 to vector<1x64xf32>
    %51 = arith.divf %49, %50 : vector<1x64xf32>
    %52 = vector.broadcast %51 : vector<1x64xf32> to vector<16x64xf32>
    %53 = arith.subf %47, %52 : vector<16x64xf32>
    %54 = arith.mulf %53, %53 : vector<16x64xf32>
    %cst_22 = arith.constant dense<0.000000e+00> : vector<64xf32>
    %55 = vector.multi_reduction <add>, %54, %cst_22 [0] : vector<16x64xf32> to vector<64xf32>
    %56 = vector.shape_cast %55 : vector<64xf32> to vector<1x64xf32>
    %cst_23 = arith.constant 1.600000e+01 : f32
    %57 = vector.broadcast %cst_23 : f32 to vector<1x64xf32>
    %58 = arith.divf %56, %57 : vector<1x64xf32>
    %59 = vector.broadcast %51 : vector<1x64xf32> to vector<16x64xf32>
    %60 = arith.subf %47, %59 : vector<16x64xf32>
    %cst_24 = arith.constant 9.99999974E-6 : f32
    %61 = vector.broadcast %cst_24 : f32 to vector<1x64xf32>
    %62 = arith.addf %58, %61 : vector<1x64xf32>
    %63 = math.rsqrt %62 : vector<1x64xf32>
    %c4 = arith.constant 4 : index
    %c0_25 = arith.constant 0 : index
    %64 = vector.load %arg6[%c4, %c0_25] : memref<24x640xf32, #tpu.memory_space<vmem>>, vector<1x64xf32>
    %65 = arith.mulf %63, %64 : vector<1x64xf32>
    %66 = vector.broadcast %65 : vector<1x64xf32> to vector<16x64xf32>
    %67 = arith.mulf %60, %66 : vector<16x64xf32>
    %c5 = arith.constant 5 : index
    %c0_26 = arith.constant 0 : index
    %68 = vector.load %arg6[%c5, %c0_26] : memref<24x640xf32, #tpu.memory_space<vmem>>, vector<1x64xf32>
    %69 = vector.broadcast %68 : vector<1x64xf32> to vector<16x64xf32>
    %70 = arith.addf %67, %69 : vector<16x64xf32>
    %c216 = arith.constant 216 : index
    %c0_27 = arith.constant 0 : index
    %71 = vector.load %arg1[%c216, %c0_27] : memref<360x96xf32, #tpu.memory_space<vmem>>, vector<40x16xf32>
    %cst_28 = arith.constant dense<0.000000e+00> : vector<40x64xf32>
    %72 = tpu.matmul %71, %70, %cst_28 {dimension_numbers = #tpu.dot_dimension_numbers<[1], [0], [0], [1], [0, 0, 1, 1], [], []>} : vector<40x16xf32>, vector<16x64xf32>, vector<40x64xf32> -> vector<40x64xf32>
    %73 = vector.extract_strided_slice %72 {offsets = [0, 0], sizes = [10, 64], strides = [1, 1]} : vector<40x64xf32> to vector<10x64xf32>
    %74 = vector.extract_strided_slice %72 {offsets = [10, 0], sizes = [10, 64], strides = [1, 1]} : vector<40x64xf32> to vector<10x64xf32>
    %75 = vector.extract_strided_slice %72 {offsets = [20, 0], sizes = [10, 64], strides = [1, 1]} : vector<40x64xf32> to vector<10x64xf32>
    %76 = vector.extract_strided_slice %72 {offsets = [30, 0], sizes = [10, 64], strides = [1, 1]} : vector<40x64xf32> to vector<10x64xf32>
    %77 = tpu.concatenate %73, %74, %75, %76 in 1 : vector<10x64xf32>, vector<10x64xf32>, vector<10x64xf32>, vector<10x64xf32> -> vector<10x256xf32>
    %c136 = arith.constant 136 : index
    %c0_29 = arith.constant 0 : index
    %78 = vector.load %arg3[%c136, %c0_29] : memref<928x128xf32, #tpu.memory_space<vmem>>, vector<256x128xf32>
    %cst_30 = arith.constant dense<0.000000e+00> : vector<10x128xf32>
    %79 = tpu.matmul %77, %78, %cst_30 {dimension_numbers = #tpu.dot_dimension_numbers<[1], [0], [0], [1], [0, 0, 1, 1], [], []>} : vector<10x256xf32>, vector<256x128xf32>, vector<10x128xf32> -> vector<10x128xf32>
    %c6 = arith.constant 6 : index
    %c0_31 = arith.constant 0 : index
    %80 = vector.load %arg6[%c6, %c0_31] : memref<24x640xf32, #tpu.memory_space<vmem>>, vector<1x128xf32>
    %81 = vector.broadcast %80 : vector<1x128xf32> to vector<10x128xf32>
    %82 = arith.addf %79, %81 : vector<10x128xf32>
    %cst_32 = arith.constant dense<0.000000e+00> : vector<128xf32>
    %83 = vector.multi_reduction <add>, %82, %cst_32 [0] : vector<10x128xf32> to vector<128xf32>
    %84 = vector.shape_cast %83 : vector<128xf32> to vector<1x128xf32>
    %cst_33 = arith.constant 1.000000e+01 : f32
    %85 = vector.broadcast %cst_33 : f32 to vector<1x128xf32>
    %86 = arith.divf %84, %85 : vector<1x128xf32>
    %87 = vector.broadcast %86 : vector<1x128xf32> to vector<10x128xf32>
    %88 = arith.subf %82, %87 : vector<10x128xf32>
    %89 = arith.mulf %88, %88 : vector<10x128xf32>
    %cst_34 = arith.constant dense<0.000000e+00> : vector<128xf32>
    %90 = vector.multi_reduction <add>, %89, %cst_34 [0] : vector<10x128xf32> to vector<128xf32>
    %91 = vector.shape_cast %90 : vector<128xf32> to vector<1x128xf32>
    %cst_35 = arith.constant 1.000000e+01 : f32
    %92 = vector.broadcast %cst_35 : f32 to vector<1x128xf32>
    %93 = arith.divf %91, %92 : vector<1x128xf32>
    %94 = vector.broadcast %86 : vector<1x128xf32> to vector<10x128xf32>
    %95 = arith.subf %82, %94 : vector<10x128xf32>
    %cst_36 = arith.constant 9.99999974E-6 : f32
    %96 = vector.broadcast %cst_36 : f32 to vector<1x128xf32>
    %97 = arith.addf %93, %96 : vector<1x128xf32>
    %98 = math.rsqrt %97 : vector<1x128xf32>
    %c7 = arith.constant 7 : index
    %c0_37 = arith.constant 0 : index
    %99 = vector.load %arg6[%c7, %c0_37] : memref<24x640xf32, #tpu.memory_space<vmem>>, vector<1x128xf32>
    %100 = arith.mulf %98, %99 : vector<1x128xf32>
    %101 = vector.broadcast %100 : vector<1x128xf32> to vector<10x128xf32>
    %102 = arith.mulf %95, %101 : vector<10x128xf32>
    %c8_38 = arith.constant 8 : index
    %c0_39 = arith.constant 0 : index
    %103 = vector.load %arg6[%c8_38, %c0_39] : memref<24x640xf32, #tpu.memory_space<vmem>>, vector<1x128xf32>
    %104 = vector.broadcast %103 : vector<1x128xf32> to vector<10x128xf32>
    %105 = arith.addf %102, %104 : vector<10x128xf32>
    %106 = vector.extract_strided_slice %105 {offsets = [0, 0], sizes = [1, 128], strides = [1, 1]} : vector<10x128xf32> to vector<1x128xf32>
    %107 = vector.extract_strided_slice %105 {offsets = [1, 0], sizes = [1, 128], strides = [1, 1]} : vector<10x128xf32> to vector<1x128xf32>
    %108 = vector.extract_strided_slice %105 {offsets = [2, 0], sizes = [1, 128], strides = [1, 1]} : vector<10x128xf32> to vector<1x128xf32>
    %109 = vector.extract_strided_slice %105 {offsets = [3, 0], sizes = [1, 128], strides = [1, 1]} : vector<10x128xf32> to vector<1x128xf32>
    %110 = vector.extract_strided_slice %105 {offsets = [4, 0], sizes = [1, 128], strides = [1, 1]} : vector<10x128xf32> to vector<1x128xf32>
    %111 = tpu.concatenate %106, %107, %108, %109, %110 in 1 : vector<1x128xf32>, vector<1x128xf32>, vector<1x128xf32>, vector<1x128xf32>, vector<1x128xf32> -> vector<1x640xf32>
    %112 = vector.extract_strided_slice %105 {offsets = [5, 0], sizes = [1, 128], strides = [1, 1]} : vector<10x128xf32> to vector<1x128xf32>
    %113 = vector.extract_strided_slice %105 {offsets = [6, 0], sizes = [1, 128], strides = [1, 1]} : vector<10x128xf32> to vector<1x128xf32>
    %114 = vector.extract_strided_slice %105 {offsets = [7, 0], sizes = [1, 128], strides = [1, 1]} : vector<10x128xf32> to vector<1x128xf32>
    %115 = vector.extract_strided_slice %105 {offsets = [8, 0], sizes = [1, 128], strides = [1, 1]} : vector<10x128xf32> to vector<1x128xf32>
    %116 = vector.extract_strided_slice %105 {offsets = [9, 0], sizes = [1, 128], strides = [1, 1]} : vector<10x128xf32> to vector<1x128xf32>
    %117 = tpu.concatenate %112, %113, %114, %115, %116 in 1 : vector<1x128xf32>, vector<1x128xf32>, vector<1x128xf32>, vector<1x128xf32>, vector<1x128xf32> -> vector<1x640xf32>
    %118 = tpu.concatenate %111, %117 in 0 : vector<1x640xf32>, vector<1x640xf32> -> vector<2x640xf32>
    %c208 = arith.constant 208 : index
    %c0_40 = arith.constant 0 : index
    %119 = vector.load %arg4[%c208, %c0_40] : memref<848x320xf32, #tpu.memory_space<vmem>>, vector<640x320xf32>
    %cst_41 = arith.constant dense<0.000000e+00> : vector<2x320xf32>
    %120 = tpu.matmul %118, %119, %cst_41 {dimension_numbers = #tpu.dot_dimension_numbers<[1], [0], [0], [1], [0, 0, 1, 1], [], []>} : vector<2x640xf32>, vector<640x320xf32>, vector<2x320xf32> -> vector<2x320xf32>
    %c9 = arith.constant 9 : index
    %c0_42 = arith.constant 0 : index
    %121 = vector.load %arg6[%c9, %c0_42] : memref<24x640xf32, #tpu.memory_space<vmem>>, vector<1x320xf32>
    %122 = vector.broadcast %121 : vector<1x320xf32> to vector<2x320xf32>
    %123 = arith.addf %120, %122 : vector<2x320xf32>
    %cst_43 = arith.constant 0.000000e+00 : f32
    %124 = vector.broadcast %cst_43 : f32 to vector<2x320xf32>
    %125 = arith.cmpf oge, %123, %124 : vector<2x320xf32>
    %cst_44 = arith.constant 1.000000e-01 : f32
    %126 = vector.broadcast %cst_44 : f32 to vector<2x320xf32>
    %127 = arith.mulf %126, %123 : vector<2x320xf32>
    %128 = arith.select %125, %123, %127 : vector<2x320xi1>, vector<2x320xf32>
    %c488 = arith.constant 488 : index
    %c0_45 = arith.constant 0 : index
    %129 = vector.load %arg3[%c488, %c0_45] : memref<928x128xf32, #tpu.memory_space<vmem>>, vector<320x80xf32>
    %cst_46 = arith.constant dense<0.000000e+00> : vector<2x80xf32>
    %130 = tpu.matmul %128, %129, %cst_46 {dimension_numbers = #tpu.dot_dimension_numbers<[1], [0], [0], [1], [0, 0, 1, 1], [], []>} : vector<2x320xf32>, vector<320x80xf32>, vector<2x80xf32> -> vector<2x80xf32>
    %c10 = arith.constant 10 : index
    %c0_47 = arith.constant 0 : index
    %131 = vector.load %arg6[%c10, %c0_47] : memref<24x640xf32, #tpu.memory_space<vmem>>, vector<1x80xf32>
    %132 = vector.broadcast %131 : vector<1x80xf32> to vector<2x80xf32>
    %133 = arith.addf %130, %132 : vector<2x80xf32>
    %cst_48 = arith.constant 0.000000e+00 : f32
    %134 = vector.broadcast %cst_48 : f32 to vector<2x80xf32>
    %135 = arith.cmpf oge, %133, %134 : vector<2x80xf32>
    %cst_49 = arith.constant 1.000000e-01 : f32
    %136 = vector.broadcast %cst_49 : f32 to vector<2x80xf32>
    %137 = arith.mulf %136, %133 : vector<2x80xf32>
    %138 = arith.select %135, %133, %137 : vector<2x80xi1>, vector<2x80xf32>
    %c808 = arith.constant 808 : index
    %c0_50 = arith.constant 0 : index
    %139 = vector.load %arg3[%c808, %c0_50] : memref<928x128xf32, #tpu.memory_space<vmem>>, vector<80x16xf32>
    %cst_51 = arith.constant dense<0.000000e+00> : vector<2x16xf32>
    %140 = tpu.matmul %138, %139, %cst_51 {dimension_numbers = #tpu.dot_dimension_numbers<[1], [0], [0], [1], [0, 0, 1, 1], [], []>} : vector<2x80xf32>, vector<80x16xf32>, vector<2x16xf32> -> vector<2x16xf32>
    %c11 = arith.constant 11 : index
    %c0_52 = arith.constant 0 : index
    %141 = vector.load %arg6[%c11, %c0_52] : memref<24x640xf32, #tpu.memory_space<vmem>>, vector<1x16xf32>
    %142 = vector.broadcast %141 : vector<1x16xf32> to vector<2x16xf32>
    %143 = arith.addf %140, %142 : vector<2x16xf32>
    %cst_53 = arith.constant 0.000000e+00 : f32
    %144 = vector.broadcast %cst_53 : f32 to vector<2x16xf32>
    %145 = arith.cmpf oge, %143, %144 : vector<2x16xf32>
    %cst_54 = arith.constant 0.00999999977 : f32
    %146 = vector.broadcast %cst_54 : f32 to vector<2x16xf32>
    %147 = arith.mulf %146, %143 : vector<2x16xf32>
    %148 = arith.select %145, %143, %147 : vector<2x16xi1>, vector<2x16xf32>
    %c888 = arith.constant 888 : index
    %c0_55 = arith.constant 0 : index
    %149 = vector.load %arg3[%c888, %c0_55] : memref<928x128xf32, #tpu.memory_space<vmem>>, vector<16x8xf32>
    %cst_56 = arith.constant dense<0.000000e+00> : vector<2x8xf32>
    %150 = tpu.matmul %148, %149, %cst_56 {dimension_numbers = #tpu.dot_dimension_numbers<[1], [0], [0], [1], [0, 0, 1, 1], [], []>} : vector<2x16xf32>, vector<16x8xf32>, vector<2x8xf32> -> vector<2x8xf32>
    %c12 = arith.constant 12 : index
    %c0_57 = arith.constant 0 : index
    %151 = vector.load %arg6[%c12, %c0_57] : memref<24x640xf32, #tpu.memory_space<vmem>>, vector<1x8xf32>
    %152 = vector.broadcast %151 : vector<1x8xf32> to vector<2x8xf32>
    %153 = arith.addf %150, %152 : vector<2x8xf32>
    %c904 = arith.constant 904 : index
    %c0_58 = arith.constant 0 : index
    %154 = vector.load %arg3[%c904, %c0_58] : memref<928x128xf32, #tpu.memory_space<vmem>>, vector<8x16xf32>
    %cst_59 = arith.constant dense<0.000000e+00> : vector<2x16xf32>
    %155 = tpu.matmul %153, %154, %cst_59 {dimension_numbers = #tpu.dot_dimension_numbers<[1], [0], [0], [1], [0, 0, 1, 1], [], []>} : vector<2x8xf32>, vector<8x16xf32>, vector<2x16xf32> -> vector<2x16xf32>
    %c13 = arith.constant 13 : index
    %c0_60 = arith.constant 0 : index
    %156 = vector.load %arg6[%c13, %c0_60] : memref<24x640xf32, #tpu.memory_space<vmem>>, vector<1x16xf32>
    %157 = vector.broadcast %156 : vector<1x16xf32> to vector<2x16xf32>
    %158 = arith.addf %155, %157 : vector<2x16xf32>
    %cst_61 = arith.constant 0.000000e+00 : f32
    %159 = vector.broadcast %cst_61 : f32 to vector<2x16xf32>
    %160 = arith.cmpf oge, %158, %159 : vector<2x16xf32>
    %cst_62 = arith.constant 0.00999999977 : f32
    %161 = vector.broadcast %cst_62 : f32 to vector<2x16xf32>
    %162 = arith.mulf %161, %158 : vector<2x16xf32>
    %163 = arith.select %160, %158, %162 : vector<2x16xi1>, vector<2x16xf32>
    %c912 = arith.constant 912 : index
    %c0_63 = arith.constant 0 : index
    %164 = vector.load %arg3[%c912, %c0_63] : memref<928x128xf32, #tpu.memory_space<vmem>>, vector<16x80xf32>
    %cst_64 = arith.constant dense<0.000000e+00> : vector<2x80xf32>
    %165 = tpu.matmul %163, %164, %cst_64 {dimension_numbers = #tpu.dot_dimension_numbers<[1], [0], [0], [1], [0, 0, 1, 1], [], []>} : vector<2x16xf32>, vector<16x80xf32>, vector<2x80xf32> -> vector<2x80xf32>
    %c14 = arith.constant 14 : index
    %c0_65 = arith.constant 0 : index
    %166 = vector.load %arg6[%c14, %c0_65] : memref<24x640xf32, #tpu.memory_space<vmem>>, vector<1x80xf32>
    %167 = vector.broadcast %166 : vector<1x80xf32> to vector<2x80xf32>
    %168 = arith.addf %165, %167 : vector<2x80xf32>
    %cst_66 = arith.constant 0.000000e+00 : f32
    %169 = vector.broadcast %cst_66 : f32 to vector<2x80xf32>
    %170 = arith.cmpf oge, %168, %169 : vector<2x80xf32>
    %cst_67 = arith.constant 0.00999999977 : f32
    %171 = vector.broadcast %cst_67 : f32 to vector<2x80xf32>
    %172 = arith.mulf %171, %168 : vector<2x80xf32>
    %173 = arith.select %170, %168, %172 : vector<2x80xi1>, vector<2x80xf32>
    %c128 = arith.constant 128 : index
    %c0_68 = arith.constant 0 : index
    %174 = vector.load %arg4[%c128, %c0_68] : memref<848x320xf32, #tpu.memory_space<vmem>>, vector<80x320xf32>
    %cst_69 = arith.constant dense<0.000000e+00> : vector<2x320xf32>
    %175 = tpu.matmul %173, %174, %cst_69 {dimension_numbers = #tpu.dot_dimension_numbers<[1], [0], [0], [1], [0, 0, 1, 1], [], []>} : vector<2x80xf32>, vector<80x320xf32>, vector<2x320xf32> -> vector<2x320xf32>
    %c15 = arith.constant 15 : index
    %c0_70 = arith.constant 0 : index
    %176 = vector.load %arg6[%c15, %c0_70] : memref<24x640xf32, #tpu.memory_space<vmem>>, vector<1x320xf32>
    %177 = vector.broadcast %176 : vector<1x320xf32> to vector<2x320xf32>
    %178 = arith.addf %175, %177 : vector<2x320xf32>
    %cst_71 = arith.constant 0.000000e+00 : f32
    %179 = vector.broadcast %cst_71 : f32 to vector<2x320xf32>
    %180 = arith.cmpf oge, %178, %179 : vector<2x320xf32>
    %cst_72 = arith.constant 0.00999999977 : f32
    %181 = vector.broadcast %cst_72 : f32 to vector<2x320xf32>
    %182 = arith.mulf %181, %178 : vector<2x320xf32>
    %183 = arith.select %180, %178, %182 : vector<2x320xi1>, vector<2x320xf32>
    %c0_73 = arith.constant 0 : index
    %c0_74 = arith.constant 0 : index
    %184 = vector.load %arg5[%c0_73, %c0_74] : memref<320x640xf32, #tpu.memory_space<vmem>>, vector<320x640xf32>
    %cst_75 = arith.constant dense<0.000000e+00> : vector<2x640xf32>
    %185 = tpu.matmul %183, %184, %cst_75 {dimension_numbers = #tpu.dot_dimension_numbers<[1], [0], [0], [1], [0, 0, 1, 1], [], []>} : vector<2x320xf32>, vector<320x640xf32>, vector<2x640xf32> -> vector<2x640xf32>
    %c16 = arith.constant 16 : index
    %c0_76 = arith.constant 0 : index
    %186 = vector.load %arg6[%c16, %c0_76] : memref<24x640xf32, #tpu.memory_space<vmem>>, vector<1x640xf32>
    %187 = vector.broadcast %186 : vector<1x640xf32> to vector<2x640xf32>
    %188 = arith.addf %185, %187 : vector<2x640xf32>
    %189 = math.tanh %188 : vector<2x640xf32>
    %190 = vector.extract_strided_slice %189 {offsets = [0, 0], sizes = [1, 128], strides = [1, 1]} : vector<2x640xf32> to vector<1x128xf32>
    %191 = vector.extract_strided_slice %189 {offsets = [0, 128], sizes = [1, 128], strides = [1, 1]} : vector<2x640xf32> to vector<1x128xf32>
    %192 = vector.extract_strided_slice %189 {offsets = [0, 256], sizes = [1, 128], strides = [1, 1]} : vector<2x640xf32> to vector<1x128xf32>
    %193 = vector.extract_strided_slice %189 {offsets = [0, 384], sizes = [1, 128], strides = [1, 1]} : vector<2x640xf32> to vector<1x128xf32>
    %194 = vector.extract_strided_slice %189 {offsets = [0, 512], sizes = [1, 128], strides = [1, 1]} : vector<2x640xf32> to vector<1x128xf32>
    %195 = vector.extract_strided_slice %189 {offsets = [1, 0], sizes = [1, 128], strides = [1, 1]} : vector<2x640xf32> to vector<1x128xf32>
    %196 = vector.extract_strided_slice %189 {offsets = [1, 128], sizes = [1, 128], strides = [1, 1]} : vector<2x640xf32> to vector<1x128xf32>
    %197 = vector.extract_strided_slice %189 {offsets = [1, 256], sizes = [1, 128], strides = [1, 1]} : vector<2x640xf32> to vector<1x128xf32>
    %198 = vector.extract_strided_slice %189 {offsets = [1, 384], sizes = [1, 128], strides = [1, 1]} : vector<2x640xf32> to vector<1x128xf32>
    %199 = vector.extract_strided_slice %189 {offsets = [1, 512], sizes = [1, 128], strides = [1, 1]} : vector<2x640xf32> to vector<1x128xf32>
    %200 = tpu.concatenate %190, %191, %192, %193, %194, %195, %196, %197, %198, %199 in 0 : vector<1x128xf32>, vector<1x128xf32>, vector<1x128xf32>, vector<1x128xf32>, vector<1x128xf32>, vector<1x128xf32>, vector<1x128xf32>, vector<1x128xf32>, vector<1x128xf32>, vector<1x128xf32> -> vector<10x128xf32>
    %c0_77 = arith.constant 0 : index
    %c0_78 = arith.constant 0 : index
    %201 = vector.load %arg4[%c0_77, %c0_78] : memref<848x320xf32, #tpu.memory_space<vmem>>, vector<128x256xf32>
    %cst_79 = arith.constant dense<0.000000e+00> : vector<10x256xf32>
    %202 = tpu.matmul %200, %201, %cst_79 {dimension_numbers = #tpu.dot_dimension_numbers<[1], [0], [0], [1], [0, 0, 1, 1], [], []>} : vector<10x128xf32>, vector<128x256xf32>, vector<10x256xf32> -> vector<10x256xf32>
    %203 = vector.extract_strided_slice %202 {offsets = [0, 0], sizes = [10, 64], strides = [1, 1]} : vector<10x256xf32> to vector<10x64xf32>
    %204 = vector.extract_strided_slice %202 {offsets = [0, 64], sizes = [10, 64], strides = [1, 1]} : vector<10x256xf32> to vector<10x64xf32>
    %205 = vector.extract_strided_slice %202 {offsets = [0, 128], sizes = [10, 64], strides = [1, 1]} : vector<10x256xf32> to vector<10x64xf32>
    %206 = vector.extract_strided_slice %202 {offsets = [0, 192], sizes = [10, 64], strides = [1, 1]} : vector<10x256xf32> to vector<10x64xf32>
    %207 = tpu.concatenate %203, %204, %205, %206 in 0 : vector<10x64xf32>, vector<10x64xf32>, vector<10x64xf32>, vector<10x64xf32> -> vector<40x64xf32>
    %c256 = arith.constant 256 : index
    %c0_80 = arith.constant 0 : index
    %208 = vector.load %arg1[%c256, %c0_80] : memref<360x96xf32, #tpu.memory_space<vmem>>, vector<24x40xf32>
    %cst_81 = arith.constant dense<0.000000e+00> : vector<24x64xf32>
    %209 = tpu.matmul %208, %207, %cst_81 {dimension_numbers = #tpu.dot_dimension_numbers<[1], [0], [0], [1], [0, 0, 1, 1], [], []>} : vector<24x40xf32>, vector<40x64xf32>, vector<24x64xf32> -> vector<24x64xf32>
    %c17 = arith.constant 17 : index
    %c0_82 = arith.constant 0 : index
    %210 = vector.load %arg6[%c17, %c0_82] : memref<24x640xf32, #tpu.memory_space<vmem>>, vector<1x64xf32>
    %211 = vector.broadcast %210 : vector<1x64xf32> to vector<24x64xf32>
    %212 = arith.addf %209, %211 : vector<24x64xf32>
    %cst_83 = arith.constant dense<0.000000e+00> : vector<64xf32>
    %213 = vector.multi_reduction <add>, %212, %cst_83 [0] : vector<24x64xf32> to vector<64xf32>
    %214 = vector.shape_cast %213 : vector<64xf32> to vector<1x64xf32>
    %cst_84 = arith.constant 2.400000e+01 : f32
    %215 = vector.broadcast %cst_84 : f32 to vector<1x64xf32>
    %216 = arith.divf %214, %215 : vector<1x64xf32>
    %217 = vector.broadcast %216 : vector<1x64xf32> to vector<24x64xf32>
    %218 = arith.subf %212, %217 : vector<24x64xf32>
    %219 = arith.mulf %218, %218 : vector<24x64xf32>
    %cst_85 = arith.constant dense<0.000000e+00> : vector<64xf32>
    %220 = vector.multi_reduction <add>, %219, %cst_85 [0] : vector<24x64xf32> to vector<64xf32>
    %221 = vector.shape_cast %220 : vector<64xf32> to vector<1x64xf32>
    %cst_86 = arith.constant 2.400000e+01 : f32
    %222 = vector.broadcast %cst_86 : f32 to vector<1x64xf32>
    %223 = arith.divf %221, %222 : vector<1x64xf32>
    %224 = vector.broadcast %216 : vector<1x64xf32> to vector<24x64xf32>
    %225 = arith.subf %212, %224 : vector<24x64xf32>
    %cst_87 = arith.constant 9.99999974E-6 : f32
    %226 = vector.broadcast %cst_87 : f32 to vector<1x64xf32>
    %227 = arith.addf %223, %226 : vector<1x64xf32>
    %228 = math.rsqrt %227 : vector<1x64xf32>
    %c18 = arith.constant 18 : index
    %c0_88 = arith.constant 0 : index
    %229 = vector.load %arg6[%c18, %c0_88] : memref<24x640xf32, #tpu.memory_space<vmem>>, vector<1x64xf32>
    %230 = arith.mulf %228, %229 : vector<1x64xf32>
    %231 = vector.broadcast %230 : vector<1x64xf32> to vector<24x64xf32>
    %232 = arith.mulf %225, %231 : vector<24x64xf32>
    %c19 = arith.constant 19 : index
    %c0_89 = arith.constant 0 : index
    %233 = vector.load %arg6[%c19, %c0_89] : memref<24x640xf32, #tpu.memory_space<vmem>>, vector<1x64xf32>
    %234 = vector.broadcast %233 : vector<1x64xf32> to vector<24x64xf32>
    %235 = arith.addf %232, %234 : vector<24x64xf32>
    %c392 = arith.constant 392 : index
    %c0_90 = arith.constant 0 : index
    %236 = vector.load %arg3[%c392, %c0_90] : memref<928x128xf32, #tpu.memory_space<vmem>>, vector<64x128xf32>
    %cst_91 = arith.constant dense<0.000000e+00> : vector<24x128xf32>
    %237 = tpu.matmul %235, %236, %cst_91 {dimension_numbers = #tpu.dot_dimension_numbers<[1], [0], [0], [1], [0, 0, 1, 1], [], []>} : vector<24x64xf32>, vector<64x128xf32>, vector<24x128xf32> -> vector<24x128xf32>
    %238 = vector.extract_strided_slice %237 {offsets = [0, 0], sizes = [24, 32], strides = [1, 1]} : vector<24x128xf32> to vector<24x32xf32>
    %239 = vector.extract_strided_slice %237 {offsets = [0, 32], sizes = [24, 32], strides = [1, 1]} : vector<24x128xf32> to vector<24x32xf32>
    %240 = vector.extract_strided_slice %237 {offsets = [0, 64], sizes = [24, 32], strides = [1, 1]} : vector<24x128xf32> to vector<24x32xf32>
    %241 = vector.extract_strided_slice %237 {offsets = [0, 96], sizes = [24, 32], strides = [1, 1]} : vector<24x128xf32> to vector<24x32xf32>
    %242 = tpu.concatenate %238, %239, %240, %241 in 0 : vector<24x32xf32>, vector<24x32xf32>, vector<24x32xf32>, vector<24x32xf32> -> vector<96x32xf32>
    %c280 = arith.constant 280 : index
    %c0_92 = arith.constant 0 : index
    %243 = vector.load %arg1[%c280, %c0_92] : memref<360x96xf32, #tpu.memory_space<vmem>>, vector<74x96xf32>
    %cst_93 = arith.constant dense<0.000000e+00> : vector<74x32xf32>
    %244 = tpu.matmul %243, %242, %cst_93 {dimension_numbers = #tpu.dot_dimension_numbers<[1], [0], [0], [1], [0, 0, 1, 1], [], []>} : vector<74x96xf32>, vector<96x32xf32>, vector<74x32xf32> -> vector<74x32xf32>
    %c20 = arith.constant 20 : index
    %c0_94 = arith.constant 0 : index
    %245 = vector.load %arg6[%c20, %c0_94] : memref<24x640xf32, #tpu.memory_space<vmem>>, vector<1x32xf32>
    %246 = vector.broadcast %245 : vector<1x32xf32> to vector<74x32xf32>
    %247 = arith.addf %244, %246 : vector<74x32xf32>
    %cst_95 = arith.constant dense<0.000000e+00> : vector<32xf32>
    %248 = vector.multi_reduction <add>, %247, %cst_95 [0] : vector<74x32xf32> to vector<32xf32>
    %249 = vector.shape_cast %248 : vector<32xf32> to vector<1x32xf32>
    %cst_96 = arith.constant 7.400000e+01 : f32
    %250 = vector.broadcast %cst_96 : f32 to vector<1x32xf32>
    %251 = arith.divf %249, %250 : vector<1x32xf32>
    %252 = vector.broadcast %251 : vector<1x32xf32> to vector<74x32xf32>
    %253 = arith.subf %247, %252 : vector<74x32xf32>
    %254 = arith.mulf %253, %253 : vector<74x32xf32>
    %cst_97 = arith.constant dense<0.000000e+00> : vector<32xf32>
    %255 = vector.multi_reduction <add>, %254, %cst_97 [0] : vector<74x32xf32> to vector<32xf32>
    %256 = vector.shape_cast %255 : vector<32xf32> to vector<1x32xf32>
    %cst_98 = arith.constant 7.400000e+01 : f32
    %257 = vector.broadcast %cst_98 : f32 to vector<1x32xf32>
    %258 = arith.divf %256, %257 : vector<1x32xf32>
    %259 = vector.broadcast %251 : vector<1x32xf32> to vector<74x32xf32>
    %260 = arith.subf %247, %259 : vector<74x32xf32>
    %cst_99 = arith.constant 9.99999974E-6 : f32
    %261 = vector.broadcast %cst_99 : f32 to vector<1x32xf32>
    %262 = arith.addf %258, %261 : vector<1x32xf32>
    %263 = math.rsqrt %262 : vector<1x32xf32>
    %c21 = arith.constant 21 : index
    %c0_100 = arith.constant 0 : index
    %264 = vector.load %arg6[%c21, %c0_100] : memref<24x640xf32, #tpu.memory_space<vmem>>, vector<1x32xf32>
    %265 = arith.mulf %263, %264 : vector<1x32xf32>
    %266 = vector.broadcast %265 : vector<1x32xf32> to vector<74x32xf32>
    %267 = arith.mulf %260, %266 : vector<74x32xf32>
    %c22 = arith.constant 22 : index
    %c0_101 = arith.constant 0 : index
    %268 = vector.load %arg6[%c22, %c0_101] : memref<24x640xf32, #tpu.memory_space<vmem>>, vector<1x32xf32>
    %269 = vector.broadcast %268 : vector<1x32xf32> to vector<74x32xf32>
    %270 = arith.addf %267, %269 : vector<74x32xf32>
    %c456 = arith.constant 456 : index
    %c0_102 = arith.constant 0 : index
    %271 = vector.load %arg3[%c456, %c0_102] : memref<928x128xf32, #tpu.memory_space<vmem>>, vector<32x5xf32>
    %cst_103 = arith.constant dense<0.000000e+00> : vector<74x5xf32>
    %272 = tpu.matmul %270, %271, %cst_103 {dimension_numbers = #tpu.dot_dimension_numbers<[1], [0], [0], [1], [0, 0, 1, 1], [], []>} : vector<74x32xf32>, vector<32x5xf32>, vector<74x5xf32> -> vector<74x5xf32>
    %273 = vector.extract_strided_slice %272 {offsets = [0, 0], sizes = [74, 1], strides = [1, 1]} : vector<74x5xf32> to vector<74x1xf32>
    %274 = vector.extract_strided_slice %272 {offsets = [0, 1], sizes = [74, 1], strides = [1, 1]} : vector<74x5xf32> to vector<74x1xf32>
    %275 = vector.extract_strided_slice %272 {offsets = [0, 2], sizes = [74, 1], strides = [1, 1]} : vector<74x5xf32> to vector<74x1xf32>
    %276 = vector.extract_strided_slice %272 {offsets = [0, 3], sizes = [74, 1], strides = [1, 1]} : vector<74x5xf32> to vector<74x1xf32>
    %277 = vector.extract_strided_slice %272 {offsets = [0, 4], sizes = [74, 1], strides = [1, 1]} : vector<74x5xf32> to vector<74x1xf32>
    %278 = tpu.concatenate %273, %274, %275, %276, %277 in 0 : vector<74x1xf32>, vector<74x1xf32>, vector<74x1xf32>, vector<74x1xf32>, vector<74x1xf32> -> vector<370x1xf32>
    %c0_104 = arith.constant 0 : index
    %c0_105 = arith.constant 0 : index
    %279 = vector.load %arg2[%c0_104, %c0_105] : memref<82x370xf32, #tpu.memory_space<vmem>>, vector<82x370xf32>
    %cst_106 = arith.constant dense<0.000000e+00> : vector<82x1xf32>
    %280 = tpu.matmul %279, %278, %cst_106 {dimension_numbers = #tpu.dot_dimension_numbers<[1], [0], [0], [1], [0, 0, 1, 1], [], []>} : vector<82x370xf32>, vector<370x1xf32>, vector<82x1xf32> -> vector<82x1xf32>
    %281 = tpu.transpose %280, [1, 0] : vector<82x1xf32> -> vector<1x82xf32>
    %c23 = arith.constant 23 : index
    %c0_107 = arith.constant 0 : index
    %282 = vector.load %arg6[%c23, %c0_107] : memref<24x640xf32, #tpu.memory_space<vmem>>, vector<1x1xf32>
    %283 = vector.broadcast %282 : vector<1x1xf32> to vector<1x82xf32>
    %284 = arith.addf %281, %283 : vector<1x82xf32>
    %285 = math.tanh %284 : vector<1x82xf32>
    %c0_108 = arith.constant 0 : index
    %c0_109 = arith.constant 0 : index
    %286 = vector.load %arg7[%c0_108, %c0_109] : memref<1x82xf32, #tpu.memory_space<vmem>>, vector<1x82xf32>
    tpu.vector_store %arg7[%c0_108, %c0_109], %285 {strides = array<i32>} : memref<1x82xf32, #tpu.memory_space<vmem>>, vector<1x82xf32>,
    return
  }
}

</mosaic_0001>

<llo_original>
// kernel: conv1d_ae_forward.1
$region0: #{conv1d_ae_forward.1}
  #allocation0 [shape = 'u32[]', space=smem, size = 0x4, offset = 0x4, fixed_abs, tag = 'smem constant byte address 0x4 - core index']
  #allocation1 [shape = 'u32[144,128]{1,0:T(1,128)}', space=vmem, size = 0x12000, scoped, tag = 'internal scratch']
  %s0 = inlined_call_operand.vmem [shape: f32[80,1], index: 0, kind: input, shape index: {}]
  %s1 = inlined_call_operand.vmem [shape: f32[360,96], index: 1, kind: input, shape index: {}]
  %s2 = inlined_call_operand.vmem [shape: f32[82,370], index: 2, kind: input, shape index: {}]
  %s3 = inlined_call_operand.vmem [shape: f32[928,128], index: 3, kind: input, shape index: {}]
  %s4 = inlined_call_operand.vmem [shape: f32[848,320], index: 4, kind: input, shape index: {}]
  %s5 = inlined_call_operand.vmem [shape: f32[320,640], index: 5, kind: input, shape index: {}]
  %s6 = inlined_call_operand.vmem [shape: f32[24,640], index: 6, kind: input, shape index: {}]
  %s7 = inlined_call_operand.vmem [shape: f32[1,82], index: 7, kind: output, shape index: {}]
  %s8 = sld [smem:[#allocation0]]
  $region38: #{conv1d_ae_forward.1} parent=0
    _
  %s10 = ssub.s32 1, %s8
  %s11 = scalar_select 0, %s10, %s8
  // Predicated region
  $region2: #{conv1d_ae_forward.1} parent=0 // pred_check
    _
  $region3: #{conv1d_ae_forward.1} parent=0 // pred_check_branch
    %13 = sbr.rel (0) target = $region5
  $region4: #{conv1d_ae_forward.1} parent=0 // pred_region
    _
  $region5: #{conv1d_ae_forward.1} parent=0 // pred_fallthru
    _
  // Predicated region
  $region6: #{conv1d_ae_forward.1} parent=0 // pred_check
    _
  $region7: #{conv1d_ae_forward.1} parent=0 // pred_check_branch
    %15 = sbr.rel (0) target = $region9
  $region8: #{conv1d_ae_forward.1} parent=0 // pred_region
    _
  $region9: #{conv1d_ae_forward.1} parent=0 // pred_fallthru
    _
  // Predicated region
  $region10: #{conv1d_ae_forward.1} parent=0 // pred_check
    _
  $region11: #{conv1d_ae_forward.1} parent=0 // pred_check_branch
    %17 = sbr.rel (0) target = $region13
  $region12: #{conv1d_ae_forward.1} parent=0 // pred_region
    _
  $region13: #{conv1d_ae_forward.1} parent=0 // pred_fallthru
    _
  // Predicated region
  $region14: #{conv1d_ae_forward.1} parent=0 // pred_check
    _
  $region15: #{conv1d_ae_forward.1} parent=0 // pred_check_branch
    %19 = sbr.rel (0) target = $region17
  $region16: #{conv1d_ae_forward.1} parent=0 // pred_region
    _
  $region17: #{conv1d_ae_forward.1} parent=0 // pred_fallthru
    _
  // Predicated region
  $region18: #{conv1d_ae_forward.1} parent=0 // pred_check
    _
  $region19: #{conv1d_ae_forward.1} parent=0 // pred_check_branch
    %21 = sbr.rel (0) target = $region21
  $region20: #{conv1d_ae_forward.1} parent=0 // pred_region
    _
  $region21: #{conv1d_ae_forward.1} parent=0 // pred_fallthru
    _
  // Predicated region
  $region22: #{conv1d_ae_forward.1} parent=0 // pred_check
    _
  $region23: #{conv1d_ae_forward.1} parent=0 // pred_check_branch
    %23 = sbr.rel (0) target = $region25
  $region24: #{conv1d_ae_forward.1} parent=0 // pred_region
    _
  $region25: #{conv1d_ae_forward.1} parent=0 // pred_fallthru
    _
  // Predicated region
  $region26: #{conv1d_ae_forward.1} parent=0 // pred_check
    _
  $region27: #{conv1d_ae_forward.1} parent=0 // pred_check_branch
    %25 = sbr.rel (0) target = $region29
  $region28: #{conv1d_ae_forward.1} parent=0 // pred_region
    _
  $region29: #{conv1d_ae_forward.1} parent=0 // pred_fallthru
    _
  %v26 = vld [vmem:[%s0] sm:$0xff]
  %v27 = vld [vmem:[%s0 + $0x8] sm:$0xff]
  %v28 = vld [vmem:[%s0 + $0x10] sm:$0xff]
  %v29 = vld [vmem:[%s0 + $0x18] sm:$0xff]
  %v30 = vld [vmem:[%s0 + $0x20] sm:$0xff]
  %v31 = vld [vmem:[%s0 + $0x28] sm:$0xff]
  %v32 = vld [vmem:[%s0 + $0x30] sm:$0xff]
  %v33 = vld [vmem:[%s0 + $0x38] sm:$0xff]
  %v34 = vld [vmem:[%s0 + $0x40] sm:$0xff]
  %v35 = vld [vmem:[%s0 + $0x48] sm:$0xff]
  %v36 = vld [vmem:[%s1] sm:$0xff]
  %v37 = vld [vmem:[%s1 + $0x8] sm:$0xff]
  %v38 = vld [vmem:[%s1 + $0x10] sm:$0xff]
  %v39 = vld [vmem:[%s1 + $0x18] sm:$0xff]
  %v40 = vld [vmem:[%s1 + $0x20] sm:$0xff]
  %v41 = vld [vmem:[%s1 + $0x28] sm:$0xff]
  %v42 = vld [vmem:[%s1 + $0x30] sm:$0xff]
  %v43 = vld [vmem:[%s1 + $0x38] sm:$0xff]
  %v44 = vld [vmem:[%s1 + $0x40] sm:$0xff]
  %v45 = vld [vmem:[%s1 + $0x48] sm:$0xff]
  %v46 = vld [vmem:[%s1 + $0x50] sm:$0xff]
  %v47 = vld [vmem:[%s1 + $0x58] sm:$0xff]
  %v48 = vld [vmem:[%s1 + $0x60] sm:$0xff]
  %v49 = vld [vmem:[%s1 + $0x68] sm:$0xff]
  %v50 = vld [vmem:[%s1 + $0x70] sm:$0xff]
  %v51 = vld [vmem:[%s1 + $0x78] sm:$0xff]
  %v52 = vld [vmem:[%s1 + $0x80] sm:$0xff]
  %v53 = vld [vmem:[%s1 + $0x88] sm:$0xff]
  %v54 = vld [vmem:[%s1 + $0x90] sm:$0xff]
  %vm55 = vcmask 654336
  %v57 = vsel %vm55, %v36, 0
  %v60 = vsel %vm55, %v37, 0
  %v63 = vsel %vm55, %v38, 0
  %v66 = vsel %vm55, %v39, 0
  %v69 = vsel %vm55, %v40, 0
  %v72 = vsel %vm55, %v41, 0
  %v75 = vsel %vm55, %v42, 0
  %v78 = vsel %vm55, %v43, 0
  %v81 = vsel %vm55, %v44, 0
  %v84 = vsel %vm55, %v45, 0
  %v87 = vsel %vm55, %v46, 0
  %v90 = vsel %vm55, %v47, 0
  %v93 = vsel %vm55, %v48, 0
  %v96 = vsel %vm55, %v49, 0
  %v99 = vsel %vm55, %v50, 0
  %v102 = vsel %vm55, %v51, 0
  %v105 = vsel %vm55, %v52, 0
  %v108 = vsel %vm55, %v53, 0
  %v111 = vsel %vm55, %v54, 0
  %113 = vmatprep.subr.mxu0 0.0
  %114 = vmatpush1.msra.mxu0 0.0
  %115 = vmatprep.subr.mxu0 0.0
  %116 = vmatpush1.msra.mxu0 0.0
  %117 = vmatprep.subr.mxu0 0.0
  %118 = vmatpush1.msra.mxu0 0.0
  %119 = vmatprep.subr.mxu0 0.0
  %120 = vmatpush1.msra.mxu0 0.0
  %121 = vmatprep.subr.mxu0 0.0
  %122 = vmatpush1.msra.mxu0 0.0
  %123 = vmatprep.subr.mxu0 0.0
  %124 = vmatpush1.msra.mxu0 0.0
  %125 = vmatprep.subr.mxu0 0.0
  %126 = vmatpush1.msra.mxu0 %v35
  %127 = vmatprep.subr.mxu0 0.0
  %128 = vmatpush1.msra.mxu0 %v34
  %129 = vmatprep.subr.mxu0 0.0
  %130 = vmatpush1.msra.mxu0 %v33
  %131 = vmatprep.subr.mxu0 0.0
  %132 = vmatpush1.msra.mxu0 %v32
  %133 = vmatprep.subr.mxu0 0.0
  %134 = vmatpush1.msra.mxu0 %v31
  %135 = vmatprep.subr.mxu0 0.0
  %136 = vmatpush1.msra.mxu0 %v30
  %137 = vmatprep.subr.mxu0 0.0
  %138 = vmatpush1.msra.mxu0 %v29
  %139 = vmatprep.subr.mxu0 0.0
  %140 = vmatpush1.msra.mxu0 %v28
  %141 = vmatprep.subr.mxu0 0.0
  %142 = vmatpush1.msra.mxu0 %v27
  %143 = vmatprep.subr.mxu0 0.0
  %144 = vmatpush1.msra.mxu0 %v26
  %145 = vmatprep.subr.mxu0 0.0
  %146 = vmatpush2.msra.mxu0 0.0
  %147 = vmatprep.subr.mxu0 0.0
  %148 = vmatpush2.msra.mxu0 0.0
  %149 = vmatprep.subr.mxu0 0.0
  %150 = vmatpush2.msra.mxu0 0.0
  %151 = vmatprep.subr.mxu0 0.0
  %152 = vmatpush2.msra.mxu0 0.0
  %153 = vmatprep.subr.mxu0 0.0
  %154 = vmatpush2.msra.mxu0 0.0
  %155 = vmatprep.subr.mxu0 0.0
  %156 = vmatpush2.msra.mxu0 0.0
  %157 = vmatprep.subr.mxu0 0.0
  %158 = vmatpush2.msra.mxu0 0.0
  %159 = vmatprep.subr.mxu0 0.0
  %160 = vmatpush2.msra.mxu0 0.0
  %161 = vmatprep.subr.mxu0 0.0
  %162 = vmatpush2.msra.mxu0 0.0
  %163 = vmatprep.subr.mxu0 0.0
  %164 = vmatpush2.msra.mxu0 0.0
  %165 = vmatprep.subr.mxu0 0.0
  %166 = vmatpush2.msra.mxu0 0.0
  %167 = vmatprep.subr.mxu0 0.0
  %168 = vmatpush2.msra.mxu0 0.0
  %169 = vmatprep.subr.mxu0 0.0
  %170 = vmatpush2.msra.mxu0 0.0
  %171 = vmatprep.subr.mxu0 0.0
  %172 = vmatpush2.msra.mxu0 0.0
  %173 = vmatprep.subr.mxu0 0.0
  %174 = vmatpush2.msra.mxu0 0.0
  %175 = vmatprep.subr.mxu0 0.0
  %176 = vmatpush2.msra.mxu0 0.0
  %177 = vmatprep.mubr.f32.mxu0 0.0
  %178 = vmatmul.mubr.f32.gmra.mxu0 %v57
  %v179 = vpop.f32.mrf.mxu0
  %v180 = vadd.f32 0.0, %v179
  %v181 = vpop.f32.mrf.mxu0
  %182 = vmatprep.mubr.f32.mxu0 0.0
  %183 = vmatmul.mubr.f32.gmra.mxu0 %v60
  %v184 = vpop.f32.mrf.mxu0
  %v185 = vadd.f32 0.0, %v184
  %v186 = vpop.f32.mrf.mxu0
  %187 = vmatprep.mubr.f32.mxu0 0.0
  %188 = vmatmul.mubr.f32.gmra.mxu0 %v63
  %v189 = vpop.f32.mrf.mxu0
  %v190 = vadd.f32 0.0, %v189
  %v191 = vpop.f32.mrf.mxu0
  %192 = vmatprep.mubr.f32.mxu0 0.0
  %193 = vmatmul.mubr.f32.gmra.mxu0 %v66
  %v194 = vpop.f32.mrf.mxu0
  %v195 = vadd.f32 0.0, %v194
  %v196 = vpop.f32.mrf.mxu0
  %197 = vmatprep.mubr.f32.mxu0 0.0
  %198 = vmatmul.mubr.f32.gmra.mxu0 %v69
  %v199 = vpop.f32.mrf.mxu0
  %v200 = vadd.f32 0.0, %v199
  %v201 = vpop.f32.mrf.mxu0
  %202 = vmatprep.mubr.f32.mxu0 0.0
  %203 = vmatmul.mubr.f32.gmra.mxu0 %v72
  %v204 = vpop.f32.mrf.mxu0
  %v205 = vadd.f32 0.0, %v204
  %v206 = vpop.f32.mrf.mxu0
  %207 = vmatprep.mubr.f32.mxu0 0.0
  %208 = vmatmul.mubr.f32.gmra.mxu0 %v75
  %v209 = vpop.f32.mrf.mxu0
  %v210 = vadd.f32 0.0, %v209
  %v211 = vpop.f32.mrf.mxu0
  %212 = vmatprep.mubr.f32.mxu0 0.0
  %213 = vmatmul.mubr.f32.gmra.mxu0 %v78
  %v214 = vpop.f32.mrf.mxu0
  %v215 = vadd.f32 0.0, %v214
  %v216 = vpop.f32.mrf.mxu0
  %217 = vmatprep.mubr.f32.mxu0 0.0
  %218 = vmatmul.mubr.f32.gmra.mxu0 %v81
  %v219 = vpop.f32.mrf.mxu0
  %v220 = vadd.f32 0.0, %v219
  %v221 = vpop.f32.mrf.mxu0
  %222 = vmatprep.mubr.f32.mxu0 0.0
  %223 = vmatmul.mubr.f32.gmra.mxu0 %v84
  %v224 = vpop.f32.mrf.mxu0
  %v225 = vadd.f32 0.0, %v224
  %v226 = vpop.f32.mrf.mxu0
  %227 = vmatprep.mubr.f32.mxu0 0.0
  %228 = vmatmul.mubr.f32.gmra.mxu0 %v87
  %v229 = vpop.f32.mrf.mxu0
  %v230 = vadd.f32 0.0, %v229
  %v231 = vpop.f32.mrf.mxu0
  %232 = vmatprep.mubr.f32.mxu0 0.0
  %233 = vmatmul.mubr.f32.gmra.mxu0 %v90
  %v234 = vpop.f32.mrf.mxu0
  %v235 = vadd.f32 0.0, %v234
  %v236 = vpop.f32.mrf.mxu0
  %237 = vmatprep.mubr.f32.mxu0 0.0
  %238 = vmatmul.mubr.f32.gmra.mxu0 %v93
  %v239 = vpop.f32.mrf.mxu0
  %v240 = vadd.f32 0.0, %v239
  %v241 = vpop.f32.mrf.mxu0
  %242 = vmatprep.mubr.f32.mxu0 0.0
  %243 = vmatmul.mubr.f32.gmra.mxu0 %v96
  %v244 = vpop.f32.mrf.mxu0
  %v245 = vadd.f32 0.0, %v244
  %v246 = vpop.f32.mrf.mxu0
  %247 = vmatprep.mubr.f32.mxu0 0.0
  %248 = vmatmul.mubr.f32.gmra.mxu0 %v99
  %v249 = vpop.f32.mrf.mxu0
  %v250 = vadd.f32 0.0, %v249
  %v251 = vpop.f32.mrf.mxu0
  %252 = vmatprep.mubr.f32.mxu0 0.0
  %253 = vmatmul.mubr.f32.gmra.mxu0 %v102
  %v254 = vpop.f32.mrf.mxu0
  %v255 = vadd.f32 0.0, %v254
  %v256 = vpop.f32.mrf.mxu0
  %257 = vmatprep.mubr.f32.mxu0 0.0
  %258 = vmatmul.mubr.f32.gmra.mxu0 %v105
  %v259 = vpop.f32.mrf.mxu0
  %v260 = vadd.f32 0.0, %v259
  %v261 = vpop.f32.mrf.mxu0
  %262 = vmatprep.mubr.f32.mxu0 0.0
  %263 = vmatmul.mubr.f32.gmra.mxu0 %v108
  %v264 = vpop.f32.mrf.mxu0
  %v265 = vadd.f32 0.0, %v264
  %v266 = vpop.f32.mrf.mxu0
  %267 = vmatprep.mubr.f32.mxu0 0.0
  %268 = vmatmul.mubr.f32.gmra.mxu0 %v111
  %v269 = vpop.f32.mrf.mxu0
  %v270 = vadd.f32 0.0, %v269
  %v271 = vpop.f32.mrf.mxu0
  %272 = vdwg.mxu0
  %vm279 = vcmask 1041408
  %v280 = vrot.slane %v200, 6
  %v281 = vrot.slane %v205, 6
  %v282 = vsel %vm279, %v280, %v281
  %v283 = vrot.slane %v210, 6
  %v284 = vsel %vm279, %v281, %v283
  %v285 = vrot.slane %v215, 6
  %v286 = vsel %vm279, %v283, %v285
  %v287 = vrot.slane %v220, 6
  %v288 = vsel %vm279, %v285, %v287
  %v289 = vrot.slane %v225, 6
  %v290 = vsel %vm279, %v287, %v289
  %291 = vrot.lane.b32.xlu0 %v282, 1
  %v292 = vpop.permute.xlu0 %291
  %293 = vrot.lane.b32.xlu0 %v284, 1
  %v294 = vpop.permute.xlu0 %293
  %295 = vrot.lane.b32.xlu0 %v286, 1
  %v296 = vpop.permute.xlu0 %295
  %297 = vrot.lane.b32.xlu0 %v288, 1
  %v298 = vpop.permute.xlu0 %297
  %299 = vrot.lane.b32.xlu0 %v290, 1
  %v300 = vpop.permute.xlu0 %299
  %vm311 = vcmask 1043456
  %v312 = vrot.slane %v225, 4
  %v313 = vrot.slane %v230, 4
  %v314 = vsel %vm311, %v312, %v313
  %v315 = vrot.slane %v235, 4
  %v316 = vsel %vm311, %v313, %v315
  %v317 = vrot.slane %v240, 4
  %v318 = vsel %vm311, %v315, %v317
  %v319 = vrot.slane %v245, 4
  %v320 = vsel %vm311, %v317, %v319
  %v321 = vrot.slane %v250, 4
  %v322 = vsel %vm311, %v319, %v321
  %323 = vrot.lane.b32.xlu0 %v314, 2
  %v324 = vpop.permute.xlu0 %323
  %325 = vrot.lane.b32.xlu0 %v316, 2
  %v326 = vpop.permute.xlu0 %325
  %327 = vrot.lane.b32.xlu0 %v318, 2
  %v328 = vpop.permute.xlu0 %327
  %329 = vrot.lane.b32.xlu0 %v320, 2
  %v330 = vpop.permute.xlu0 %329
  %331 = vrot.lane.b32.xlu0 %v322, 2
  %v332 = vpop.permute.xlu0 %331
  %vm342 = vcmask 1045504
  %v343 = vrot.slane %v250, 2
  %v344 = vrot.slane %v255, 2
  %v345 = vsel %vm342, %v343, %v344
  %v346 = vrot.slane %v260, 2
  %v347 = vsel %vm342, %v344, %v346
  %v348 = vrot.slane %v265, 2
  %v349 = vsel %vm342, %v346, %v348
  %v350 = vrot.slane %v270, 2
  %v351 = vsel %vm342, %v348, %v350
  %352 = vrot.lane.b32.xlu0 %v345, 3
  %v353 = vpop.permute.xlu0 %352
  %354 = vrot.lane.b32.xlu0 %v347, 3
  %v355 = vpop.permute.xlu0 %354
  %356 = vrot.lane.b32.xlu0 %v349, 3
  %v357 = vpop.permute.xlu0 %356
  %358 = vrot.lane.b32.xlu0 %v351, 3
  %v359 = vpop.permute.xlu0 %358
  %360 = vrot.lane.b32.xlu0 %v350, 3
  %v361 = vpop.permute.xlu0 %360
  %vm367 = vcmask 7168
  %v368 = vsel %vm367, %v180, %v292
  %v369 = vsel %vm367, %v185, %v294
  %v370 = vsel %vm367, %v190, %v296
  %v371 = vsel %vm367, %v195, %v298
  %v372 = vsel %vm367, %v200, %v300
  %vm373 = vcmask 15360
  %v374 = vsel %vm373, %v368, %v324
  %v375 = vsel %vm373, %v369, %v326
  %v376 = vsel %vm373, %v370, %v328
  %v377 = vsel %vm373, %v371, %v330
  %v378 = vsel %vm373, %v372, %v332
  %vm379 = vcmask 23552
  %v380 = vsel %vm379, %v374, %v353
  %v381 = vsel %vm379, %v375, %v355
  %v382 = vsel %vm379, %v376, %v357
  %v383 = vsel %vm379, %v377, %v359
  %v384 = vsel %vm379, %v378, %v361
  %v385 = vld [vmem:[%s3] sm:$0xf]
  %v386 = vld [vmem:[%s6] ss:$0 sm:$0xff]
  %vm387 = vcmask 31744
  %v389 = vsel %vm387, %v380, 0
  %v392 = vsel %vm387, %v381, 0
  %v395 = vsel %vm387, %v382, 0
  %v398 = vsel %vm387, %v383, 0
  %v401 = vsel %vm387, %v384, 0
  %v404 = vsel %vm311, %v385, 0
  %406 = vmatprep.subr.mxu0 0.0
  %407 = vmatpush1.msra.mxu0 0.0
  %408 = vmatprep.subr.mxu0 0.0
  %409 = vmatpush1.msra.mxu0 0.0
  %410 = vmatprep.subr.mxu0 0.0
  %411 = vmatpush1.msra.mxu0 0.0
  %412 = vmatprep.subr.mxu0 0.0
  %413 = vmatpush1.msra.mxu0 0.0
  %414 = vmatprep.subr.mxu0 0.0
  %415 = vmatpush1.msra.mxu0 0.0
  %416 = vmatprep.subr.mxu0 0.0
  %417 = vmatpush1.msra.mxu0 0.0
  %418 = vmatprep.subr.mxu0 0.0
  %419 = vmatpush1.msra.mxu0 0.0
  %420 = vmatprep.subr.mxu0 0.0
  %421 = vmatpush1.msra.mxu0 0.0
  %422 = vmatprep.subr.mxu0 0.0
  %423 = vmatpush1.msra.mxu0 0.0
  %424 = vmatprep.subr.mxu0 0.0
  %425 = vmatpush1.msra.mxu0 0.0
  %426 = vmatprep.subr.mxu0 0.0
  %427 = vmatpush1.msra.mxu0 0.0
  %428 = vmatprep.subr.mxu0 0.0
  %429 = vmatpush1.msra.mxu0 0.0
  %430 = vmatprep.subr.mxu0 0.0
  %431 = vmatpush1.msra.mxu0 0.0
  %432 = vmatprep.subr.mxu0 0.0
  %433 = vmatpush1.msra.mxu0 0.0
  %434 = vmatprep.subr.mxu0 0.0
  %435 = vmatpush1.msra.mxu0 0.0
  %436 = vmatprep.subr.mxu0 0.0
  %437 = vmatpush1.msra.mxu0 %v404
  %438 = vmatprep.subr.mxu0 0.0
  %439 = vmatpush2.msra.mxu0 0.0
  %440 = vmatprep.subr.mxu0 0.0
  %441 = vmatpush2.msra.mxu0 0.0
  %442 = vmatprep.subr.mxu0 0.0
  %443 = vmatpush2.msra.mxu0 0.0
  %444 = vmatprep.subr.mxu0 0.0
  %445 = vmatpush2.msra.mxu0 0.0
  %446 = vmatprep.subr.mxu0 0.0
  %447 = vmatpush2.msra.mxu0 0.0
  %448 = vmatprep.subr.mxu0 0.0
  %449 = vmatpush2.msra.mxu0 0.0
  %450 = vmatprep.subr.mxu0 0.0
  %451 = vmatpush2.msra.mxu0 0.0
  %452 = vmatprep.subr.mxu0 0.0
  %453 = vmatpush2.msra.mxu0 0.0
  %454 = vmatprep.subr.mxu0 0.0
  %455 = vmatpush2.msra.mxu0 0.0
  %456 = vmatprep.subr.mxu0 0.0
  %457 = vmatpush2.msra.mxu0 0.0
  %458 = vmatprep.subr.mxu0 0.0
  %459 = vmatpush2.msra.mxu0 0.0
  %460 = vmatprep.subr.mxu0 0.0
  %461 = vmatpush2.msra.mxu0 0.0
  %462 = vmatprep.subr.mxu0 0.0
  %463 = vmatpush2.msra.mxu0 0.0
  %464 = vmatprep.subr.mxu0 0.0
  %465 = vmatpush2.msra.mxu0 0.0
  %466 = vmatprep.subr.mxu0 0.0
  %467 = vmatpush2.msra.mxu0 0.0
  %468 = vmatprep.subr.mxu0 0.0
  %469 = vmatpush2.msra.mxu0 0.0
  %470 = vmatprep.mubr.f32.mxu0 0.0
  %471 = vmatmul.mubr.f32.gmra.mxu0 %v389
  %v472 = vpop.f32.mrf.mxu0
  %v473 = vadd.f32 %v386, %v472
  %v474 = vpop.f32.mrf.mxu0
  %475 = vmatprep.mubr.f32.mxu0 0.0
  %476 = vmatmul.mubr.f32.gmra.mxu0 %v392
  %v477 = vpop.f32.mrf.mxu0
  %v478 = vadd.f32 %v386, %v477
  %v479 = vpop.f32.mrf.mxu0
  %480 = vmatprep.mubr.f32.mxu0 0.0
  %481 = vmatmul.mubr.f32.gmra.mxu0 %v395
  %v482 = vpop.f32.mrf.mxu0
  %v483 = vadd.f32 %v386, %v482
  %v484 = vpop.f32.mrf.mxu0
  %485 = vmatprep.mubr.f32.mxu0 0.0
  %486 = vmatmul.mubr.f32.gmra.mxu0 %v398
  %v487 = vpop.f32.mrf.mxu0
  %v488 = vadd.f32 %v386, %v487
  %v489 = vpop.f32.mrf.mxu0
  %490 = vmatprep.mubr.f32.mxu0 0.0
  %491 = vmatmul.mubr.f32.gmra.mxu0 %v401
  %v492 = vpop.f32.mrf.mxu0
  %v493 = vadd.f32 %v386, %v492
  %v494 = vpop.f32.mrf.mxu0
  %495 = vdwg.mxu0
  %vm496 = vcmask 261120
  %v497 = vsel %vm496, %v473, 0.0
  %v498 = vsel %vm496, %v478, 0.0
  %v499 = vadd.f32 %v497, %v498
  %v500 = vsel %vm496, %v483, 0.0
  %v501 = vadd.f32 %v499, %v500
  %v502 = vsel %vm496, %v488, 0.0
  %v503 = vadd.f32 %v501, %v502
  %vm504 = vcmask 259072
  %v505 = vsel %vm504, %v493, 0.0
  %v506 = vadd.f32 %v503, %v505
  %v507 = vrot.slane %v506, 4
  %v508 = vadd.f32 %v506, %v507
  %v509 = vrot.slane %v508, 2
  %v510 = vadd.f32 %v508, %v509
  %v511 = vrot.slane %v510, 1
  %v512 = vadd.f32 %v510, %v511
  %v513 = vrcp.pop 38.0
  %v514 = vmul.f32 %v512, %v513
  %v515 = vsub.f32 %v473, %v514
  %v516 = vsub.f32 %v478, %v514
  %v517 = vsub.f32 %v483, %v514
  %v518 = vsub.f32 %v488, %v514
  %v519 = vsub.f32 %v493, %v514
  %v520 = vmul.f32 %v515, %v515
  %v521 = vmul.f32 %v516, %v516
  %v522 = vmul.f32 %v517, %v517
  %v523 = vmul.f32 %v518, %v518
  %v524 = vmul.f32 %v519, %v519
  %v525 = vsel %vm496, %v520, 0.0
  %v526 = vsel %vm496, %v521, 0.0
  %v527 = vadd.f32 %v525, %v526
  %v528 = vsel %vm496, %v522, 0.0
  %v529 = vadd.f32 %v527, %v528
  %v530 = vsel %vm496, %v523, 0.0
  %v531 = vadd.f32 %v529, %v530
  %v532 = vsel %vm504, %v524, 0.0
  %v533 = vadd.f32 %v531, %v532
  %v534 = vrot.slane %v533, 4
  %v535 = vadd.f32 %v533, %v534
  %v536 = vrot.slane %v535, 2
  %v537 = vadd.f32 %v535, %v536
  %v538 = vrot.slane %v537, 1
  %v539 = vadd.f32 %v537, %v538
  %v540 = vmul.f32 %v539, %v513
  %v541 = vadd.f32 %v540, 1e-05
  %v542 = vrsqrt.pop %v541
  %v543 = vld [vmem:[%s6 + $0x1] ss:$0 sm:$0xff]
  %v544 = vmul.f32 %v542, %v543
  %v545 = vmul.f32 %v515, %v544
  %v546 = vmul.f32 %v516, %v544
  %v547 = vmul.f32 %v517, %v544
  %v548 = vmul.f32 %v518, %v544
  %v549 = vmul.f32 %v519, %v544
  %v550 = vld [vmem:[%s6 + $0x2] ss:$0 sm:$0xff]
  %v551 = vadd.f32 %v545, %v550
  %v552 = vadd.f32 %v546, %v550
  %v553 = vadd.f32 %v547, %v550
  %v554 = vadd.f32 %v548, %v550
  %v555 = vadd.f32 %v549, %v550
  %v556 = vld [vmem:[%s1 + $0x98] sm:$0xff]
  %v557 = vld [vmem:[%s1 + $0xa0] sm:$0xff]
  %v558 = vld [vmem:[%s1 + $0xa8] sm:$0xff]
  %v559 = vld [vmem:[%s1 + $0xb0] sm:$0xff]
  %v560 = vld [vmem:[%s1 + $0xb8] sm:$0xff]
  %v561 = vld [vmem:[%s1 + $0xc0] sm:$0xff]
  %v562 = vld [vmem:[%s1 + $0xc8] sm:$0xff]
  %v563 = vld [vmem:[%s1 + $0xd0] sm:$0xff]
  %vm564 = vcmask 310272
  %v566 = vsel %vm564, %v556, 0
  %v569 = vsel %vm564, %v557, 0
  %v572 = vsel %vm564, %v558, 0
  %v575 = vsel %vm564, %v559, 0
  %v578 = vsel %vm564, %v560, 0
  %v581 = vsel %vm564, %v561, 0
  %v584 = vsel %vm564, %v562, 0
  %v587 = vsel %vm564, %v563, 0
  %v590 = vsel %vm342, %v555, 0
  %592 = vmatprep.subr.mxu0 0.0
  %593 = vmatpush1.msra.mxu0 0.0
  %594 = vmatprep.subr.mxu0 0.0
  %595 = vmatpush1.msra.mxu0 0.0
  %596 = vmatprep.subr.mxu0 0.0
  %597 = vmatpush1.msra.mxu0 0.0
  %598 = vmatprep.subr.mxu0 0.0
  %599 = vmatpush1.msra.mxu0 0.0
  %600 = vmatprep.subr.mxu0 0.0
  %601 = vmatpush1.msra.mxu0 0.0
  %602 = vmatprep.subr.mxu0 0.0
  %603 = vmatpush1.msra.mxu0 0.0
  %604 = vmatprep.subr.mxu0 0.0
  %605 = vmatpush1.msra.mxu0 0.0
  %606 = vmatprep.subr.mxu0 0.0
  %607 = vmatpush1.msra.mxu0 0.0
  %608 = vmatprep.subr.mxu0 0.0
  %609 = vmatpush1.msra.mxu0 0.0
  %610 = vmatprep.subr.mxu0 0.0
  %611 = vmatpush1.msra.mxu0 0.0
  %612 = vmatprep.subr.mxu0 0.0
  %613 = vmatpush1.msra.mxu0 0.0
  %614 = vmatprep.subr.mxu0 0.0
  %615 = vmatpush1.msra.mxu0 %v590
  %616 = vmatprep.subr.mxu0 0.0
  %617 = vmatpush1.msra.mxu0 %v554
  %618 = vmatprep.subr.mxu0 0.0
  %619 = vmatpush1.msra.mxu0 %v553
  %620 = vmatprep.subr.mxu0 0.0
  %621 = vmatpush1.msra.mxu0 %v552
  %622 = vmatprep.subr.mxu0 0.0
  %623 = vmatpush1.msra.mxu0 %v551
  %624 = vmatprep.subr.mxu0 0.0
  %625 = vmatpush2.msra.mxu0 0.0
  %626 = vmatprep.subr.mxu0 0.0
  %627 = vmatpush2.msra.mxu0 0.0
  %628 = vmatprep.subr.mxu0 0.0
  %629 = vmatpush2.msra.mxu0 0.0
  %630 = vmatprep.subr.mxu0 0.0
  %631 = vmatpush2.msra.mxu0 0.0
  %632 = vmatprep.subr.mxu0 0.0
  %633 = vmatpush2.msra.mxu0 0.0
  %634 = vmatprep.subr.mxu0 0.0
  %635 = vmatpush2.msra.mxu0 0.0
  %636 = vmatprep.subr.mxu0 0.0
  %637 = vmatpush2.msra.mxu0 0.0
  %638 = vmatprep.subr.mxu0 0.0
  %639 = vmatpush2.msra.mxu0 0.0
  %640 = vmatprep.subr.mxu0 0.0
  %641 = vmatpush2.msra.mxu0 0.0
  %642 = vmatprep.subr.mxu0 0.0
  %643 = vmatpush2.msra.mxu0 0.0
  %644 = vmatprep.subr.mxu0 0.0
  %645 = vmatpush2.msra.mxu0 0.0
  %646 = vmatprep.subr.mxu0 0.0
  %647 = vmatpush2.msra.mxu0 0.0
  %648 = vmatprep.subr.mxu0 0.0
  %649 = vmatpush2.msra.mxu0 0.0
  %650 = vmatprep.subr.mxu0 0.0
  %651 = vmatpush2.msra.mxu0 0.0
  %652 = vmatprep.subr.mxu0 0.0
  %653 = vmatpush2.msra.mxu0 0.0
  %654 = vmatprep.subr.mxu0 0.0
  %655 = vmatpush2.msra.mxu0 0.0
  %656 = vmatprep.mubr.f32.mxu0 0.0
  %657 = vmatmul.mubr.f32.gmra.mxu0 %v566
  %v658 = vpop.f32.mrf.mxu0
  %v659 = vadd.f32 0.0, %v658
  %v660 = vpop.f32.mrf.mxu0
  %661 = vmatprep.mubr.f32.mxu0 0.0
  %662 = vmatmul.mubr.f32.gmra.mxu0 %v569
  %v663 = vpop.f32.mrf.mxu0
  %v664 = vadd.f32 0.0, %v663
  %v665 = vpop.f32.mrf.mxu0
  %666 = vmatprep.mubr.f32.mxu0 0.0
  %667 = vmatmul.mubr.f32.gmra.mxu0 %v572
  %v668 = vpop.f32.mrf.mxu0
  %v669 = vadd.f32 0.0, %v668
  %v670 = vpop.f32.mrf.mxu0
  %671 = vmatprep.mubr.f32.mxu0 0.0
  %672 = vmatmul.mubr.f32.gmra.mxu0 %v575
  %v673 = vpop.f32.mrf.mxu0
  %v674 = vadd.f32 0.0, %v673
  %v675 = vpop.f32.mrf.mxu0
  %676 = vmatprep.mubr.f32.mxu0 0.0
  %677 = vmatmul.mubr.f32.gmra.mxu0 %v578
  %v678 = vpop.f32.mrf.mxu0
  %v679 = vadd.f32 0.0, %v678
  %v680 = vpop.f32.mrf.mxu0
  %681 = vmatprep.mubr.f32.mxu0 0.0
  %682 = vmatmul.mubr.f32.gmra.mxu0 %v581
  %v683 = vpop.f32.mrf.mxu0
  %v684 = vadd.f32 0.0, %v683
  %v685 = vpop.f32.mrf.mxu0
  %686 = vmatprep.mubr.f32.mxu0 0.0
  %687 = vmatmul.mubr.f32.gmra.mxu0 %v584
  %v688 = vpop.f32.mrf.mxu0
  %v689 = vadd.f32 0.0, %v688
  %v690 = vpop.f32.mrf.mxu0
  %691 = vmatprep.mubr.f32.mxu0 0.0
  %692 = vmatmul.mubr.f32.gmra.mxu0 %v587
  %v693 = vpop.f32.mrf.mxu0
  %v694 = vadd.f32 0.0, %v693
  %v695 = vpop.f32.mrf.mxu0
  %696 = vdwg.mxu0
  %699 = vrot.lane.b32.xlu0 %v669, 32
  %v700 = vpop.permute.xlu0 %699
  %701 = vrot.lane.b32.xlu0 %v674, 32
  %v702 = vpop.permute.xlu0 %701
  %707 = vrot.lane.b32.xlu0 %v679, 64
  %v708 = vpop.permute.xlu0 %707
  %709 = vrot.lane.b32.xlu0 %v684, 64
  %v710 = vpop.permute.xlu0 %709
  %715 = vrot.lane.b32.xlu0 %v689, 96
  %v716 = vpop.permute.xlu0 %715
  %717 = vrot.lane.b32.xlu0 %v694, 96
  %v718 = vpop.permute.xlu0 %717
  %v721 = vsel %vm496, %v659, %v700
  %v722 = vsel %vm496, %v664, %v702
  %vm723 = vcmask 523264
  %v724 = vsel %vm723, %v721, %v708
  %v725 = vsel %vm723, %v722, %v710
  %vm726 = vcmask 785408
  %v727 = vsel %vm726, %v724, %v716
  %v728 = vsel %vm726, %v725, %v718
  %v729 = vld [vmem:[%s3 + $0x8] sm:$0xff]
  %v730 = vld [vmem:[%s3 + $0x10] sm:$0xff]
  %v731 = vld [vmem:[%s3 + $0x18] sm:$0xff]
  %v732 = vld [vmem:[%s3 + $0x20] sm:$0xff]
  %v733 = vld [vmem:[%s3 + $0x28] sm:$0xff]
  %v734 = vld [vmem:[%s3 + $0x30] sm:$0xff]
  %v735 = vld [vmem:[%s3 + $0x38] sm:$0xff]
  %v736 = vld [vmem:[%s3 + $0x40] sm:$0xff]
  %v737 = vld [vmem:[%s3 + $0x48] sm:$0xff]
  %v738 = vld [vmem:[%s3 + $0x50] sm:$0xff]
  %v739 = vld [vmem:[%s3 + $0x58] sm:$0xff]
  %v740 = vld [vmem:[%s3 + $0x60] sm:$0xff]
  %v741 = vld [vmem:[%s3 + $0x68] sm:$0xff]
  %v742 = vld [vmem:[%s3 + $0x70] sm:$0xff]
  %v743 = vld [vmem:[%s3 + $0x78] sm:$0xff]
  %v744 = vld [vmem:[%s3 + $0x80] sm:$0xff]
  %v745 = vld [vmem:[%s6 + $0x3] ss:$0 sm:$0xff]
  %746 = vmatprep.subr.mxu0 0.0
  %747 = vmatpush1.msra.mxu0 %v744
  %748 = vmatprep.subr.mxu0 0.0
  %749 = vmatpush1.msra.mxu0 %v743
  %750 = vmatprep.subr.mxu0 0.0
  %751 = vmatpush1.msra.mxu0 %v742
  %752 = vmatprep.subr.mxu0 0.0
  %753 = vmatpush1.msra.mxu0 %v741
  %754 = vmatprep.subr.mxu0 0.0
  %755 = vmatpush1.msra.mxu0 %v740
  %756 = vmatprep.subr.mxu0 0.0
  %757 = vmatpush1.msra.mxu0 %v739
  %758 = vmatprep.subr.mxu0 0.0
  %759 = vmatpush1.msra.mxu0 %v738
  %760 = vmatprep.subr.mxu0 0.0
  %761 = vmatpush1.msra.mxu0 %v737
  %762 = vmatprep.subr.mxu0 0.0
  %763 = vmatpush1.msra.mxu0 %v736
  %764 = vmatprep.subr.mxu0 0.0
  %765 = vmatpush1.msra.mxu0 %v735
  %766 = vmatprep.subr.mxu0 0.0
  %767 = vmatpush1.msra.mxu0 %v734
  %768 = vmatprep.subr.mxu0 0.0
  %769 = vmatpush1.msra.mxu0 %v733
  %770 = vmatprep.subr.mxu0 0.0
  %771 = vmatpush1.msra.mxu0 %v732
  %772 = vmatprep.subr.mxu0 0.0
  %773 = vmatpush1.msra.mxu0 %v731
  %774 = vmatprep.subr.mxu0 0.0
  %775 = vmatpush1.msra.mxu0 %v730
  %776 = vmatprep.subr.mxu0 0.0
  %777 = vmatpush1.msra.mxu0 %v729
  %778 = vmatprep.subr.mxu0 0.0
  %779 = vmatpush2.msra.mxu0 0.0
  %780 = vmatprep.subr.mxu0 0.0
  %781 = vmatpush2.msra.mxu0 0.0
  %782 = vmatprep.subr.mxu0 0.0
  %783 = vmatpush2.msra.mxu0 0.0
  %784 = vmatprep.subr.mxu0 0.0
  %785 = vmatpush2.msra.mxu0 0.0
  %786 = vmatprep.subr.mxu0 0.0
  %787 = vmatpush2.msra.mxu0 0.0
  %788 = vmatprep.subr.mxu0 0.0
  %789 = vmatpush2.msra.mxu0 0.0
  %790 = vmatprep.subr.mxu0 0.0
  %791 = vmatpush2.msra.mxu0 0.0
  %792 = vmatprep.subr.mxu0 0.0
  %793 = vmatpush2.msra.mxu0 0.0
  %794 = vmatprep.subr.mxu0 0.0
  %795 = vmatpush2.msra.mxu0 0.0
  %796 = vmatprep.subr.mxu0 0.0
  %797 = vmatpush2.msra.mxu0 0.0
  %798 = vmatprep.subr.mxu0 0.0
  %799 = vmatpush2.msra.mxu0 0.0
  %800 = vmatprep.subr.mxu0 0.0
  %801 = vmatpush2.msra.mxu0 0.0
  %802 = vmatprep.subr.mxu0 0.0
  %803 = vmatpush2.msra.mxu0 0.0
  %804 = vmatprep.subr.mxu0 0.0
  %805 = vmatpush2.msra.mxu0 0.0
  %806 = vmatprep.subr.mxu0 0.0
  %807 = vmatpush2.msra.mxu0 0.0
  %808 = vmatprep.subr.mxu0 0.0
  %809 = vmatpush2.msra.mxu0 0.0
  %810 = vmatprep.mubr.f32.mxu0 0.0
  %811 = vmatmul.mubr.f32.gmra.mxu0 %v727
  %v812 = vpop.f32.mrf.mxu0
  %v813 = vadd.f32 %v745, %v812
  %v814 = vpop.f32.mrf.mxu0
  %815 = vmatprep.mubr.f32.mxu0 0.0
  %816 = vmatmul.mubr.f32.gmra.mxu0 %v728
  %v817 = vpop.f32.mrf.mxu0
  %v818 = vadd.f32 %v745, %v817
  %v819 = vpop.f32.mrf.mxu0
  %820 = vdwg.mxu0
  %v821 = vsel %vm723, %v813, 0.0
  %v822 = vsel %vm723, %v818, 0.0
  %v823 = vadd.f32 %v821, %v822
  %v824 = vrot.slane %v823, 4
  %v825 = vadd.f32 %v823, %v824
  %v826 = vrot.slane %v825, 2
  %v827 = vadd.f32 %v825, %v826
  %v828 = vrot.slane %v827, 1
  %v829 = vadd.f32 %v827, %v828
  %v830 = vrcp.pop 16.0
  %v831 = vmul.f32 %v829, %v830
  %v832 = vsub.f32 %v813, %v831
  %v833 = vsub.f32 %v818, %v831
  %v834 = vmul.f32 %v832, %v832
  %v835 = vmul.f32 %v833, %v833
  %v836 = vsel %vm723, %v834, 0.0
  %v837 = vsel %vm723, %v835, 0.0
  %v838 = vadd.f32 %v836, %v837
  %v839 = vrot.slane %v838, 4
  %v840 = vadd.f32 %v838, %v839
  %v841 = vrot.slane %v840, 2
  %v842 = vadd.f32 %v840, %v841
  %v843 = vrot.slane %v842, 1
  %v844 = vadd.f32 %v842, %v843
  %v845 = vmul.f32 %v844, %v830
  %v846 = vadd.f32 %v845, 1e-05
  %v847 = vrsqrt.pop %v846
  %v848 = vld [vmem:[%s6 + $0x4] ss:$0 sm:$0xff]
  %v849 = vmul.f32 %v847, %v848
  %v850 = vmul.f32 %v832, %v849
  %v851 = vmul.f32 %v833, %v849
  %v852 = vld [vmem:[%s6 + $0x5] ss:$0 sm:$0xff]
  %v853 = vadd.f32 %v850, %v852
  %v854 = vadd.f32 %v851, %v852
  %v855 = vld [vmem:[%s1 + $0xd8] sm:$0xff]
  %v856 = vld [vmem:[%s1 + $0xe0] sm:$0xff]
  %v857 = vld [vmem:[%s1 + $0xe8] sm:$0xff]
  %v858 = vld [vmem:[%s1 + $0xf0] sm:$0xff]
  %v859 = vld [vmem:[%s1 + $0xf8] sm:$0xff]
  %vm860 = vcmask 130048
  %v862 = vsel %vm860, %v855, 0
  %v865 = vsel %vm860, %v856, 0
  %v868 = vsel %vm860, %v857, 0
  %v871 = vsel %vm860, %v858, 0
  %v874 = vsel %vm860, %v859, 0
  %876 = vmatprep.subr.mxu0 0.0
  %877 = vmatpush1.msra.mxu0 0.0
  %878 = vmatprep.subr.mxu0 0.0
  %879 = vmatpush1.msra.mxu0 0.0
  %880 = vmatprep.subr.mxu0 0.0
  %881 = vmatpush1.msra.mxu0 0.0
  %882 = vmatprep.subr.mxu0 0.0
  %883 = vmatpush1.msra.mxu0 0.0
  %884 = vmatprep.subr.mxu0 0.0
  %885 = vmatpush1.msra.mxu0 0.0
  %886 = vmatprep.subr.mxu0 0.0
  %887 = vmatpush1.msra.mxu0 0.0
  %888 = vmatprep.subr.mxu0 0.0
  %889 = vmatpush1.msra.mxu0 0.0
  %890 = vmatprep.subr.mxu0 0.0
  %891 = vmatpush1.msra.mxu0 0.0
  %892 = vmatprep.subr.mxu0 0.0
  %893 = vmatpush1.msra.mxu0 0.0
  %894 = vmatprep.subr.mxu0 0.0
  %895 = vmatpush1.msra.mxu0 0.0
  %896 = vmatprep.subr.mxu0 0.0
  %897 = vmatpush1.msra.mxu0 0.0
  %898 = vmatprep.subr.mxu0 0.0
  %899 = vmatpush1.msra.mxu0 0.0
  %900 = vmatprep.subr.mxu0 0.0
  %901 = vmatpush1.msra.mxu0 0.0
  %902 = vmatprep.subr.mxu0 0.0
  %903 = vmatpush1.msra.mxu0 0.0
  %904 = vmatprep.subr.mxu0 0.0
  %905 = vmatpush1.msra.mxu0 %v854
  %906 = vmatprep.subr.mxu0 0.0
  %907 = vmatpush1.msra.mxu0 %v853
  %908 = vmatprep.subr.mxu0 0.0
  %909 = vmatpush2.msra.mxu0 0.0
  %910 = vmatprep.subr.mxu0 0.0
  %911 = vmatpush2.msra.mxu0 0.0
  %912 = vmatprep.subr.mxu0 0.0
  %913 = vmatpush2.msra.mxu0 0.0
  %914 = vmatprep.subr.mxu0 0.0
  %915 = vmatpush2.msra.mxu0 0.0
  %916 = vmatprep.subr.mxu0 0.0
  %917 = vmatpush2.msra.mxu0 0.0
  %918 = vmatprep.subr.mxu0 0.0
  %919 = vmatpush2.msra.mxu0 0.0
  %920 = vmatprep.subr.mxu0 0.0
  %921 = vmatpush2.msra.mxu0 0.0
  %922 = vmatprep.subr.mxu0 0.0
  %923 = vmatpush2.msra.mxu0 0.0
  %924 = vmatprep.subr.mxu0 0.0
  %925 = vmatpush2.msra.mxu0 0.0
  %926 = vmatprep.subr.mxu0 0.0
  %927 = vmatpush2.msra.mxu0 0.0
  %928 = vmatprep.subr.mxu0 0.0
  %929 = vmatpush2.msra.mxu0 0.0
  %930 = vmatprep.subr.mxu0 0.0
  %931 = vmatpush2.msra.mxu0 0.0
  %932 = vmatprep.subr.mxu0 0.0
  %933 = vmatpush2.msra.mxu0 0.0
  %934 = vmatprep.subr.mxu0 0.0
  %935 = vmatpush2.msra.mxu0 0.0
  %936 = vmatprep.subr.mxu0 0.0
  %937 = vmatpush2.msra.mxu0 0.0
  %938 = vmatprep.subr.mxu0 0.0
  %939 = vmatpush2.msra.mxu0 0.0
  %940 = vmatprep.mubr.f32.mxu0 0.0
  %941 = vmatmul.mubr.f32.gmra.mxu0 %v862
  %v942 = vpop.f32.mrf.mxu0
  %v943 = vadd.f32 0.0, %v942
  %v944 = vpop.f32.mrf.mxu0
  %945 = vmatprep.mubr.f32.mxu0 0.0
  %946 = vmatmul.mubr.f32.gmra.mxu0 %v865
  %v947 = vpop.f32.mrf.mxu0
  %v948 = vadd.f32 0.0, %v947
  %v949 = vpop.f32.mrf.mxu0
  %950 = vmatprep.mubr.f32.mxu0 0.0
  %951 = vmatmul.mubr.f32.gmra.mxu0 %v868
  %v952 = vpop.f32.mrf.mxu0
  %v953 = vadd.f32 0.0, %v952
  %v954 = vpop.f32.mrf.mxu0
  %955 = vmatprep.mubr.f32.mxu0 0.0
  %956 = vmatmul.mubr.f32.gmra.mxu0 %v871
  %v957 = vpop.f32.mrf.mxu0
  %v958 = vadd.f32 0.0, %v957
  %v959 = vpop.f32.mrf.mxu0
  %960 = vmatprep.mubr.f32.mxu0 0.0
  %961 = vmatmul.mubr.f32.gmra.mxu0 %v874
  %v962 = vpop.f32.mrf.mxu0
  %v963 = vadd.f32 0.0, %v962
  %v964 = vpop.f32.mrf.mxu0
  %965 = vdwg.mxu0
  %v968 = vrot.slane %v948, 2
  %v969 = vrot.slane %v953, 2
  %v970 = vsel %vm342, %v968, %v969
  %971 = vrot.lane.b32.xlu0 %v970, 64
  %v972 = vpop.permute.xlu0 %971
  %973 = vrot.lane.b32.xlu0 %v969, 64
  %v974 = vpop.permute.xlu0 %973
  %v978 = vrot.slane %v953, 4
  %v979 = vrot.slane %v958, 4
  %v980 = vsel %vm311, %v978, %v979
  %v984 = vrot.slane %v958, 6
  %v985 = vrot.slane %v963, 6
  %v986 = vsel %vm279, %v984, %v985
  %987 = vrot.lane.b32.xlu0 %v986, 64
  %v988 = vpop.permute.xlu0 %987
  %989 = vrot.lane.b32.xlu0 %v985, 64
  %v990 = vpop.permute.xlu0 %989
  %v993 = vsel %vm723, %v943, %v972
  %v994 = vsel %vm723, %v948, %v974
  %v995 = vsel %vm723, %v980, %v988
  %v996 = vsel %vm723, %v979, %v990
  %v997 = vld [vmem:[%s3 + $0x88] sm:$0xff]
  %v998 = vld [vmem:[%s3 + $0x90] sm:$0xff]
  %v999 = vld [vmem:[%s3 + $0x98] sm:$0xff]
  %v1000 = vld [vmem:[%s3 + $0xa0] sm:$0xff]
  %v1001 = vld [vmem:[%s3 + $0xa8] sm:$0xff]
  %v1002 = vld [vmem:[%s3 + $0xb0] sm:$0xff]
  %v1003 = vld [vmem:[%s3 + $0xb8] sm:$0xff]
  %v1004 = vld [vmem:[%s3 + $0xc0] sm:$0xff]
  %v1005 = vld [vmem:[%s3 + $0xc8] sm:$0xff]
  %v1006 = vld [vmem:[%s3 + $0xd0] sm:$0xff]
  %v1007 = vld [vmem:[%s3 + $0xd8] sm:$0xff]
  %v1008 = vld [vmem:[%s3 + $0xe0] sm:$0xff]
  %v1009 = vld [vmem:[%s3 + $0xe8] sm:$0xff]
  %v1010 = vld [vmem:[%s3 + $0xf0] sm:$0xff]
  %v1011 = vld [vmem:[%s3 + $0xf8] sm:$0xff]
  %v1012 = vld [vmem:[%s3 + $0x100] sm:$0xff]
  %v1013 = vld [vmem:[%s3 + $0x108] sm:$0xff]
  %v1014 = vld [vmem:[%s3 + $0x110] sm:$0xff]
  %v1015 = vld [vmem:[%s3 + $0x118] sm:$0xff]
  %v1016 = vld [vmem:[%s3 + $0x120] sm:$0xff]
  %v1017 = vld [vmem:[%s3 + $0x128] sm:$0xff]
  %v1018 = vld [vmem:[%s3 + $0x130] sm:$0xff]
  %v1019 = vld [vmem:[%s3 + $0x138] sm:$0xff]
  %v1020 = vld [vmem:[%s3 + $0x140] sm:$0xff]
  %v1021 = vld [vmem:[%s3 + $0x148] sm:$0xff]
  %v1022 = vld [vmem:[%s3 + $0x150] sm:$0xff]
  %v1023 = vld [vmem:[%s3 + $0x158] sm:$0xff]
  %v1024 = vld [vmem:[%s3 + $0x160] sm:$0xff]
  %v1025 = vld [vmem:[%s3 + $0x168] sm:$0xff]
  %v1026 = vld [vmem:[%s3 + $0x170] sm:$0xff]
  %v1027 = vld [vmem:[%s3 + $0x178] sm:$0xff]
  %v1028 = vld [vmem:[%s3 + $0x180] sm:$0xff]
  %v1029 = vld [vmem:[%s6 + $0x6] ss:$0 sm:$0xff]
  %1030 = vmatprep.subr.mxu0 0.0
  %1031 = vmatpush1.msra.mxu0 %v1012
  %1032 = vmatprep.subr.mxu0 0.0
  %1033 = vmatpush1.msra.mxu0 %v1011
  %1034 = vmatprep.subr.mxu0 0.0
  %1035 = vmatpush1.msra.mxu0 %v1010
  %1036 = vmatprep.subr.mxu0 0.0
  %1037 = vmatpush1.msra.mxu0 %v1009
  %1038 = vmatprep.subr.mxu0 0.0
  %1039 = vmatpush1.msra.mxu0 %v1008
  %1040 = vmatprep.subr.mxu0 0.0
  %1041 = vmatpush1.msra.mxu0 %v1007
  %1042 = vmatprep.subr.mxu0 0.0
  %1043 = vmatpush1.msra.mxu0 %v1006
  %1044 = vmatprep.subr.mxu0 0.0
  %1045 = vmatpush1.msra.mxu0 %v1005
  %1046 = vmatprep.subr.mxu0 0.0
  %1047 = vmatpush1.msra.mxu0 %v1004
  %1048 = vmatprep.subr.mxu0 0.0
  %1049 = vmatpush1.msra.mxu0 %v1003
  %1050 = vmatprep.subr.mxu0 0.0
  %1051 = vmatpush1.msra.mxu0 %v1002
  %1052 = vmatprep.subr.mxu0 0.0
  %1053 = vmatpush1.msra.mxu0 %v1001
  %1054 = vmatprep.subr.mxu0 0.0
  %1055 = vmatpush1.msra.mxu0 %v1000
  %1056 = vmatprep.subr.mxu0 0.0
  %1057 = vmatpush1.msra.mxu0 %v999
  %1058 = vmatprep.subr.mxu0 0.0
  %1059 = vmatpush1.msra.mxu0 %v998
  %1060 = vmatprep.subr.mxu0 0.0
  %1061 = vmatpush1.msra.mxu0 %v997
  %1062 = vmatprep.subr.mxu0 0.0
  %1063 = vmatpush2.msra.mxu0 %v1028
  %1064 = vmatprep.subr.mxu0 0.0
  %1065 = vmatpush2.msra.mxu0 %v1027
  %1066 = vmatprep.subr.mxu0 0.0
  %1067 = vmatpush2.msra.mxu0 %v1026
  %1068 = vmatprep.subr.mxu0 0.0
  %1069 = vmatpush2.msra.mxu0 %v1025
  %1070 = vmatprep.subr.mxu0 0.0
  %1071 = vmatpush2.msra.mxu0 %v1024
  %1072 = vmatprep.subr.mxu0 0.0
  %1073 = vmatpush2.msra.mxu0 %v1023
  %1074 = vmatprep.subr.mxu0 0.0
  %1075 = vmatpush2.msra.mxu0 %v1022
  %1076 = vmatprep.subr.mxu0 0.0
  %1077 = vmatpush2.msra.mxu0 %v1021
  %1078 = vmatprep.subr.mxu0 0.0
  %1079 = vmatpush2.msra.mxu0 %v1020
  %1080 = vmatprep.subr.mxu0 0.0
  %1081 = vmatpush2.msra.mxu0 %v1019
  %1082 = vmatprep.subr.mxu0 0.0
  %1083 = vmatpush2.msra.mxu0 %v1018
  %1084 = vmatprep.subr.mxu0 0.0
  %1085 = vmatpush2.msra.mxu0 %v1017
  %1086 = vmatprep.subr.mxu0 0.0
  %1087 = vmatpush2.msra.mxu0 %v1016
  %1088 = vmatprep.subr.mxu0 0.0
  %1089 = vmatpush2.msra.mxu0 %v1015
  %1090 = vmatprep.subr.mxu0 0.0
  %1091 = vmatpush2.msra.mxu0 %v1014
  %1092 = vmatprep.subr.mxu0 0.0
  %1093 = vmatpush2.msra.mxu0 %v1013
  %1094 = vmatprep.mubr.f32.mxu0 %v995
  %1095 = vmatmul.mubr.f32.gmra.mxu0 %v993
  %v1096 = vpop.f32.mrf.mxu0
  %v1097 = vadd.f32 %v1029, %v1096
  %v1098 = vpop.f32.mrf.mxu0
  %1099 = vmatprep.mubr.f32.mxu0 %v996
  %1100 = vmatmul.mubr.f32.gmra.mxu0 %v994
  %v1101 = vpop.f32.mrf.mxu0
  %v1102 = vadd.f32 %v1029, %v1101
  %v1103 = vpop.f32.mrf.mxu0
  %1104 = vdwg.mxu0
  %v1105 = vsel %vm279, %v1102, 0.0
  %v1106 = vadd.f32 %v1097, %v1105
  %v1107 = vrot.slane %v1106, 4
  %v1108 = vadd.f32 %v1106, %v1107
  %v1109 = vrot.slane %v1108, 2
  %v1110 = vadd.f32 %v1108, %v1109
  %v1111 = vrot.slane %v1110, 1
  %v1112 = vadd.f32 %v1110, %v1111
  %v1113 = vrcp.pop 10.0
  %v1114 = vmul.f32 %v1112, %v1113
  %v1115 = vsub.f32 %v1097, %v1114
  %v1116 = vsub.f32 %v1102, %v1114
  %v1117 = vmul.f32 %v1115, %v1115
  %v1118 = vmul.f32 %v1116, %v1116
  %v1119 = vsel %vm279, %v1118, 0.0
  %v1120 = vadd.f32 %v1117, %v1119
  %v1121 = vrot.slane %v1120, 4
  %v1122 = vadd.f32 %v1120, %v1121
  %v1123 = vrot.slane %v1122, 2
  %v1124 = vadd.f32 %v1122, %v1123
  %v1125 = vrot.slane %v1124, 1
  %v1126 = vadd.f32 %v1124, %v1125
  %v1127 = vmul.f32 %v1126, %v1113
  %v1128 = vadd.f32 %v1127, 1e-05
  %v1129 = vrsqrt.pop %v1128
  %v1130 = vld [vmem:[%s6 + $0x7] ss:$0 sm:$0xff]
  %v1131 = vmul.f32 %v1129, %v1130
  %v1132 = vmul.f32 %v1115, %v1131
  %v1133 = vmul.f32 %v1116, %v1131
  %v1134 = vld [vmem:[%s6 + $0x28] ss:$0 sm:$0xff]
  %v1135 = vadd.f32 %v1132, %v1134
  %v1136 = vadd.f32 %v1133, %v1134
  %v1138 = vrot.slane %v1135, 1
  %v1140 = vrot.slane %v1135, 2
  %v1142 = vrot.slane %v1135, 3
  %v1144 = vrot.slane %v1135, 4
  %v1147 = vrot.slane %v1136, 3
  %v1148 = vrot.slane %v1136, 4
  %v1149 = vrot.slane %v1138, 4
  %v1150 = vrot.slane %v1140, 4
  %v1151 = vrot.slane %v1147, 4
  %v1152 = vrot.slane %v1148, 4
  %vm1157 = vcmask 1040384
  %v1158 = vsel %vm1157, %v1135, %v1144
  %v1159 = vsel %vm1157, %v1138, %v1149
  %v1160 = vsel %vm1157, %v1140, %v1150
  %v1161 = vsel %vm1157, %v1142, %v1151
  %v1162 = vsel %vm1157, %v1144, %v1152
  %v1163 = vld [vmem:[%s4 + $0x270] sm:$0xff]
  %v1164 = vld [vmem:[%s4 + $0x278] sm:$0xff]
  %v1165 = vld [vmem:[%s4 + $0x280] sm:$0xff]
  %v1166 = vld [vmem:[%s4 + $0x288] sm:$0xff]
  %v1167 = vld [vmem:[%s4 + $0x290] sm:$0xff]
  %v1168 = vld [vmem:[%s4 + $0x298] sm:$0xff]
  %v1169 = vld [vmem:[%s4 + $0x2a0] sm:$0xff]
  %v1170 = vld [vmem:[%s4 + $0x2a8] sm:$0xff]
  %v1171 = vld [vmem:[%s4 + $0x2b0] sm:$0xff]
  %v1172 = vld [vmem:[%s4 + $0x2b8] sm:$0xff]
  %v1173 = vld [vmem:[%s4 + $0x2c0] sm:$0xff]
  %v1174 = vld [vmem:[%s4 + $0x2c8] sm:$0xff]
  %v1175 = vld [vmem:[%s4 + $0x2d0] sm:$0xff]
  %v1176 = vld [vmem:[%s4 + $0x2d8] sm:$0xff]
  %v1177 = vld [vmem:[%s4 + $0x2e0] sm:$0xff]
  %v1178 = vld [vmem:[%s4 + $0x2e8] sm:$0xff]
  %v1179 = vld [vmem:[%s4 + $0x2f0] sm:$0xff]
  %v1180 = vld [vmem:[%s4 + $0x2f8] sm:$0xff]
  %v1181 = vld [vmem:[%s4 + $0x300] sm:$0xff]
  %v1182 = vld [vmem:[%s4 + $0x308] sm:$0xff]
  %v1183 = vld [vmem:[%s4 + $0x310] sm:$0xff]
  %v1184 = vld [vmem:[%s4 + $0x318] sm:$0xff]
  %v1185 = vld [vmem:[%s4 + $0x320] sm:$0xff]
  %v1186 = vld [vmem:[%s4 + $0x328] sm:$0xff]
  %v1187 = vld [vmem:[%s4 + $0x330] sm:$0xff]
  %v1188 = vld [vmem:[%s4 + $0x338] sm:$0xff]
  %v1189 = vld [vmem:[%s4 + $0x340] sm:$0xff]
  %v1190 = vld [vmem:[%s4 + $0x348] sm:$0xff]
  %v1191 = vld [vmem:[%s4 + $0x350] sm:$0xff]
  %v1192 = vld [vmem:[%s4 + $0x358] sm:$0xff]
  %v1193 = vld [vmem:[%s4 + $0x360] sm:$0xff]
  %v1194 = vld [vmem:[%s4 + $0x368] sm:$0xff]
  %v1195 = vld [vmem:[%s4 + $0x370] sm:$0xff]
  %v1196 = vld [vmem:[%s4 + $0x378] sm:$0xff]
  %v1197 = vld [vmem:[%s4 + $0x380] sm:$0xff]
  %v1198 = vld [vmem:[%s4 + $0x388] sm:$0xff]
  %v1199 = vld [vmem:[%s4 + $0x390] sm:$0xff]
  %v1200 = vld [vmem:[%s4 + $0x398] sm:$0xff]
  %v1201 = vld [vmem:[%s4 + $0x3a0] sm:$0xff]
  %v1202 = vld [vmem:[%s4 + $0x3a8] sm:$0xff]
  %v1203 = vld [vmem:[%s4 + $0x3b0] sm:$0xff]
  %v1204 = vld [vmem:[%s4 + $0x3b8] sm:$0xff]
  %v1205 = vld [vmem:[%s4 + $0x3c0] sm:$0xff]
  %v1206 = vld [vmem:[%s4 + $0x3c8] sm:$0xff]
  %v1207 = vld [vmem:[%s4 + $0x3d0] sm:$0xff]
  %v1208 = vld [vmem:[%s4 + $0x3d8] sm:$0xff]
  %v1209 = vld [vmem:[%s4 + $0x3e0] sm:$0xff]
  %v1210 = vld [vmem:[%s4 + $0x3e8] sm:$0xff]
  %v1211 = vld [vmem:[%s4 + $0x3f0] sm:$0xff]
  %v1212 = vld [vmem:[%s4 + $0x3f8] sm:$0xff]
  %v1213 = vld [vmem:[%s4 + $0x400] sm:$0xff]
  %v1214 = vld [vmem:[%s4 + $0x408] sm:$0xff]
  %v1215 = vld [vmem:[%s4 + $0x410] sm:$0xff]
  %v1216 = vld [vmem:[%s4 + $0x418] sm:$0xff]
  %v1217 = vld [vmem:[%s4 + $0x420] sm:$0xff]
  %v1218 = vld [vmem:[%s4 + $0x428] sm:$0xff]
  %v1219 = vld [vmem:[%s4 + $0x430] sm:$0xff]
  %v1220 = vld [vmem:[%s4 + $0x438] sm:$0xff]
  %v1221 = vld [vmem:[%s4 + $0x440] sm:$0xff]
  %v1222 = vld [vmem:[%s4 + $0x448] sm:$0xff]
  %v1223 = vld [vmem:[%s4 + $0x450] sm:$0xff]
  %v1224 = vld [vmem:[%s4 + $0x458] sm:$0xff]
  %v1225 = vld [vmem:[%s4 + $0x460] sm:$0xff]
  %v1226 = vld [vmem:[%s4 + $0x468] sm:$0xff]
  %v1227 = vld [vmem:[%s4 + $0x470] sm:$0xff]
  %v1228 = vld [vmem:[%s4 + $0x478] sm:$0xff]
  %v1229 = vld [vmem:[%s4 + $0x480] sm:$0xff]
  %v1230 = vld [vmem:[%s4 + $0x488] sm:$0xff]
  %v1231 = vld [vmem:[%s4 + $0x490] sm:$0xff]
  %v1232 = vld [vmem:[%s4 + $0x498] sm:$0xff]
  %v1233 = vld [vmem:[%s4 + $0x4a0] sm:$0xff]
  %v1234 = vld [vmem:[%s4 + $0x4a8] sm:$0xff]
  %v1235 = vld [vmem:[%s4 + $0x4b0] sm:$0xff]
  %v1236 = vld [vmem:[%s4 + $0x4b8] sm:$0xff]
  %v1237 = vld [vmem:[%s4 + $0x4c0] sm:$0xff]
  %v1238 = vld [vmem:[%s4 + $0x4c8] sm:$0xff]
  %v1239 = vld [vmem:[%s4 + $0x4d0] sm:$0xff]
  %v1240 = vld [vmem:[%s4 + $0x4d8] sm:$0xff]
  %v1241 = vld [vmem:[%s4 + $0x4e0] sm:$0xff]
  %v1242 = vld [vmem:[%s4 + $0x4e8] sm:$0xff]
  %v1243 = vld [vmem:[%s4 + $0x4f0] sm:$0xff]
  %v1244 = vld [vmem:[%s4 + $0x4f8] sm:$0xff]
  %v1245 = vld [vmem:[%s4 + $0x500] sm:$0xff]
  %v1246 = vld [vmem:[%s4 + $0x508] sm:$0xff]
  %v1247 = vld [vmem:[%s4 + $0x510] sm:$0xff]
  %v1248 = vld [vmem:[%s4 + $0x518] sm:$0xff]
  %v1249 = vld [vmem:[%s4 + $0x520] sm:$0xff]
  %v1250 = vld [vmem:[%s4 + $0x528] sm:$0xff]
  %v1251 = vld [vmem:[%s4 + $0x530] sm:$0xff]
  %v1252 = vld [vmem:[%s4 + $0x538] sm:$0xff]
  %v1253 = vld [vmem:[%s4 + $0x540] sm:$0xff]
  %v1254 = vld [vmem:[%s4 + $0x548] sm:$0xff]
  %v1255 = vld [vmem:[%s4 + $0x550] sm:$0xff]
  %v1256 = vld [vmem:[%s4 + $0x558] sm:$0xff]
  %v1257 = vld [vmem:[%s4 + $0x560] sm:$0xff]
  %v1258 = vld [vmem:[%s4 + $0x568] sm:$0xff]
  %v1259 = vld [vmem:[%s4 + $0x570] sm:$0xff]
  %v1260 = vld [vmem:[%s4 + $0x578] sm:$0xff]
  %v1261 = vld [vmem:[%s4 + $0x580] sm:$0xff]
  %v1262 = vld [vmem:[%s4 + $0x588] sm:$0xff]
  %v1263 = vld [vmem:[%s4 + $0x590] sm:$0xff]
  %v1264 = vld [vmem:[%s4 + $0x598] sm:$0xff]
  %v1265 = vld [vmem:[%s4 + $0x5a0] sm:$0xff]
  %v1266 = vld [vmem:[%s4 + $0x5a8] sm:$0xff]
  %v1267 = vld [vmem:[%s4 + $0x5b0] sm:$0xff]
  %v1268 = vld [vmem:[%s4 + $0x5b8] sm:$0xff]
  %v1269 = vld [vmem:[%s4 + $0x5c0] sm:$0xff]
  %v1270 = vld [vmem:[%s4 + $0x5c8] sm:$0xff]
  %v1271 = vld [vmem:[%s4 + $0x5d0] sm:$0xff]
  %v1272 = vld [vmem:[%s4 + $0x5d8] sm:$0xff]
  %v1273 = vld [vmem:[%s4 + $0x5e0] sm:$0xff]
  %v1274 = vld [vmem:[%s4 + $0x5e8] sm:$0xff]
  %v1275 = vld [vmem:[%s4 + $0x5f0] sm:$0xff]
  %v1276 = vld [vmem:[%s4 + $0x5f8] sm:$0xff]
  %v1277 = vld [vmem:[%s4 + $0x600] sm:$0xff]
  %v1278 = vld [vmem:[%s4 + $0x608] sm:$0xff]
  %v1279 = vld [vmem:[%s4 + $0x610] sm:$0xff]
  %v1280 = vld [vmem:[%s4 + $0x618] sm:$0xff]
  %v1281 = vld [vmem:[%s4 + $0x620] sm:$0xff]
  %v1282 = vld [vmem:[%s4 + $0x628] sm:$0xff]
  %v1283 = vld [vmem:[%s4 + $0x630] sm:$0xff]
  %v1284 = vld [vmem:[%s4 + $0x638] sm:$0xff]
  %v1285 = vld [vmem:[%s4 + $0x640] sm:$0xff]
  %v1286 = vld [vmem:[%s4 + $0x648] sm:$0xff]
  %v1287 = vld [vmem:[%s4 + $0x650] sm:$0xff]
  %v1288 = vld [vmem:[%s4 + $0x658] sm:$0xff]
  %v1289 = vld [vmem:[%s4 + $0x660] sm:$0xff]
  %v1290 = vld [vmem:[%s4 + $0x668] sm:$0xff]
  %v1291 = vld [vmem:[%s4 + $0x670] sm:$0xff]
  %v1292 = vld [vmem:[%s4 + $0x678] sm:$0xff]
  %v1293 = vld [vmem:[%s4 + $0x680] sm:$0xff]
  %v1294 = vld [vmem:[%s4 + $0x688] sm:$0xff]
  %v1295 = vld [vmem:[%s4 + $0x690] sm:$0xff]
  %v1296 = vld [vmem:[%s4 + $0x698] sm:$0xff]
  %v1297 = vld [vmem:[%s4 + $0x6a0] sm:$0xff]
  %v1298 = vld [vmem:[%s4 + $0x6a8] sm:$0xff]
  %v1299 = vld [vmem:[%s4 + $0x6b0] sm:$0xff]
  %v1300 = vld [vmem:[%s4 + $0x6b8] sm:$0xff]
  %v1301 = vld [vmem:[%s4 + $0x6c0] sm:$0xff]
  %v1302 = vld [vmem:[%s4 + $0x6c8] sm:$0xff]
  %v1303 = vld [vmem:[%s4 + $0x6d0] sm:$0xff]
  %v1304 = vld [vmem:[%s4 + $0x6d8] sm:$0xff]
  %v1305 = vld [vmem:[%s4 + $0x6e0] sm:$0xff]
  %v1306 = vld [vmem:[%s4 + $0x6e8] sm:$0xff]
  %v1307 = vld [vmem:[%s4 + $0x6f0] sm:$0xff]
  %v1308 = vld [vmem:[%s4 + $0x6f8] sm:$0xff]
  %v1309 = vld [vmem:[%s4 + $0x700] sm:$0xff]
  %v1310 = vld [vmem:[%s4 + $0x708] sm:$0xff]
  %v1311 = vld [vmem:[%s4 + $0x710] sm:$0xff]
  %v1312 = vld [vmem:[%s4 + $0x718] sm:$0xff]
  %v1313 = vld [vmem:[%s4 + $0x720] sm:$0xff]
  %v1314 = vld [vmem:[%s4 + $0x728] sm:$0xff]
  %v1315 = vld [vmem:[%s4 + $0x730] sm:$0xff]
  %v1316 = vld [vmem:[%s4 + $0x738] sm:$0xff]
  %v1317 = vld [vmem:[%s4 + $0x740] sm:$0xff]
  %v1318 = vld [vmem:[%s4 + $0x748] sm:$0xff]
  %v1319 = vld [vmem:[%s4 + $0x750] sm:$0xff]
  %v1320 = vld [vmem:[%s4 + $0x758] sm:$0xff]
  %v1321 = vld [vmem:[%s4 + $0x760] sm:$0xff]
  %v1322 = vld [vmem:[%s4 + $0x768] sm:$0xff]
  %v1323 = vld [vmem:[%s4 + $0x770] sm:$0xff]
  %v1324 = vld [vmem:[%s4 + $0x778] sm:$0xff]
  %v1325 = vld [vmem:[%s4 + $0x780] sm:$0xff]
  %v1326 = vld [vmem:[%s4 + $0x788] sm:$0xff]
  %v1327 = vld [vmem:[%s4 + $0x790] sm:$0xff]
  %v1328 = vld [vmem:[%s4 + $0x798] sm:$0xff]
  %v1329 = vld [vmem:[%s4 + $0x7a0] sm:$0xff]
  %v1330 = vld [vmem:[%s4 + $0x7a8] sm:$0xff]
  %v1331 = vld [vmem:[%s4 + $0x7b0] sm:$0xff]
  %v1332 = vld [vmem:[%s4 + $0x7b8] sm:$0xff]
  %v1333 = vld [vmem:[%s4 + $0x7c0] sm:$0xff]
  %v1334 = vld [vmem:[%s4 + $0x7c8] sm:$0xff]
  %v1335 = vld [vmem:[%s4 + $0x7d0] sm:$0xff]
  %v1336 = vld [vmem:[%s4 + $0x7d8] sm:$0xff]
  %v1337 = vld [vmem:[%s4 + $0x7e0] sm:$0xff]
  %v1338 = vld [vmem:[%s4 + $0x7e8] sm:$0xff]
  %v1339 = vld [vmem:[%s4 + $0x7f0] sm:$0xff]
  %v1340 = vld [vmem:[%s4 + $0x7f8] sm:$0xff]
  %v1341 = vld [vmem:[%s4 + $0x800] sm:$0xff]
  %v1342 = vld [vmem:[%s4 + $0x808] sm:$0xff]
  %v1343 = vld [vmem:[%s4 + $0x810] sm:$0xff]
  %v1344 = vld [vmem:[%s4 + $0x818] sm:$0xff]
  %v1345 = vld [vmem:[%s4 + $0x820] sm:$0xff]
  %v1346 = vld [vmem:[%s4 + $0x828] sm:$0xff]
  %v1347 = vld [vmem:[%s4 + $0x830] sm:$0xff]
  %v1348 = vld [vmem:[%s4 + $0x838] sm:$0xff]
  %v1349 = vld [vmem:[%s4 + $0x840] sm:$0xff]
  %v1350 = vld [vmem:[%s4 + $0x848] sm:$0xff]
  %v1351 = vld [vmem:[%s4 + $0x850] sm:$0xff]
  %v1352 = vld [vmem:[%s4 + $0x858] sm:$0xff]
  %v1353 = vld [vmem:[%s4 + $0x860] sm:$0xff]
  %v1354 = vld [vmem:[%s4 + $0x868] sm:$0xff]
  %v1355 = vld [vmem:[%s4 + $0x870] sm:$0xff]
  %v1356 = vld [vmem:[%s4 + $0x878] sm:$0xff]
  %v1357 = vld [vmem:[%s4 + $0x880] sm:$0xff]
  %v1358 = vld [vmem:[%s4 + $0x888] sm:$0xff]
  %v1359 = vld [vmem:[%s4 + $0x890] sm:$0xff]
  %v1360 = vld [vmem:[%s4 + $0x898] sm:$0xff]
  %v1361 = vld [vmem:[%s4 + $0x8a0] sm:$0xff]
  %v1362 = vld [vmem:[%s4 + $0x8a8] sm:$0xff]
  %v1363 = vld [vmem:[%s4 + $0x8b0] sm:$0xff]
  %v1364 = vld [vmem:[%s4 + $0x8b8] sm:$0xff]
  %v1365 = vld [vmem:[%s4 + $0x8c0] sm:$0xff]
  %v1366 = vld [vmem:[%s4 + $0x8c8] sm:$0xff]
  %v1367 = vld [vmem:[%s4 + $0x8d0] sm:$0xff]
  %v1368 = vld [vmem:[%s4 + $0x8d8] sm:$0xff]
  %v1369 = vld [vmem:[%s4 + $0x8e0] sm:$0xff]
  %v1370 = vld [vmem:[%s4 + $0x8e8] sm:$0xff]
  %v1371 = vld [vmem:[%s4 + $0x8f0] sm:$0xff]
  %v1372 = vld [vmem:[%s4 + $0x8f8] sm:$0xff]
  %v1373 = vld [vmem:[%s4 + $0x900] sm:$0xff]
  %v1374 = vld [vmem:[%s4 + $0x908] sm:$0xff]
  %v1375 = vld [vmem:[%s4 + $0x910] sm:$0xff]
  %v1376 = vld [vmem:[%s4 + $0x918] sm:$0xff]
  %v1377 = vld [vmem:[%s4 + $0x920] sm:$0xff]
  %v1378 = vld [vmem:[%s4 + $0x928] sm:$0xff]
  %v1379 = vld [vmem:[%s4 + $0x930] sm:$0xff]
  %v1380 = vld [vmem:[%s4 + $0x938] sm:$0xff]
  %v1381 = vld [vmem:[%s4 + $0x940] sm:$0xff]
  %v1382 = vld [vmem:[%s4 + $0x948] sm:$0xff]
  %v1383 = vld [vmem:[%s4 + $0x950] sm:$0xff]
  %v1384 = vld [vmem:[%s4 + $0x958] sm:$0xff]
  %v1385 = vld [vmem:[%s4 + $0x960] sm:$0xff]
  %v1386 = vld [vmem:[%s4 + $0x968] sm:$0xff]
  %v1387 = vld [vmem:[%s4 + $0x970] sm:$0xff]
  %v1388 = vld [vmem:[%s4 + $0x978] sm:$0xff]
  %v1389 = vld [vmem:[%s4 + $0x980] sm:$0xff]
  %v1390 = vld [vmem:[%s4 + $0x988] sm:$0xff]
  %v1391 = vld [vmem:[%s4 + $0x990] sm:$0xff]
  %v1392 = vld [vmem:[%s4 + $0x998] sm:$0xff]
  %v1393 = vld [vmem:[%s4 + $0x9a0] sm:$0xff]
  %v1394 = vld [vmem:[%s4 + $0x9a8] sm:$0xff]
  %v1395 = vld [vmem:[%s4 + $0x9b0] sm:$0xff]
  %v1396 = vld [vmem:[%s4 + $0x9b8] sm:$0xff]
  %v1397 = vld [vmem:[%s4 + $0x9c0] sm:$0xff]
  %v1398 = vld [vmem:[%s4 + $0x9c8] sm:$0xff]
  %v1399 = vld [vmem:[%s4 + $0x9d0] sm:$0xff]
  %v1400 = vld [vmem:[%s4 + $0x9d8] sm:$0xff]
  %v1401 = vld [vmem:[%s4 + $0x9e0] sm:$0xff]
  %v1402 = vld [vmem:[%s4 + $0x9e8] sm:$0xff]
  %s1403 = scalar_lea.vmem %s6, 41
  %v1404 = vld [vmem:[%s1403] ss:$8 sm:$0x7]
  %v1406 = vlaneseq
  %v1407 = vshrl.u32 %v1406, 7
  %v1408 = vsub.s32 0, %v1407
  %v1409 = vrot.slane %v1404, %v1408
  %v1410 = vlaneseq
  %v1411 = vshrl.u32 %v1410, 7
  %v1412 = vsub.s32 1, %v1411
  %v1413 = vrot.slane %v1404, %v1412
  %v1414 = vlaneseq
  %v1415 = vshrl.u32 %v1414, 7
  %v1416 = vsub.s32 2, %v1415
  %v1417 = vrot.slane %v1404, %v1416
  %1421 = vmatprep.subr.mxu0 %v1209
  %1422 = vmatpush1.msra.mxu0 %v1208
  %1423 = vmatprep.subr.mxu0 %v1206
  %1424 = vmatpush1.msra.mxu0 %v1205
  %1425 = vmatprep.subr.mxu0 %v1203
  %1426 = vmatpush1.msra.mxu0 %v1202
  %1427 = vmatprep.subr.mxu0 %v1200
  %1428 = vmatpush1.msra.mxu0 %v1199
  %1429 = vmatprep.subr.mxu0 %v1197
  %1430 = vmatpush1.msra.mxu0 %v1196
  %1431 = vmatprep.subr.mxu0 %v1194
  %1432 = vmatpush1.msra.mxu0 %v1193
  %1433 = vmatprep.subr.mxu0 %v1191
  %1434 = vmatpush1.msra.mxu0 %v1190
  %1435 = vmatprep.subr.mxu0 %v1188
  %1436 = vmatpush1.msra.mxu0 %v1187
  %1437 = vmatprep.subr.mxu0 %v1185
  %1438 = vmatpush1.msra.mxu0 %v1184
  %1439 = vmatprep.subr.mxu0 %v1182
  %1440 = vmatpush1.msra.mxu0 %v1181
  %1441 = vmatprep.subr.mxu0 %v1179
  %1442 = vmatpush1.msra.mxu0 %v1178
  %1443 = vmatprep.subr.mxu0 %v1176
  %1444 = vmatpush1.msra.mxu0 %v1175
  %1445 = vmatprep.subr.mxu0 %v1173
  %1446 = vmatpush1.msra.mxu0 %v1172
  %1447 = vmatprep.subr.mxu0 %v1170
  %1448 = vmatpush1.msra.mxu0 %v1169
  %1449 = vmatprep.subr.mxu0 %v1167
  %1450 = vmatpush1.msra.mxu0 %v1166
  %1451 = vmatprep.subr.mxu0 %v1164
  %1452 = vmatpush1.msra.mxu0 %v1163
  %1453 = vmatprep.subr.mxu0 %v1257
  %1454 = vmatpush2.msra.mxu0 %v1256
  %1455 = vmatprep.subr.mxu0 %v1254
  %1456 = vmatpush2.msra.mxu0 %v1253
  %1457 = vmatprep.subr.mxu0 %v1251
  %1458 = vmatpush2.msra.mxu0 %v1250
  %1459 = vmatprep.subr.mxu0 %v1248
  %1460 = vmatpush2.msra.mxu0 %v1247
  %1461 = vmatprep.subr.mxu0 %v1245
  %1462 = vmatpush2.msra.mxu0 %v1244
  %1463 = vmatprep.subr.mxu0 %v1242
  %1464 = vmatpush2.msra.mxu0 %v1241
  %1465 = vmatprep.subr.mxu0 %v1239
  %1466 = vmatpush2.msra.mxu0 %v1238
  %1467 = vmatprep.subr.mxu0 %v1236
  %1468 = vmatpush2.msra.mxu0 %v1235
  %1469 = vmatprep.subr.mxu0 %v1233
  %1470 = vmatpush2.msra.mxu0 %v1232
  %1471 = vmatprep.subr.mxu0 %v1230
  %1472 = vmatpush2.msra.mxu0 %v1229
  %1473 = vmatprep.subr.mxu0 %v1227
  %1474 = vmatpush2.msra.mxu0 %v1226
  %1475 = vmatprep.subr.mxu0 %v1224
  %1476 = vmatpush2.msra.mxu0 %v1223
  %1477 = vmatprep.subr.mxu0 %v1221
  %1478 = vmatpush2.msra.mxu0 %v1220
  %1479 = vmatprep.subr.mxu0 %v1218
  %1480 = vmatpush2.msra.mxu0 %v1217
  %1481 = vmatprep.subr.mxu0 %v1215
  %1482 = vmatpush2.msra.mxu0 %v1214
  %1483 = vmatprep.subr.mxu0 %v1212
  %1484 = vmatpush2.msra.mxu0 %v1211
  %1485 = vmatprep.mubr.f32.mxu0 %v1159
  %1486 = vmatmul.mubr.f32.gmra.mxu0 %v1158
  %v1487 = vpop.f32.mrf.mxu0
  %v1488 = vadd.f32 %v1409, %v1487
  %v1489 = vpop.f32.mrf.mxu0
  %v1490 = vadd.f32 %v1413, %v1489
  %1491 = vdwg.mxu0
  %1492 = vmatprep.subr.mxu0 %v1305
  %1493 = vmatpush1.msra.mxu0 %v1304
  %1494 = vmatprep.subr.mxu0 %v1302
  %1495 = vmatpush1.msra.mxu0 %v1301
  %1496 = vmatprep.subr.mxu0 %v1299
  %1497 = vmatpush1.msra.mxu0 %v1298
  %1498 = vmatprep.subr.mxu0 %v1296
  %1499 = vmatpush1.msra.mxu0 %v1295
  %1500 = vmatprep.subr.mxu0 %v1293
  %1501 = vmatpush1.msra.mxu0 %v1292
  %1502 = vmatprep.subr.mxu0 %v1290
  %1503 = vmatpush1.msra.mxu0 %v1289
  %1504 = vmatprep.subr.mxu0 %v1287
  %1505 = vmatpush1.msra.mxu0 %v1286
  %1506 = vmatprep.subr.mxu0 %v1284
  %1507 = vmatpush1.msra.mxu0 %v1283
  %1508 = vmatprep.subr.mxu0 %v1281
  %1509 = vmatpush1.msra.mxu0 %v1280
  %1510 = vmatprep.subr.mxu0 %v1278
  %1511 = vmatpush1.msra.mxu0 %v1277
  %1512 = vmatprep.subr.mxu0 %v1275
  %1513 = vmatpush1.msra.mxu0 %v1274
  %1514 = vmatprep.subr.mxu0 %v1272
  %1515 = vmatpush1.msra.mxu0 %v1271
  %1516 = vmatprep.subr.mxu0 %v1269
  %1517 = vmatpush1.msra.mxu0 %v1268
  %1518 = vmatprep.subr.mxu0 %v1266
  %1519 = vmatpush1.msra.mxu0 %v1265
  %1520 = vmatprep.subr.mxu0 %v1263
  %1521 = vmatpush1.msra.mxu0 %v1262
  %1522 = vmatprep.subr.mxu0 %v1260
  %1523 = vmatpush1.msra.mxu0 %v1259
  %1524 = vmatprep.subr.mxu0 %v1353
  %1525 = vmatpush2.msra.mxu0 %v1352
  %1526 = vmatprep.subr.mxu0 %v1350
  %1527 = vmatpush2.msra.mxu0 %v1349
  %1528 = vmatprep.subr.mxu0 %v1347
  %1529 = vmatpush2.msra.mxu0 %v1346
  %1530 = vmatprep.subr.mxu0 %v1344
  %1531 = vmatpush2.msra.mxu0 %v1343
  %1532 = vmatprep.subr.mxu0 %v1341
  %1533 = vmatpush2.msra.mxu0 %v1340
  %1534 = vmatprep.subr.mxu0 %v1338
  %1535 = vmatpush2.msra.mxu0 %v1337
  %1536 = vmatprep.subr.mxu0 %v1335
  %1537 = vmatpush2.msra.mxu0 %v1334
  %1538 = vmatprep.subr.mxu0 %v1332
  %1539 = vmatpush2.msra.mxu0 %v1331
  %1540 = vmatprep.subr.mxu0 %v1329
  %1541 = vmatpush2.msra.mxu0 %v1328
  %1542 = vmatprep.subr.mxu0 %v1326
  %1543 = vmatpush2.msra.mxu0 %v1325
  %1544 = vmatprep.subr.mxu0 %v1323
  %1545 = vmatpush2.msra.mxu0 %v1322
  %1546 = vmatprep.subr.mxu0 %v1320
  %1547 = vmatpush2.msra.mxu0 %v1319
  %1548 = vmatprep.subr.mxu0 %v1317
  %1549 = vmatpush2.msra.mxu0 %v1316
  %1550 = vmatprep.subr.mxu0 %v1314
  %1551 = vmatpush2.msra.mxu0 %v1313
  %1552 = vmatprep.subr.mxu0 %v1311
  %1553 = vmatpush2.msra.mxu0 %v1310
  %1554 = vmatprep.subr.mxu0 %v1308
  %1555 = vmatpush2.msra.mxu0 %v1307
  %1556 = vmatprep.mubr.f32.mxu0 %v1161
  %1557 = vmatmul.mubr.f32.gmra.mxu0 %v1160
  %v1558 = vpop.f32.mrf.mxu0
  %v1559 = vadd.f32 %v1488, %v1558
  %v1560 = vpop.f32.mrf.mxu0
  %v1561 = vadd.f32 %v1490, %v1560
  %1562 = vdwg.mxu0
  %1563 = vmatprep.subr.mxu0 %v1401
  %1564 = vmatpush1.msra.mxu0 %v1400
  %1565 = vmatprep.subr.mxu0 %v1398
  %1566 = vmatpush1.msra.mxu0 %v1397
  %1567 = vmatprep.subr.mxu0 %v1395
  %1568 = vmatpush1.msra.mxu0 %v1394
  %1569 = vmatprep.subr.mxu0 %v1392
  %1570 = vmatpush1.msra.mxu0 %v1391
  %1571 = vmatprep.subr.mxu0 %v1389
  %1572 = vmatpush1.msra.mxu0 %v1388
  %1573 = vmatprep.subr.mxu0 %v1386
  %1574 = vmatpush1.msra.mxu0 %v1385
  %1575 = vmatprep.subr.mxu0 %v1383
  %1576 = vmatpush1.msra.mxu0 %v1382
  %1577 = vmatprep.subr.mxu0 %v1380
  %1578 = vmatpush1.msra.mxu0 %v1379
  %1579 = vmatprep.subr.mxu0 %v1377
  %1580 = vmatpush1.msra.mxu0 %v1376
  %1581 = vmatprep.subr.mxu0 %v1374
  %1582 = vmatpush1.msra.mxu0 %v1373
  %1583 = vmatprep.subr.mxu0 %v1371
  %1584 = vmatpush1.msra.mxu0 %v1370
  %1585 = vmatprep.subr.mxu0 %v1368
  %1586 = vmatpush1.msra.mxu0 %v1367
  %1587 = vmatprep.subr.mxu0 %v1365
  %1588 = vmatpush1.msra.mxu0 %v1364
  %1589 = vmatprep.subr.mxu0 %v1362
  %1590 = vmatpush1.msra.mxu0 %v1361
  %1591 = vmatprep.subr.mxu0 %v1359
  %1592 = vmatpush1.msra.mxu0 %v1358
  %1593 = vmatprep.subr.mxu0 %v1356
  %1594 = vmatpush1.msra.mxu0 %v1355
  %1595 = vmatprep.subr.mxu0 0.0
  %1596 = vmatpush2.msra.mxu0 0.0
  %1597 = vmatprep.subr.mxu0 0.0
  %1598 = vmatpush2.msra.mxu0 0.0
  %1599 = vmatprep.subr.mxu0 0.0
  %1600 = vmatpush2.msra.mxu0 0.0
  %1601 = vmatprep.subr.mxu0 0.0
  %1602 = vmatpush2.msra.mxu0 0.0
  %1603 = vmatprep.subr.mxu0 0.0
  %1604 = vmatpush2.msra.mxu0 0.0
  %1605 = vmatprep.subr.mxu0 0.0
  %1606 = vmatpush2.msra.mxu0 0.0
  %1607 = vmatprep.subr.mxu0 0.0
  %1608 = vmatpush2.msra.mxu0 0.0
  %1609 = vmatprep.subr.mxu0 0.0
  %1610 = vmatpush2.msra.mxu0 0.0
  %1611 = vmatprep.subr.mxu0 0.0
  %1612 = vmatpush2.msra.mxu0 0.0
  %1613 = vmatprep.subr.mxu0 0.0
  %1614 = vmatpush2.msra.mxu0 0.0
  %1615 = vmatprep.subr.mxu0 0.0
  %1616 = vmatpush2.msra.mxu0 0.0
  %1617 = vmatprep.subr.mxu0 0.0
  %1618 = vmatpush2.msra.mxu0 0.0
  %1619 = vmatprep.subr.mxu0 0.0
  %1620 = vmatpush2.msra.mxu0 0.0
  %1621 = vmatprep.subr.mxu0 0.0
  %1622 = vmatpush2.msra.mxu0 0.0
  %1623 = vmatprep.subr.mxu0 0.0
  %1624 = vmatpush2.msra.mxu0 0.0
  %1625 = vmatprep.subr.mxu0 0.0
  %1626 = vmatpush2.msra.mxu0 0.0
  %1627 = vmatprep.mubr.f32.mxu0 0.0
  %1628 = vmatmul.mubr.f32.gmra.mxu0 %v1162
  %v1629 = vpop.f32.mrf.mxu0
  %v1630 = vadd.f32 %v1559, %v1629
  %v1631 = vpop.f32.mrf.mxu0
  %v1632 = vadd.f32 %v1561, %v1631
  %1633 = vdwg.mxu0
  %1634 = vmatprep.subr.mxu0 0.0
  %1635 = vmatpush1.msra.mxu0 %v1210
  %1636 = vmatprep.subr.mxu0 0.0
  %1637 = vmatpush1.msra.mxu0 %v1207
  %1638 = vmatprep.subr.mxu0 0.0
  %1639 = vmatpush1.msra.mxu0 %v1204
  %1640 = vmatprep.subr.mxu0 0.0
  %1641 = vmatpush1.msra.mxu0 %v1201
  %1642 = vmatprep.subr.mxu0 0.0
  %1643 = vmatpush1.msra.mxu0 %v1198
  %1644 = vmatprep.subr.mxu0 0.0
  %1645 = vmatpush1.msra.mxu0 %v1195
  %1646 = vmatprep.subr.mxu0 0.0
  %1647 = vmatpush1.msra.mxu0 %v1192
  %1648 = vmatprep.subr.mxu0 0.0
  %1649 = vmatpush1.msra.mxu0 %v1189
  %1650 = vmatprep.subr.mxu0 0.0
  %1651 = vmatpush1.msra.mxu0 %v1186
  %1652 = vmatprep.subr.mxu0 0.0
  %1653 = vmatpush1.msra.mxu0 %v1183
  %1654 = vmatprep.subr.mxu0 0.0
  %1655 = vmatpush1.msra.mxu0 %v1180
  %1656 = vmatprep.subr.mxu0 0.0
  %1657 = vmatpush1.msra.mxu0 %v1177
  %1658 = vmatprep.subr.mxu0 0.0
  %1659 = vmatpush1.msra.mxu0 %v1174
  %1660 = vmatprep.subr.mxu0 0.0
  %1661 = vmatpush1.msra.mxu0 %v1171
  %1662 = vmatprep.subr.mxu0 0.0
  %1663 = vmatpush1.msra.mxu0 %v1168
  %1664 = vmatprep.subr.mxu0 0.0
  %1665 = vmatpush1.msra.mxu0 %v1165
  %1666 = vmatprep.subr.mxu0 0.0
  %1667 = vmatpush2.msra.mxu0 %v1258
  %1668 = vmatprep.subr.mxu0 0.0
  %1669 = vmatpush2.msra.mxu0 %v1255
  %1670 = vmatprep.subr.mxu0 0.0
  %1671 = vmatpush2.msra.mxu0 %v1252
  %1672 = vmatprep.subr.mxu0 0.0
  %1673 = vmatpush2.msra.mxu0 %v1249
  %1674 = vmatprep.subr.mxu0 0.0
  %1675 = vmatpush2.msra.mxu0 %v1246
  %1676 = vmatprep.subr.mxu0 0.0
  %1677 = vmatpush2.msra.mxu0 %v1243
  %1678 = vmatprep.subr.mxu0 0.0
  %1679 = vmatpush2.msra.mxu0 %v1240
  %1680 = vmatprep.subr.mxu0 0.0
  %1681 = vmatpush2.msra.mxu0 %v1237
  %1682 = vmatprep.subr.mxu0 0.0
  %1683 = vmatpush2.msra.mxu0 %v1234
  %1684 = vmatprep.subr.mxu0 0.0
  %1685 = vmatpush2.msra.mxu0 %v1231
  %1686 = vmatprep.subr.mxu0 0.0
  %1687 = vmatpush2.msra.mxu0 %v1228
  %1688 = vmatprep.subr.mxu0 0.0
  %1689 = vmatpush2.msra.mxu0 %v1225
  %1690 = vmatprep.subr.mxu0 0.0
  %1691 = vmatpush2.msra.mxu0 %v1222
  %1692 = vmatprep.subr.mxu0 0.0
  %1693 = vmatpush2.msra.mxu0 %v1219
  %1694 = vmatprep.subr.mxu0 0.0
  %1695 = vmatpush2.msra.mxu0 %v1216
  %1696 = vmatprep.subr.mxu0 0.0
  %1697 = vmatpush2.msra.mxu0 %v1213
  %1698 = vmatprep.mubr.f32.mxu0 %v1159
  %1699 = vmatmul.mubr.f32.gmra.mxu0 %v1158
  %v1700 = vpop.f32.mrf.mxu0
  %v1701 = vadd.f32 %v1417, %v1700
  %v1702 = vpop.f32.mrf.mxu0
  %1703 = vdwg.mxu0
  %1704 = vmatprep.subr.mxu0 0.0
  %1705 = vmatpush1.msra.mxu0 %v1306
  %1706 = vmatprep.subr.mxu0 0.0
  %1707 = vmatpush1.msra.mxu0 %v1303
  %1708 = vmatprep.subr.mxu0 0.0
  %1709 = vmatpush1.msra.mxu0 %v1300
  %1710 = vmatprep.subr.mxu0 0.0
  %1711 = vmatpush1.msra.mxu0 %v1297
  %1712 = vmatprep.subr.mxu0 0.0
  %1713 = vmatpush1.msra.mxu0 %v1294
  %1714 = vmatprep.subr.mxu0 0.0
  %1715 = vmatpush1.msra.mxu0 %v1291
  %1716 = vmatprep.subr.mxu0 0.0
  %1717 = vmatpush1.msra.mxu0 %v1288
  %1718 = vmatprep.subr.mxu0 0.0
  %1719 = vmatpush1.msra.mxu0 %v1285
  %1720 = vmatprep.subr.mxu0 0.0
  %1721 = vmatpush1.msra.mxu0 %v1282
  %1722 = vmatprep.subr.mxu0 0.0
  %1723 = vmatpush1.msra.mxu0 %v1279
  %1724 = vmatprep.subr.mxu0 0.0
  %1725 = vmatpush1.msra.mxu0 %v1276
  %1726 = vmatprep.subr.mxu0 0.0
  %1727 = vmatpush1.msra.mxu0 %v1273
  %1728 = vmatprep.subr.mxu0 0.0
  %1729 = vmatpush1.msra.mxu0 %v1270
  %1730 = vmatprep.subr.mxu0 0.0
  %1731 = vmatpush1.msra.mxu0 %v1267
  %1732 = vmatprep.subr.mxu0 0.0
  %1733 = vmatpush1.msra.mxu0 %v1264
  %1734 = vmatprep.subr.mxu0 0.0
  %1735 = vmatpush1.msra.mxu0 %v1261
  %1736 = vmatprep.subr.mxu0 0.0
  %1737 = vmatpush2.msra.mxu0 %v1354
  %1738 = vmatprep.subr.mxu0 0.0
  %1739 = vmatpush2.msra.mxu0 %v1351
  %1740 = vmatprep.subr.mxu0 0.0
  %1741 = vmatpush2.msra.mxu0 %v1348
  %1742 = vmatprep.subr.mxu0 0.0
  %1743 = vmatpush2.msra.mxu0 %v1345
  %1744 = vmatprep.subr.mxu0 0.0
  %1745 = vmatpush2.msra.mxu0 %v1342
  %1746 = vmatprep.subr.mxu0 0.0
  %1747 = vmatpush2.msra.mxu0 %v1339
  %1748 = vmatprep.subr.mxu0 0.0
  %1749 = vmatpush2.msra.mxu0 %v1336
  %1750 = vmatprep.subr.mxu0 0.0
  %1751 = vmatpush2.msra.mxu0 %v1333
  %1752 = vmatprep.subr.mxu0 0.0
  %1753 = vmatpush2.msra.mxu0 %v1330
  %1754 = vmatprep.subr.mxu0 0.0
  %1755 = vmatpush2.msra.mxu0 %v1327
  %1756 = vmatprep.subr.mxu0 0.0
  %1757 = vmatpush2.msra.mxu0 %v1324
  %1758 = vmatprep.subr.mxu0 0.0
  %1759 = vmatpush2.msra.mxu0 %v1321
  %1760 = vmatprep.subr.mxu0 0.0
  %1761 = vmatpush2.msra.mxu0 %v1318
  %1762 = vmatprep.subr.mxu0 0.0
  %1763 = vmatpush2.msra.mxu0 %v1315
  %1764 = vmatprep.subr.mxu0 0.0
  %1765 = vmatpush2.msra.mxu0 %v1312
  %1766 = vmatprep.subr.mxu0 0.0
  %1767 = vmatpush2.msra.mxu0 %v1309
  %1768 = vmatprep.mubr.f32.mxu0 %v1161
  %1769 = vmatmul.mubr.f32.gmra.mxu0 %v1160
  %v1770 = vpop.f32.mrf.mxu0
  %v1771 = vadd.f32 %v1701, %v1770
  %v1772 = vpop.f32.mrf.mxu0
  %1773 = vdwg.mxu0
  %1774 = vmatprep.subr.mxu0 0.0
  %1775 = vmatpush1.msra.mxu0 %v1402
  %1776 = vmatprep.subr.mxu0 0.0
  %1777 = vmatpush1.msra.mxu0 %v1399
  %1778 = vmatprep.subr.mxu0 0.0
  %1779 = vmatpush1.msra.mxu0 %v1396
  %1780 = vmatprep.subr.mxu0 0.0
  %1781 = vmatpush1.msra.mxu0 %v1393
  %1782 = vmatprep.subr.mxu0 0.0
  %1783 = vmatpush1.msra.mxu0 %v1390
  %1784 = vmatprep.subr.mxu0 0.0
  %1785 = vmatpush1.msra.mxu0 %v1387
  %1786 = vmatprep.subr.mxu0 0.0
  %1787 = vmatpush1.msra.mxu0 %v1384
  %1788 = vmatprep.subr.mxu0 0.0
  %1789 = vmatpush1.msra.mxu0 %v1381
  %1790 = vmatprep.subr.mxu0 0.0
  %1791 = vmatpush1.msra.mxu0 %v1378
  %1792 = vmatprep.subr.mxu0 0.0
  %1793 = vmatpush1.msra.mxu0 %v1375
  %1794 = vmatprep.subr.mxu0 0.0
  %1795 = vmatpush1.msra.mxu0 %v1372
  %1796 = vmatprep.subr.mxu0 0.0
  %1797 = vmatpush1.msra.mxu0 %v1369
  %1798 = vmatprep.subr.mxu0 0.0
  %1799 = vmatpush1.msra.mxu0 %v1366
  %1800 = vmatprep.subr.mxu0 0.0
  %1801 = vmatpush1.msra.mxu0 %v1363
  %1802 = vmatprep.subr.mxu0 0.0
  %1803 = vmatpush1.msra.mxu0 %v1360
  %1804 = vmatprep.subr.mxu0 0.0
  %1805 = vmatpush1.msra.mxu0 %v1357
  %1806 = vmatprep.subr.mxu0 0.0
  %1807 = vmatpush2.msra.mxu0 0.0
  %1808 = vmatprep.subr.mxu0 0.0
  %1809 = vmatpush2.msra.mxu0 0.0
  %1810 = vmatprep.subr.mxu0 0.0
  %1811 = vmatpush2.msra.mxu0 0.0
  %1812 = vmatprep.subr.mxu0 0.0
  %1813 = vmatpush2.msra.mxu0 0.0
  %1814 = vmatprep.subr.mxu0 0.0
  %1815 = vmatpush2.msra.mxu0 0.0
  %1816 = vmatprep.subr.mxu0 0.0
  %1817 = vmatpush2.msra.mxu0 0.0
  %1818 = vmatprep.subr.mxu0 0.0
  %1819 = vmatpush2.msra.mxu0 0.0
  %1820 = vmatprep.subr.mxu0 0.0
  %1821 = vmatpush2.msra.mxu0 0.0
  %1822 = vmatprep.subr.mxu0 0.0
  %1823 = vmatpush2.msra.mxu0 0.0
  %1824 = vmatprep.subr.mxu0 0.0
  %1825 = vmatpush2.msra.mxu0 0.0
  %1826 = vmatprep.subr.mxu0 0.0
  %1827 = vmatpush2.msra.mxu0 0.0
  %1828 = vmatprep.subr.mxu0 0.0
  %1829 = vmatpush2.msra.mxu0 0.0
  %1830 = vmatprep.subr.mxu0 0.0
  %1831 = vmatpush2.msra.mxu0 0.0
  %1832 = vmatprep.subr.mxu0 0.0
  %1833 = vmatpush2.msra.mxu0 0.0
  %1834 = vmatprep.subr.mxu0 0.0
  %1835 = vmatpush2.msra.mxu0 0.0
  %1836 = vmatprep.subr.mxu0 0.0
  %1837 = vmatpush2.msra.mxu0 0.0
  %1838 = vmatprep.mubr.f32.mxu0 0.0
  %1839 = vmatmul.mubr.f32.gmra.mxu0 %v1162
  %v1840 = vpop.f32.mrf.mxu0
  %v1841 = vadd.f32 %v1771, %v1840
  %v1842 = vpop.f32.mrf.mxu0
  %1843 = vdwg.mxu0
  %vm1844 = vcmp.ge.f32.partialorder %v1630, 0.0
  %vm1845 = vcmp.ge.f32.partialorder %v1632, 0.0
  %vm1846 = vcmp.ge.f32.partialorder %v1841, 0.0
  %v1847 = vmul.f32 %v1630, 0.1
  %v1848 = vmul.f32 %v1632, 0.1
  %v1849 = vmul.f32 %v1841, 0.1
  %v1850 = vsel %vm1844, %v1630, %v1847
  %v1851 = vsel %vm1845, %v1632, %v1848
  %v1852 = vsel %vm1846, %v1841, %v1849
  %v1853 = vld [vmem:[%s3 + $0x1e8] sm:$0xff]
  %v1854 = vld [vmem:[%s3 + $0x1f0] sm:$0xff]
  %v1855 = vld [vmem:[%s3 + $0x1f8] sm:$0xff]
  %v1856 = vld [vmem:[%s3 + $0x200] sm:$0xff]
  %v1857 = vld [vmem:[%s3 + $0x208] sm:$0xff]
  %v1858 = vld [vmem:[%s3 + $0x210] sm:$0xff]
  %v1859 = vld [vmem:[%s3 + $0x218] sm:$0xff]
  %v1860 = vld [vmem:[%s3 + $0x220] sm:$0xff]
  %v1861 = vld [vmem:[%s3 + $0x228] sm:$0xff]
  %v1862 = vld [vmem:[%s3 + $0x230] sm:$0xff]
  %v1863 = vld [vmem:[%s3 + $0x238] sm:$0xff]
  %v1864 = vld [vmem:[%s3 + $0x240] sm:$0xff]
  %v1865 = vld [vmem:[%s3 + $0x248] sm:$0xff]
  %v1866 = vld [vmem:[%s3 + $0x250] sm:$0xff]
  %v1867 = vld [vmem:[%s3 + $0x258] sm:$0xff]
  %v1868 = vld [vmem:[%s3 + $0x260] sm:$0xff]
  %v1869 = vld [vmem:[%s3 + $0x268] sm:$0xff]
  %v1870 = vld [vmem:[%s3 + $0x270] sm:$0xff]
  %v1871 = vld [vmem:[%s3 + $0x278] sm:$0xff]
  %v1872 = vld [vmem:[%s3 + $0x280] sm:$0xff]
  %v1873 = vld [vmem:[%s3 + $0x288] sm:$0xff]
  %v1874 = vld [vmem:[%s3 + $0x290] sm:$0xff]
  %v1875 = vld [vmem:[%s3 + $0x298] sm:$0xff]
  %v1876 = vld [vmem:[%s3 + $0x2a0] sm:$0xff]
  %v1877 = vld [vmem:[%s3 + $0x2a8] sm:$0xff]
  %v1878 = vld [vmem:[%s3 + $0x2b0] sm:$0xff]
  %v1879 = vld [vmem:[%s3 + $0x2b8] sm:$0xff]
  %v1880 = vld [vmem:[%s3 + $0x2c0] sm:$0xff]
  %v1881 = vld [vmem:[%s3 + $0x2c8] sm:$0xff]
  %v1882 = vld [vmem:[%s3 + $0x2d0] sm:$0xff]
  %v1883 = vld [vmem:[%s3 + $0x2d8] sm:$0xff]
  %v1884 = vld [vmem:[%s3 + $0x2e0] sm:$0xff]
  %v1885 = vld [vmem:[%s3 + $0x2e8] sm:$0xff]
  %v1886 = vld [vmem:[%s3 + $0x2f0] sm:$0xff]
  %v1887 = vld [vmem:[%s3 + $0x2f8] sm:$0xff]
  %v1888 = vld [vmem:[%s3 + $0x300] sm:$0xff]
  %v1889 = vld [vmem:[%s3 + $0x308] sm:$0xff]
  %v1890 = vld [vmem:[%s3 + $0x310] sm:$0xff]
  %v1891 = vld [vmem:[%s3 + $0x318] sm:$0xff]
  %v1892 = vld [vmem:[%s3 + $0x320] sm:$0xff]
  %v1893 = vld [vmem:[%s6 + $0x2a] ss:$0 sm:$0xff]
  %v1895 = vsel %vm723, %v1852, 0
  %1897 = vmatprep.subr.mxu0 0.0
  %1898 = vmatpush1.msra.mxu0 %v1868
  %1899 = vmatprep.subr.mxu0 0.0
  %1900 = vmatpush1.msra.mxu0 %v1867
  %1901 = vmatprep.subr.mxu0 0.0
  %1902 = vmatpush1.msra.mxu0 %v1866
  %1903 = vmatprep.subr.mxu0 0.0
  %1904 = vmatpush1.msra.mxu0 %v1865
  %1905 = vmatprep.subr.mxu0 0.0
  %1906 = vmatpush1.msra.mxu0 %v1864
  %1907 = vmatprep.subr.mxu0 0.0
  %1908 = vmatpush1.msra.mxu0 %v1863
  %1909 = vmatprep.subr.mxu0 0.0
  %1910 = vmatpush1.msra.mxu0 %v1862
  %1911 = vmatprep.subr.mxu0 0.0
  %1912 = vmatpush1.msra.mxu0 %v1861
  %1913 = vmatprep.subr.mxu0 0.0
  %1914 = vmatpush1.msra.mxu0 %v1860
  %1915 = vmatprep.subr.mxu0 0.0
  %1916 = vmatpush1.msra.mxu0 %v1859
  %1917 = vmatprep.subr.mxu0 0.0
  %1918 = vmatpush1.msra.mxu0 %v1858
  %1919 = vmatprep.subr.mxu0 0.0
  %1920 = vmatpush1.msra.mxu0 %v1857
  %1921 = vmatprep.subr.mxu0 0.0
  %1922 = vmatpush1.msra.mxu0 %v1856
  %1923 = vmatprep.subr.mxu0 0.0
  %1924 = vmatpush1.msra.mxu0 %v1855
  %1925 = vmatprep.subr.mxu0 0.0
  %1926 = vmatpush1.msra.mxu0 %v1854
  %1927 = vmatprep.subr.mxu0 0.0
  %1928 = vmatpush1.msra.mxu0 %v1853
  %1929 = vmatprep.subr.mxu0 0.0
  %1930 = vmatpush2.msra.mxu0 %v1884
  %1931 = vmatprep.subr.mxu0 0.0
  %1932 = vmatpush2.msra.mxu0 %v1883
  %1933 = vmatprep.subr.mxu0 0.0
  %1934 = vmatpush2.msra.mxu0 %v1882
  %1935 = vmatprep.subr.mxu0 0.0
  %1936 = vmatpush2.msra.mxu0 %v1881
  %1937 = vmatprep.subr.mxu0 0.0
  %1938 = vmatpush2.msra.mxu0 %v1880
  %1939 = vmatprep.subr.mxu0 0.0
  %1940 = vmatpush2.msra.mxu0 %v1879
  %1941 = vmatprep.subr.mxu0 0.0
  %1942 = vmatpush2.msra.mxu0 %v1878
  %1943 = vmatprep.subr.mxu0 0.0
  %1944 = vmatpush2.msra.mxu0 %v1877
  %1945 = vmatprep.subr.mxu0 0.0
  %1946 = vmatpush2.msra.mxu0 %v1876
  %1947 = vmatprep.subr.mxu0 0.0
  %1948 = vmatpush2.msra.mxu0 %v1875
  %1949 = vmatprep.subr.mxu0 0.0
  %1950 = vmatpush2.msra.mxu0 %v1874
  %1951 = vmatprep.subr.mxu0 0.0
  %1952 = vmatpush2.msra.mxu0 %v1873
  %1953 = vmatprep.subr.mxu0 0.0
  %1954 = vmatpush2.msra.mxu0 %v1872
  %1955 = vmatprep.subr.mxu0 0.0
  %1956 = vmatpush2.msra.mxu0 %v1871
  %1957 = vmatprep.subr.mxu0 0.0
  %1958 = vmatpush2.msra.mxu0 %v1870
  %1959 = vmatprep.subr.mxu0 0.0
  %1960 = vmatpush2.msra.mxu0 %v1869
  %1961 = vmatprep.mubr.f32.mxu0 %v1851
  %1962 = vmatmul.mubr.f32.gmra.mxu0 %v1850
  %v1963 = vpop.f32.mrf.mxu0
  %v1964 = vadd.f32 %v1893, %v1963
  %v1965 = vpop.f32.mrf.mxu0
  %1966 = vdwg.mxu0
  %1967 = vmatprep.subr.mxu0 0.0
  %1968 = vmatpush1.msra.mxu0 0.0
  %1969 = vmatprep.subr.mxu0 0.0
  %1970 = vmatpush1.msra.mxu0 0.0
  %1971 = vmatprep.subr.mxu0 0.0
  %1972 = vmatpush1.msra.mxu0 0.0
  %1973 = vmatprep.subr.mxu0 0.0
  %1974 = vmatpush1.msra.mxu0 0.0
  %1975 = vmatprep.subr.mxu0 0.0
  %1976 = vmatpush1.msra.mxu0 0.0
  %1977 = vmatprep.subr.mxu0 0.0
  %1978 = vmatpush1.msra.mxu0 0.0
  %1979 = vmatprep.subr.mxu0 0.0
  %1980 = vmatpush1.msra.mxu0 0.0
  %1981 = vmatprep.subr.mxu0 0.0
  %1982 = vmatpush1.msra.mxu0 0.0
  %1983 = vmatprep.subr.mxu0 0.0
  %1984 = vmatpush1.msra.mxu0 %v1892
  %1985 = vmatprep.subr.mxu0 0.0
  %1986 = vmatpush1.msra.mxu0 %v1891
  %1987 = vmatprep.subr.mxu0 0.0
  %1988 = vmatpush1.msra.mxu0 %v1890
  %1989 = vmatprep.subr.mxu0 0.0
  %1990 = vmatpush1.msra.mxu0 %v1889
  %1991 = vmatprep.subr.mxu0 0.0
  %1992 = vmatpush1.msra.mxu0 %v1888
  %1993 = vmatprep.subr.mxu0 0.0
  %1994 = vmatpush1.msra.mxu0 %v1887
  %1995 = vmatprep.subr.mxu0 0.0
  %1996 = vmatpush1.msra.mxu0 %v1886
  %1997 = vmatprep.subr.mxu0 0.0
  %1998 = vmatpush1.msra.mxu0 %v1885
  %1999 = vmatprep.subr.mxu0 0.0
  %2000 = vmatpush2.msra.mxu0 0.0
  %2001 = vmatprep.subr.mxu0 0.0
  %2002 = vmatpush2.msra.mxu0 0.0
  %2003 = vmatprep.subr.mxu0 0.0
  %2004 = vmatpush2.msra.mxu0 0.0
  %2005 = vmatprep.subr.mxu0 0.0
  %2006 = vmatpush2.msra.mxu0 0.0
  %2007 = vmatprep.subr.mxu0 0.0
  %2008 = vmatpush2.msra.mxu0 0.0
  %2009 = vmatprep.subr.mxu0 0.0
  %2010 = vmatpush2.msra.mxu0 0.0
  %2011 = vmatprep.subr.mxu0 0.0
  %2012 = vmatpush2.msra.mxu0 0.0
  %2013 = vmatprep.subr.mxu0 0.0
  %2014 = vmatpush2.msra.mxu0 0.0
  %2015 = vmatprep.subr.mxu0 0.0
  %2016 = vmatpush2.msra.mxu0 0.0
  %2017 = vmatprep.subr.mxu0 0.0
  %2018 = vmatpush2.msra.mxu0 0.0
  %2019 = vmatprep.subr.mxu0 0.0
  %2020 = vmatpush2.msra.mxu0 0.0
  %2021 = vmatprep.subr.mxu0 0.0
  %2022 = vmatpush2.msra.mxu0 0.0
  %2023 = vmatprep.subr.mxu0 0.0
  %2024 = vmatpush2.msra.mxu0 0.0
  %2025 = vmatprep.subr.mxu0 0.0
  %2026 = vmatpush2.msra.mxu0 0.0
  %2027 = vmatprep.subr.mxu0 0.0
  %2028 = vmatpush2.msra.mxu0 0.0
  %2029 = vmatprep.subr.mxu0 0.0
  %2030 = vmatpush2.msra.mxu0 0.0
  %2031 = vmatprep.mubr.f32.mxu0 0.0
  %2032 = vmatmul.mubr.f32.gmra.mxu0 %v1895
  %v2033 = vpop.f32.mrf.mxu0
  %v2034 = vadd.f32 %v1964, %v2033
  %v2035 = vpop.f32.mrf.mxu0
  %2036 = vdwg.mxu0
  %vm2037 = vcmp.ge.f32.partialorder %v2034, 0.0
  %v2038 = vmul.f32 %v2034, 0.1
  %v2039 = vsel %vm2037, %v2034, %v2038
  %v2040 = vld [vmem:[%s3 + $0x328] sm:$0xff]
  %v2041 = vld [vmem:[%s3 + $0x330] sm:$0xff]
  %v2042 = vld [vmem:[%s3 + $0x338] sm:$0xff]
  %v2043 = vld [vmem:[%s3 + $0x340] sm:$0xff]
  %v2044 = vld [vmem:[%s3 + $0x348] sm:$0xff]
  %v2045 = vld [vmem:[%s3 + $0x350] sm:$0xff]
  %v2046 = vld [vmem:[%s3 + $0x358] sm:$0xff]
  %v2047 = vld [vmem:[%s3 + $0x360] sm:$0xff]
  %v2048 = vld [vmem:[%s3 + $0x368] sm:$0xff]
  %v2049 = vld [vmem:[%s3 + $0x370] sm:$0xff]
  %v2050 = vld [vmem:[%s6 + $0x2b] ss:$0 sm:$0xff]
  %v2052 = vsel %vm55, %v2039, 0
  %2054 = vmatprep.subr.mxu0 0.0
  %2055 = vmatpush1.msra.mxu0 0.0
  %2056 = vmatprep.subr.mxu0 0.0
  %2057 = vmatpush1.msra.mxu0 0.0
  %2058 = vmatprep.subr.mxu0 0.0
  %2059 = vmatpush1.msra.mxu0 0.0
  %2060 = vmatprep.subr.mxu0 0.0
  %2061 = vmatpush1.msra.mxu0 0.0
  %2062 = vmatprep.subr.mxu0 0.0
  %2063 = vmatpush1.msra.mxu0 0.0
  %2064 = vmatprep.subr.mxu0 0.0
  %2065 = vmatpush1.msra.mxu0 0.0
  %2066 = vmatprep.subr.mxu0 0.0
  %2067 = vmatpush1.msra.mxu0 %v2049
  %2068 = vmatprep.subr.mxu0 0.0
  %2069 = vmatpush1.msra.mxu0 %v2048
  %2070 = vmatprep.subr.mxu0 0.0
  %2071 = vmatpush1.msra.mxu0 %v2047
  %2072 = vmatprep.subr.mxu0 0.0
  %2073 = vmatpush1.msra.mxu0 %v2046
  %2074 = vmatprep.subr.mxu0 0.0
  %2075 = vmatpush1.msra.mxu0 %v2045
  %2076 = vmatprep.subr.mxu0 0.0
  %2077 = vmatpush1.msra.mxu0 %v2044
  %2078 = vmatprep.subr.mxu0 0.0
  %2079 = vmatpush1.msra.mxu0 %v2043
  %2080 = vmatprep.subr.mxu0 0.0
  %2081 = vmatpush1.msra.mxu0 %v2042
  %2082 = vmatprep.subr.mxu0 0.0
  %2083 = vmatpush1.msra.mxu0 %v2041
  %2084 = vmatprep.subr.mxu0 0.0
  %2085 = vmatpush1.msra.mxu0 %v2040
  %2086 = vmatprep.subr.mxu0 0.0
  %2087 = vmatpush2.msra.mxu0 0.0
  %2088 = vmatprep.subr.mxu0 0.0
  %2089 = vmatpush2.msra.mxu0 0.0
  %2090 = vmatprep.subr.mxu0 0.0
  %2091 = vmatpush2.msra.mxu0 0.0
  %2092 = vmatprep.subr.mxu0 0.0
  %2093 = vmatpush2.msra.mxu0 0.0
  %2094 = vmatprep.subr.mxu0 0.0
  %2095 = vmatpush2.msra.mxu0 0.0
  %2096 = vmatprep.subr.mxu0 0.0
  %2097 = vmatpush2.msra.mxu0 0.0
  %2098 = vmatprep.subr.mxu0 0.0
  %2099 = vmatpush2.msra.mxu0 0.0
  %2100 = vmatprep.subr.mxu0 0.0
  %2101 = vmatpush2.msra.mxu0 0.0
  %2102 = vmatprep.subr.mxu0 0.0
  %2103 = vmatpush2.msra.mxu0 0.0
  %2104 = vmatprep.subr.mxu0 0.0
  %2105 = vmatpush2.msra.mxu0 0.0
  %2106 = vmatprep.subr.mxu0 0.0
  %2107 = vmatpush2.msra.mxu0 0.0
  %2108 = vmatprep.subr.mxu0 0.0
  %2109 = vmatpush2.msra.mxu0 0.0
  %2110 = vmatprep.subr.mxu0 0.0
  %2111 = vmatpush2.msra.mxu0 0.0
  %2112 = vmatprep.subr.mxu0 0.0
  %2113 = vmatpush2.msra.mxu0 0.0
  %2114 = vmatprep.subr.mxu0 0.0
  %2115 = vmatpush2.msra.mxu0 0.0
  %2116 = vmatprep.subr.mxu0 0.0
  %2117 = vmatpush2.msra.mxu0 0.0
  %2118 = vmatprep.mubr.f32.mxu0 0.0
  %2119 = vmatmul.mubr.f32.gmra.mxu0 %v2052
  %v2120 = vpop.f32.mrf.mxu0
  %v2121 = vadd.f32 %v2050, %v2120
  %v2122 = vpop.f32.mrf.mxu0
  %2123 = vdwg.mxu0
  %vm2124 = vcmp.ge.f32.partialorder %v2121, 0.0
  %v2125 = vmul.f32 %v2121, 0.01
  %v2126 = vsel %vm2124, %v2121, %v2125
  %v2127 = vld [vmem:[%s3 + $0x378] sm:$0xff]
  %v2128 = vld [vmem:[%s3 + $0x380] sm:$0xff]
  %v2129 = vld [vmem:[%s6 + $0x2c] ss:$0 sm:$0xff]
  %v2131 = vsel %vm860, %v2126, 0
  %2133 = vmatprep.subr.mxu0 0.0
  %2134 = vmatpush1.msra.mxu0 0.0
  %2135 = vmatprep.subr.mxu0 0.0
  %2136 = vmatpush1.msra.mxu0 0.0
  %2137 = vmatprep.subr.mxu0 0.0
  %2138 = vmatpush1.msra.mxu0 0.0
  %2139 = vmatprep.subr.mxu0 0.0
  %2140 = vmatpush1.msra.mxu0 0.0
  %2141 = vmatprep.subr.mxu0 0.0
  %2142 = vmatpush1.msra.mxu0 0.0
  %2143 = vmatprep.subr.mxu0 0.0
  %2144 = vmatpush1.msra.mxu0 0.0
  %2145 = vmatprep.subr.mxu0 0.0
  %2146 = vmatpush1.msra.mxu0 0.0
  %2147 = vmatprep.subr.mxu0 0.0
  %2148 = vmatpush1.msra.mxu0 0.0
  %2149 = vmatprep.subr.mxu0 0.0
  %2150 = vmatpush1.msra.mxu0 0.0
  %2151 = vmatprep.subr.mxu0 0.0
  %2152 = vmatpush1.msra.mxu0 0.0
  %2153 = vmatprep.subr.mxu0 0.0
  %2154 = vmatpush1.msra.mxu0 0.0
  %2155 = vmatprep.subr.mxu0 0.0
  %2156 = vmatpush1.msra.mxu0 0.0
  %2157 = vmatprep.subr.mxu0 0.0
  %2158 = vmatpush1.msra.mxu0 0.0
  %2159 = vmatprep.subr.mxu0 0.0
  %2160 = vmatpush1.msra.mxu0 0.0
  %2161 = vmatprep.subr.mxu0 0.0
  %2162 = vmatpush1.msra.mxu0 %v2128
  %2163 = vmatprep.subr.mxu0 0.0
  %2164 = vmatpush1.msra.mxu0 %v2127
  %2165 = vmatprep.subr.mxu0 0.0
  %2166 = vmatpush2.msra.mxu0 0.0
  %2167 = vmatprep.subr.mxu0 0.0
  %2168 = vmatpush2.msra.mxu0 0.0
  %2169 = vmatprep.subr.mxu0 0.0
  %2170 = vmatpush2.msra.mxu0 0.0
  %2171 = vmatprep.subr.mxu0 0.0
  %2172 = vmatpush2.msra.mxu0 0.0
  %2173 = vmatprep.subr.mxu0 0.0
  %2174 = vmatpush2.msra.mxu0 0.0
  %2175 = vmatprep.subr.mxu0 0.0
  %2176 = vmatpush2.msra.mxu0 0.0
  %2177 = vmatprep.subr.mxu0 0.0
  %2178 = vmatpush2.msra.mxu0 0.0
  %2179 = vmatprep.subr.mxu0 0.0
  %2180 = vmatpush2.msra.mxu0 0.0
  %2181 = vmatprep.subr.mxu0 0.0
  %2182 = vmatpush2.msra.mxu0 0.0
  %2183 = vmatprep.subr.mxu0 0.0
  %2184 = vmatpush2.msra.mxu0 0.0
  %2185 = vmatprep.subr.mxu0 0.0
  %2186 = vmatpush2.msra.mxu0 0.0
  %2187 = vmatprep.subr.mxu0 0.0
  %2188 = vmatpush2.msra.mxu0 0.0
  %2189 = vmatprep.subr.mxu0 0.0
  %2190 = vmatpush2.msra.mxu0 0.0
  %2191 = vmatprep.subr.mxu0 0.0
  %2192 = vmatpush2.msra.mxu0 0.0
  %2193 = vmatprep.subr.mxu0 0.0
  %2194 = vmatpush2.msra.mxu0 0.0
  %2195 = vmatprep.subr.mxu0 0.0
  %2196 = vmatpush2.msra.mxu0 0.0
  %2197 = vmatprep.mubr.f32.mxu0 0.0
  %2198 = vmatmul.mubr.f32.gmra.mxu0 %v2131
  %v2199 = vpop.f32.mrf.mxu0
  %v2200 = vadd.f32 %v2129, %v2199
  %v2201 = vpop.f32.mrf.mxu0
  %2202 = vdwg.mxu0
  %v2203 = vld [vmem:[%s3 + $0x388] sm:$0xff]
  %v2204 = vld [vmem:[%s6 + $0x2d] ss:$0 sm:$0xff]
  %vm2205 = vcmask 64512
  %v2207 = vsel %vm2205, %v2200, 0
  %2209 = vmatprep.subr.mxu0 0.0
  %2210 = vmatpush1.msra.mxu0 0.0
  %2211 = vmatprep.subr.mxu0 0.0
  %2212 = vmatpush1.msra.mxu0 0.0
  %2213 = vmatprep.subr.mxu0 0.0
  %2214 = vmatpush1.msra.mxu0 0.0
  %2215 = vmatprep.subr.mxu0 0.0
  %2216 = vmatpush1.msra.mxu0 0.0
  %2217 = vmatprep.subr.mxu0 0.0
  %2218 = vmatpush1.msra.mxu0 0.0
  %2219 = vmatprep.subr.mxu0 0.0
  %2220 = vmatpush1.msra.mxu0 0.0
  %2221 = vmatprep.subr.mxu0 0.0
  %2222 = vmatpush1.msra.mxu0 0.0
  %2223 = vmatprep.subr.mxu0 0.0
  %2224 = vmatpush1.msra.mxu0 0.0
  %2225 = vmatprep.subr.mxu0 0.0
  %2226 = vmatpush1.msra.mxu0 0.0
  %2227 = vmatprep.subr.mxu0 0.0
  %2228 = vmatpush1.msra.mxu0 0.0
  %2229 = vmatprep.subr.mxu0 0.0
  %2230 = vmatpush1.msra.mxu0 0.0
  %2231 = vmatprep.subr.mxu0 0.0
  %2232 = vmatpush1.msra.mxu0 0.0
  %2233 = vmatprep.subr.mxu0 0.0
  %2234 = vmatpush1.msra.mxu0 0.0
  %2235 = vmatprep.subr.mxu0 0.0
  %2236 = vmatpush1.msra.mxu0 0.0
  %2237 = vmatprep.subr.mxu0 0.0
  %2238 = vmatpush1.msra.mxu0 0.0
  %2239 = vmatprep.subr.mxu0 0.0
  %2240 = vmatpush1.msra.mxu0 %v2203
  %2241 = vmatprep.subr.mxu0 0.0
  %2242 = vmatpush2.msra.mxu0 0.0
  %2243 = vmatprep.subr.mxu0 0.0
  %2244 = vmatpush2.msra.mxu0 0.0
  %2245 = vmatprep.subr.mxu0 0.0
  %2246 = vmatpush2.msra.mxu0 0.0
  %2247 = vmatprep.subr.mxu0 0.0
  %2248 = vmatpush2.msra.mxu0 0.0
  %2249 = vmatprep.subr.mxu0 0.0
  %2250 = vmatpush2.msra.mxu0 0.0
  %2251 = vmatprep.subr.mxu0 0.0
  %2252 = vmatpush2.msra.mxu0 0.0
  %2253 = vmatprep.subr.mxu0 0.0
  %2254 = vmatpush2.msra.mxu0 0.0
  %2255 = vmatprep.subr.mxu0 0.0
  %2256 = vmatpush2.msra.mxu0 0.0
  %2257 = vmatprep.subr.mxu0 0.0
  %2258 = vmatpush2.msra.mxu0 0.0
  %2259 = vmatprep.subr.mxu0 0.0
  %2260 = vmatpush2.msra.mxu0 0.0
  %2261 = vmatprep.subr.mxu0 0.0
  %2262 = vmatpush2.msra.mxu0 0.0
  %2263 = vmatprep.subr.mxu0 0.0
  %2264 = vmatpush2.msra.mxu0 0.0
  %2265 = vmatprep.subr.mxu0 0.0
  %2266 = vmatpush2.msra.mxu0 0.0
  %2267 = vmatprep.subr.mxu0 0.0
  %2268 = vmatpush2.msra.mxu0 0.0
  %2269 = vmatprep.subr.mxu0 0.0
  %2270 = vmatpush2.msra.mxu0 0.0
  %2271 = vmatprep.subr.mxu0 0.0
  %2272 = vmatpush2.msra.mxu0 0.0
  %2273 = vmatprep.mubr.f32.mxu0 0.0
  %2274 = vmatmul.mubr.f32.gmra.mxu0 %v2207
  %v2275 = vpop.f32.mrf.mxu0
  %v2276 = vadd.f32 %v2204, %v2275
  %v2277 = vpop.f32.mrf.mxu0
  %2278 = vdwg.mxu0
  %vm2279 = vcmp.ge.f32.partialorder %v2276, 0.0
  %v2280 = vmul.f32 %v2276, 0.01
  %v2281 = vsel %vm2279, %v2276, %v2280
  %v2282 = vld [vmem:[%s3 + $0x390] sm:$0xff]
  %v2283 = vld [vmem:[%s3 + $0x398] sm:$0xff]
  %v2284 = vld [vmem:[%s6 + $0x2e] ss:$0 sm:$0xff]
  %v2286 = vsel %vm860, %v2281, 0
  %2288 = vmatprep.subr.mxu0 0.0
  %2289 = vmatpush1.msra.mxu0 0.0
  %2290 = vmatprep.subr.mxu0 0.0
  %2291 = vmatpush1.msra.mxu0 0.0
  %2292 = vmatprep.subr.mxu0 0.0
  %2293 = vmatpush1.msra.mxu0 0.0
  %2294 = vmatprep.subr.mxu0 0.0
  %2295 = vmatpush1.msra.mxu0 0.0
  %2296 = vmatprep.subr.mxu0 0.0
  %2297 = vmatpush1.msra.mxu0 0.0
  %2298 = vmatprep.subr.mxu0 0.0
  %2299 = vmatpush1.msra.mxu0 0.0
  %2300 = vmatprep.subr.mxu0 0.0
  %2301 = vmatpush1.msra.mxu0 0.0
  %2302 = vmatprep.subr.mxu0 0.0
  %2303 = vmatpush1.msra.mxu0 0.0
  %2304 = vmatprep.subr.mxu0 0.0
  %2305 = vmatpush1.msra.mxu0 0.0
  %2306 = vmatprep.subr.mxu0 0.0
  %2307 = vmatpush1.msra.mxu0 0.0
  %2308 = vmatprep.subr.mxu0 0.0
  %2309 = vmatpush1.msra.mxu0 0.0
  %2310 = vmatprep.subr.mxu0 0.0
  %2311 = vmatpush1.msra.mxu0 0.0
  %2312 = vmatprep.subr.mxu0 0.0
  %2313 = vmatpush1.msra.mxu0 0.0
  %2314 = vmatprep.subr.mxu0 0.0
  %2315 = vmatpush1.msra.mxu0 0.0
  %2316 = vmatprep.subr.mxu0 0.0
  %2317 = vmatpush1.msra.mxu0 %v2283
  %2318 = vmatprep.subr.mxu0 0.0
  %2319 = vmatpush1.msra.mxu0 %v2282
  %2320 = vmatprep.subr.mxu0 0.0
  %2321 = vmatpush2.msra.mxu0 0.0
  %2322 = vmatprep.subr.mxu0 0.0
  %2323 = vmatpush2.msra.mxu0 0.0
  %2324 = vmatprep.subr.mxu0 0.0
  %2325 = vmatpush2.msra.mxu0 0.0
  %2326 = vmatprep.subr.mxu0 0.0
  %2327 = vmatpush2.msra.mxu0 0.0
  %2328 = vmatprep.subr.mxu0 0.0
  %2329 = vmatpush2.msra.mxu0 0.0
  %2330 = vmatprep.subr.mxu0 0.0
  %2331 = vmatpush2.msra.mxu0 0.0
  %2332 = vmatprep.subr.mxu0 0.0
  %2333 = vmatpush2.msra.mxu0 0.0
  %2334 = vmatprep.subr.mxu0 0.0
  %2335 = vmatpush2.msra.mxu0 0.0
  %2336 = vmatprep.subr.mxu0 0.0
  %2337 = vmatpush2.msra.mxu0 0.0
  %2338 = vmatprep.subr.mxu0 0.0
  %2339 = vmatpush2.msra.mxu0 0.0
  %2340 = vmatprep.subr.mxu0 0.0
  %2341 = vmatpush2.msra.mxu0 0.0
  %2342 = vmatprep.subr.mxu0 0.0
  %2343 = vmatpush2.msra.mxu0 0.0
  %2344 = vmatprep.subr.mxu0 0.0
  %2345 = vmatpush2.msra.mxu0 0.0
  %2346 = vmatprep.subr.mxu0 0.0
  %2347 = vmatpush2.msra.mxu0 0.0
  %2348 = vmatprep.subr.mxu0 0.0
  %2349 = vmatpush2.msra.mxu0 0.0
  %2350 = vmatprep.subr.mxu0 0.0
  %2351 = vmatpush2.msra.mxu0 0.0
  %2352 = vmatprep.mubr.f32.mxu0 0.0
  %2353 = vmatmul.mubr.f32.gmra.mxu0 %v2286
  %v2354 = vpop.f32.mrf.mxu0
  %v2355 = vadd.f32 %v2284, %v2354
  %v2356 = vpop.f32.mrf.mxu0
  %2357 = vdwg.mxu0
  %vm2358 = vcmp.ge.f32.partialorder %v2355, 0.0
  %v2359 = vmul.f32 %v2355, 0.01
  %v2360 = vsel %vm2358, %v2355, %v2359
  %v2361 = vld [vmem:[%s4 + $0x180] sm:$0xff]
  %v2362 = vld [vmem:[%s4 + $0x188] sm:$0xff]
  %v2363 = vld [vmem:[%s4 + $0x190] sm:$0xff]
  %v2364 = vld [vmem:[%s4 + $0x198] sm:$0xff]
  %v2365 = vld [vmem:[%s4 + $0x1a0] sm:$0xff]
  %v2366 = vld [vmem:[%s4 + $0x1a8] sm:$0xff]
  %v2367 = vld [vmem:[%s4 + $0x1b0] sm:$0xff]
  %v2368 = vld [vmem:[%s4 + $0x1b8] sm:$0xff]
  %v2369 = vld [vmem:[%s4 + $0x1c0] sm:$0xff]
  %v2370 = vld [vmem:[%s4 + $0x1c8] sm:$0xff]
  %v2371 = vld [vmem:[%s4 + $0x1d0] sm:$0xff]
  %v2372 = vld [vmem:[%s4 + $0x1d8] sm:$0xff]
  %v2373 = vld [vmem:[%s4 + $0x1e0] sm:$0xff]
  %v2374 = vld [vmem:[%s4 + $0x1e8] sm:$0xff]
  %v2375 = vld [vmem:[%s4 + $0x1f0] sm:$0xff]
  %v2376 = vld [vmem:[%s4 + $0x1f8] sm:$0xff]
  %v2377 = vld [vmem:[%s4 + $0x200] sm:$0xff]
  %v2378 = vld [vmem:[%s4 + $0x208] sm:$0xff]
  %v2379 = vld [vmem:[%s4 + $0x210] sm:$0xff]
  %v2380 = vld [vmem:[%s4 + $0x218] sm:$0xff]
  %v2381 = vld [vmem:[%s4 + $0x220] sm:$0xff]
  %v2382 = vld [vmem:[%s4 + $0x228] sm:$0xff]
  %v2383 = vld [vmem:[%s4 + $0x230] sm:$0xff]
  %v2384 = vld [vmem:[%s4 + $0x238] sm:$0xff]
  %v2385 = vld [vmem:[%s4 + $0x240] sm:$0xff]
  %v2386 = vld [vmem:[%s4 + $0x248] sm:$0xff]
  %v2387 = vld [vmem:[%s4 + $0x250] sm:$0xff]
  %v2388 = vld [vmem:[%s4 + $0x258] sm:$0xff]
  %v2389 = vld [vmem:[%s4 + $0x260] sm:$0xff]
  %v2390 = vld [vmem:[%s4 + $0x268] sm:$0xff]
  %s2391 = scalar_lea.vmem %s6, 47
  %v2392 = vld [vmem:[%s2391] ss:$8 sm:$0x7]
  %v2394 = vlaneseq
  %v2395 = vshrl.u32 %v2394, 7
  %v2396 = vsub.s32 0, %v2395
  %v2397 = vrot.slane %v2392, %v2396
  %v2398 = vlaneseq
  %v2399 = vshrl.u32 %v2398, 7
  %v2400 = vsub.s32 1, %v2399
  %v2401 = vrot.slane %v2392, %v2400
  %v2402 = vlaneseq
  %v2403 = vshrl.u32 %v2402, 7
  %v2404 = vsub.s32 2, %v2403
  %v2405 = vrot.slane %v2392, %v2404
  %v2410 = vsel %vm55, %v2360, 0
  %2412 = vmatprep.subr.mxu0 0.0
  %2413 = vmatpush1.msra.mxu0 0.0
  %2414 = vmatprep.subr.mxu0 0.0
  %2415 = vmatpush1.msra.mxu0 0.0
  %2416 = vmatprep.subr.mxu0 0.0
  %2417 = vmatpush1.msra.mxu0 0.0
  %2418 = vmatprep.subr.mxu0 0.0
  %2419 = vmatpush1.msra.mxu0 0.0
  %2420 = vmatprep.subr.mxu0 0.0
  %2421 = vmatpush1.msra.mxu0 0.0
  %2422 = vmatprep.subr.mxu0 0.0
  %2423 = vmatpush1.msra.mxu0 0.0
  %2424 = vmatprep.subr.mxu0 %v2389
  %2425 = vmatpush1.msra.mxu0 %v2388
  %2426 = vmatprep.subr.mxu0 %v2386
  %2427 = vmatpush1.msra.mxu0 %v2385
  %2428 = vmatprep.subr.mxu0 %v2383
  %2429 = vmatpush1.msra.mxu0 %v2382
  %2430 = vmatprep.subr.mxu0 %v2380
  %2431 = vmatpush1.msra.mxu0 %v2379
  %2432 = vmatprep.subr.mxu0 %v2377
  %2433 = vmatpush1.msra.mxu0 %v2376
  %2434 = vmatprep.subr.mxu0 %v2374
  %2435 = vmatpush1.msra.mxu0 %v2373
  %2436 = vmatprep.subr.mxu0 %v2371
  %2437 = vmatpush1.msra.mxu0 %v2370
  %2438 = vmatprep.subr.mxu0 %v2368
  %2439 = vmatpush1.msra.mxu0 %v2367
  %2440 = vmatprep.subr.mxu0 %v2365
  %2441 = vmatpush1.msra.mxu0 %v2364
  %2442 = vmatprep.subr.mxu0 %v2362
  %2443 = vmatpush1.msra.mxu0 %v2361
  %2444 = vmatprep.subr.mxu0 0.0
  %2445 = vmatpush2.msra.mxu0 0.0
  %2446 = vmatprep.subr.mxu0 0.0
  %2447 = vmatpush2.msra.mxu0 0.0
  %2448 = vmatprep.subr.mxu0 0.0
  %2449 = vmatpush2.msra.mxu0 0.0
  %2450 = vmatprep.subr.mxu0 0.0
  %2451 = vmatpush2.msra.mxu0 0.0
  %2452 = vmatprep.subr.mxu0 0.0
  %2453 = vmatpush2.msra.mxu0 0.0
  %2454 = vmatprep.subr.mxu0 0.0
  %2455 = vmatpush2.msra.mxu0 0.0
  %2456 = vmatprep.subr.mxu0 0.0
  %2457 = vmatpush2.msra.mxu0 0.0
  %2458 = vmatprep.subr.mxu0 0.0
  %2459 = vmatpush2.msra.mxu0 0.0
  %2460 = vmatprep.subr.mxu0 0.0
  %2461 = vmatpush2.msra.mxu0 0.0
  %2462 = vmatprep.subr.mxu0 0.0
  %2463 = vmatpush2.msra.mxu0 0.0
  %2464 = vmatprep.subr.mxu0 0.0
  %2465 = vmatpush2.msra.mxu0 0.0
  %2466 = vmatprep.subr.mxu0 0.0
  %2467 = vmatpush2.msra.mxu0 0.0
  %2468 = vmatprep.subr.mxu0 0.0
  %2469 = vmatpush2.msra.mxu0 0.0
  %2470 = vmatprep.subr.mxu0 0.0
  %2471 = vmatpush2.msra.mxu0 0.0
  %2472 = vmatprep.subr.mxu0 0.0
  %2473 = vmatpush2.msra.mxu0 0.0
  %2474 = vmatprep.subr.mxu0 0.0
  %2475 = vmatpush2.msra.mxu0 0.0
  %2476 = vmatprep.mubr.f32.mxu0 0.0
  %2477 = vmatmul.mubr.f32.gmra.mxu0 %v2410
  %v2478 = vpop.f32.mrf.mxu0
  %v2479 = vadd.f32 %v2397, %v2478
  %v2480 = vpop.f32.mrf.mxu0
  %v2481 = vadd.f32 %v2401, %v2480
  %2482 = vdwg.mxu0
  %2483 = vmatprep.subr.mxu0 0.0
  %2484 = vmatpush1.msra.mxu0 0.0
  %2485 = vmatprep.subr.mxu0 0.0
  %2486 = vmatpush1.msra.mxu0 0.0
  %2487 = vmatprep.subr.mxu0 0.0
  %2488 = vmatpush1.msra.mxu0 0.0
  %2489 = vmatprep.subr.mxu0 0.0
  %2490 = vmatpush1.msra.mxu0 0.0
  %2491 = vmatprep.subr.mxu0 0.0
  %2492 = vmatpush1.msra.mxu0 0.0
  %2493 = vmatprep.subr.mxu0 0.0
  %2494 = vmatpush1.msra.mxu0 0.0
  %2495 = vmatprep.subr.mxu0 0.0
  %2496 = vmatpush1.msra.mxu0 %v2390
  %2497 = vmatprep.subr.mxu0 0.0
  %2498 = vmatpush1.msra.mxu0 %v2387
  %2499 = vmatprep.subr.mxu0 0.0
  %2500 = vmatpush1.msra.mxu0 %v2384
  %2501 = vmatprep.subr.mxu0 0.0
  %2502 = vmatpush1.msra.mxu0 %v2381
  %2503 = vmatprep.subr.mxu0 0.0
  %2504 = vmatpush1.msra.mxu0 %v2378
  %2505 = vmatprep.subr.mxu0 0.0
  %2506 = vmatpush1.msra.mxu0 %v2375
  %2507 = vmatprep.subr.mxu0 0.0
  %2508 = vmatpush1.msra.mxu0 %v2372
  %2509 = vmatprep.subr.mxu0 0.0
  %2510 = vmatpush1.msra.mxu0 %v2369
  %2511 = vmatprep.subr.mxu0 0.0
  %2512 = vmatpush1.msra.mxu0 %v2366
  %2513 = vmatprep.subr.mxu0 0.0
  %2514 = vmatpush1.msra.mxu0 %v2363
  %2515 = vmatprep.subr.mxu0 0.0
  %2516 = vmatpush2.msra.mxu0 0.0
  %2517 = vmatprep.subr.mxu0 0.0
  %2518 = vmatpush2.msra.mxu0 0.0
  %2519 = vmatprep.subr.mxu0 0.0
  %2520 = vmatpush2.msra.mxu0 0.0
  %2521 = vmatprep.subr.mxu0 0.0
  %2522 = vmatpush2.msra.mxu0 0.0
  %2523 = vmatprep.subr.mxu0 0.0
  %2524 = vmatpush2.msra.mxu0 0.0
  %2525 = vmatprep.subr.mxu0 0.0
  %2526 = vmatpush2.msra.mxu0 0.0
  %2527 = vmatprep.subr.mxu0 0.0
  %2528 = vmatpush2.msra.mxu0 0.0
  %2529 = vmatprep.subr.mxu0 0.0
  %2530 = vmatpush2.msra.mxu0 0.0
  %2531 = vmatprep.subr.mxu0 0.0
  %2532 = vmatpush2.msra.mxu0 0.0
  %2533 = vmatprep.subr.mxu0 0.0
  %2534 = vmatpush2.msra.mxu0 0.0
  %2535 = vmatprep.subr.mxu0 0.0
  %2536 = vmatpush2.msra.mxu0 0.0
  %2537 = vmatprep.subr.mxu0 0.0
  %2538 = vmatpush2.msra.mxu0 0.0
  %2539 = vmatprep.subr.mxu0 0.0
  %2540 = vmatpush2.msra.mxu0 0.0
  %2541 = vmatprep.subr.mxu0 0.0
  %2542 = vmatpush2.msra.mxu0 0.0
  %2543 = vmatprep.subr.mxu0 0.0
  %2544 = vmatpush2.msra.mxu0 0.0
  %2545 = vmatprep.subr.mxu0 0.0
  %2546 = vmatpush2.msra.mxu0 0.0
  %2547 = vmatprep.mubr.f32.mxu0 0.0
  %2548 = vmatmul.mubr.f32.gmra.mxu0 %v2410
  %v2549 = vpop.f32.mrf.mxu0
  %v2550 = vadd.f32 %v2405, %v2549
  %v2551 = vpop.f32.mrf.mxu0
  %2552 = vdwg.mxu0
  %vm2553 = vcmp.ge.f32.partialorder %v2479, 0.0
  %vm2554 = vcmp.ge.f32.partialorder %v2481, 0.0
  %vm2555 = vcmp.ge.f32.partialorder %v2550, 0.0
  %v2556 = vmul.f32 %v2479, 0.01
  %v2557 = vmul.f32 %v2481, 0.01
  %v2558 = vmul.f32 %v2550, 0.01
  %v2559 = vsel %vm2553, %v2479, %v2556
  %v2560 = vsel %vm2554, %v2481, %v2557
  %v2561 = vsel %vm2555, %v2550, %v2558
  %v2562 = vld [vmem:[%s5] sm:$0xff]
  %v2563 = vld [vmem:[%s5 + $0x8] sm:$0xff]
  %v2564 = vld [vmem:[%s5 + $0x10] sm:$0xff]
  %v2565 = vld [vmem:[%s5 + $0x18] sm:$0xff]
  %v2566 = vld [vmem:[%s5 + $0x20] sm:$0xff]
  %v2567 = vld [vmem:[%s5 + $0x28] sm:$0xff]
  %v2568 = vld [vmem:[%s5 + $0x30] sm:$0xff]
  %v2569 = vld [vmem:[%s5 + $0x38] sm:$0xff]
  %v2570 = vld [vmem:[%s5 + $0x40] sm:$0xff]
  %v2571 = vld [vmem:[%s5 + $0x48] sm:$0xff]
  %v2572 = vld [vmem:[%s5 + $0x50] sm:$0xff]
  %v2573 = vld [vmem:[%s5 + $0x58] sm:$0xff]
  %v2574 = vld [vmem:[%s5 + $0x60] sm:$0xff]
  %v2575 = vld [vmem:[%s5 + $0x68] sm:$0xff]
  %v2576 = vld [vmem:[%s5 + $0x70] sm:$0xff]
  %v2577 = vld [vmem:[%s5 + $0x78] sm:$0xff]
  %v2578 = vld [vmem:[%s5 + $0x80] sm:$0xff]
  %v2579 = vld [vmem:[%s5 + $0x88] sm:$0xff]
  %v2580 = vld [vmem:[%s5 + $0x90] sm:$0xff]
  %v2581 = vld [vmem:[%s5 + $0x98] sm:$0xff]
  %v2582 = vld [vmem:[%s5 + $0xa0] sm:$0xff]
  %v2583 = vld [vmem:[%s5 + $0xa8] sm:$0xff]
  %v2584 = vld [vmem:[%s5 + $0xb0] sm:$0xff]
  %v2585 = vld [vmem:[%s5 + $0xb8] sm:$0xff]
  %v2586 = vld [vmem:[%s5 + $0xc0] sm:$0xff]
  %v2587 = vld [vmem:[%s5 + $0xc8] sm:$0xff]
  %v2588 = vld [vmem:[%s5 + $0xd0] sm:$0xff]
  %v2589 = vld [vmem:[%s5 + $0xd8] sm:$0xff]
  %v2590 = vld [vmem:[%s5 + $0xe0] sm:$0xff]
  %v2591 = vld [vmem:[%s5 + $0xe8] sm:$0xff]
  %v2592 = vld [vmem:[%s5 + $0xf0] sm:$0xff]
  %v2593 = vld [vmem:[%s5 + $0xf8] sm:$0xff]
  %v2594 = vld [vmem:[%s5 + $0x100] sm:$0xff]
  %v2595 = vld [vmem:[%s5 + $0x108] sm:$0xff]
  %v2596 = vld [vmem:[%s5 + $0x110] sm:$0xff]
  %v2597 = vld [vmem:[%s5 + $0x118] sm:$0xff]
  %v2598 = vld [vmem:[%s5 + $0x120] sm:$0xff]
  %v2599 = vld [vmem:[%s5 + $0x128] sm:$0xff]
  %v2600 = vld [vmem:[%s5 + $0x130] sm:$0xff]
  %v2601 = vld [vmem:[%s5 + $0x138] sm:$0xff]
  %v2602 = vld [vmem:[%s5 + $0x140] sm:$0xff]
  %v2603 = vld [vmem:[%s5 + $0x148] sm:$0xff]
  %v2604 = vld [vmem:[%s5 + $0x150] sm:$0xff]
  %v2605 = vld [vmem:[%s5 + $0x158] sm:$0xff]
  %v2606 = vld [vmem:[%s5 + $0x160] sm:$0xff]
  %v2607 = vld [vmem:[%s5 + $0x168] sm:$0xff]
  %v2608 = vld [vmem:[%s5 + $0x170] sm:$0xff]
  %v2609 = vld [vmem:[%s5 + $0x178] sm:$0xff]
  %v2610 = vld [vmem:[%s5 + $0x180] sm:$0xff]
  %v2611 = vld [vmem:[%s5 + $0x188] sm:$0xff]
  %v2612 = vld [vmem:[%s5 + $0x190] sm:$0xff]
  %v2613 = vld [vmem:[%s5 + $0x198] sm:$0xff]
  %v2614 = vld [vmem:[%s5 + $0x1a0] sm:$0xff]
  %v2615 = vld [vmem:[%s5 + $0x1a8] sm:$0xff]
  %v2616 = vld [vmem:[%s5 + $0x1b0] sm:$0xff]
  %v2617 = vld [vmem:[%s5 + $0x1b8] sm:$0xff]
  %v2618 = vld [vmem:[%s5 + $0x1c0] sm:$0xff]
  %v2619 = vld [vmem:[%s5 + $0x1c8] sm:$0xff]
  %v2620 = vld [vmem:[%s5 + $0x1d0] sm:$0xff]
  %v2621 = vld [vmem:[%s5 + $0x1d8] sm:$0xff]
  %v2622 = vld [vmem:[%s5 + $0x1e0] sm:$0xff]
  %v2623 = vld [vmem:[%s5 + $0x1e8] sm:$0xff]
  %v2624 = vld [vmem:[%s5 + $0x1f0] sm:$0xff]
  %v2625 = vld [vmem:[%s5 + $0x1f8] sm:$0xff]
  %v2626 = vld [vmem:[%s5 + $0x200] sm:$0xff]
  %v2627 = vld [vmem:[%s5 + $0x208] sm:$0xff]
  %v2628 = vld [vmem:[%s5 + $0x210] sm:$0xff]
  %v2629 = vld [vmem:[%s5 + $0x218] sm:$0xff]
  %v2630 = vld [vmem:[%s5 + $0x220] sm:$0xff]
  %v2631 = vld [vmem:[%s5 + $0x228] sm:$0xff]
  %v2632 = vld [vmem:[%s5 + $0x230] sm:$0xff]
  %v2633 = vld [vmem:[%s5 + $0x238] sm:$0xff]
  %v2634 = vld [vmem:[%s5 + $0x240] sm:$0xff]
  %v2635 = vld [vmem:[%s5 + $0x248] sm:$0xff]
  %v2636 = vld [vmem:[%s5 + $0x250] sm:$0xff]
  %v2637 = vld [vmem:[%s5 + $0x258] sm:$0xff]
  %v2638 = vld [vmem:[%s5 + $0x260] sm:$0xff]
  %v2639 = vld [vmem:[%s5 + $0x268] sm:$0xff]
  %v2640 = vld [vmem:[%s5 + $0x270] sm:$0xff]
  %v2641 = vld [vmem:[%s5 + $0x278] sm:$0xff]
  %v2642 = vld [vmem:[%s5 + $0x280] sm:$0xff]
  %v2643 = vld [vmem:[%s5 + $0x288] sm:$0xff]
  %v2644 = vld [vmem:[%s5 + $0x290] sm:$0xff]
  %v2645 = vld [vmem:[%s5 + $0x298] sm:$0xff]
  %v2646 = vld [vmem:[%s5 + $0x2a0] sm:$0xff]
  %v2647 = vld [vmem:[%s5 + $0x2a8] sm:$0xff]
  %v2648 = vld [vmem:[%s5 + $0x2b0] sm:$0xff]
  %v2649 = vld [vmem:[%s5 + $0x2b8] sm:$0xff]
  %v2650 = vld [vmem:[%s5 + $0x2c0] sm:$0xff]
  %v2651 = vld [vmem:[%s5 + $0x2c8] sm:$0xff]
  %v2652 = vld [vmem:[%s5 + $0x2d0] sm:$0xff]
  %v2653 = vld [vmem:[%s5 + $0x2d8] sm:$0xff]
  %v2654 = vld [vmem:[%s5 + $0x2e0] sm:$0xff]
  %v2655 = vld [vmem:[%s5 + $0x2e8] sm:$0xff]
  %v2656 = vld [vmem:[%s5 + $0x2f0] sm:$0xff]
  %v2657 = vld [vmem:[%s5 + $0x2f8] sm:$0xff]
  %v2658 = vld [vmem:[%s5 + $0x300] sm:$0xff]
  %v2659 = vld [vmem:[%s5 + $0x308] sm:$0xff]
  %v2660 = vld [vmem:[%s5 + $0x310] sm:$0xff]
  %v2661 = vld [vmem:[%s5 + $0x318] sm:$0xff]
  %v2662 = vld [vmem:[%s5 + $0x320] sm:$0xff]
  %v2663 = vld [vmem:[%s5 + $0x328] sm:$0xff]
  %v2664 = vld [vmem:[%s5 + $0x330] sm:$0xff]
  %v2665 = vld [vmem:[%s5 + $0x338] sm:$0xff]
  %v2666 = vld [vmem:[%s5 + $0x340] sm:$0xff]
  %v2667 = vld [vmem:[%s5 + $0x348] sm:$0xff]
  %v2668 = vld [vmem:[%s5 + $0x350] sm:$0xff]
  %v2669 = vld [vmem:[%s5 + $0x358] sm:$0xff]
  %v2670 = vld [vmem:[%s5 + $0x360] sm:$0xff]
  %v2671 = vld [vmem:[%s5 + $0x368] sm:$0xff]
  %v2672 = vld [vmem:[%s5 + $0x370] sm:$0xff]
  %v2673 = vld [vmem:[%s5 + $0x378] sm:$0xff]
  %v2674 = vld [vmem:[%s5 + $0x380] sm:$0xff]
  %v2675 = vld [vmem:[%s5 + $0x388] sm:$0xff]
  %v2676 = vld [vmem:[%s5 + $0x390] sm:$0xff]
  %v2677 = vld [vmem:[%s5 + $0x398] sm:$0xff]
  %v2678 = vld [vmem:[%s5 + $0x3a0] sm:$0xff]
  %v2679 = vld [vmem:[%s5 + $0x3a8] sm:$0xff]
  %v2680 = vld [vmem:[%s5 + $0x3b0] sm:$0xff]
  %v2681 = vld [vmem:[%s5 + $0x3b8] sm:$0xff]
  %v2682 = vld [vmem:[%s5 + $0x3c0] sm:$0xff]
  %v2683 = vld [vmem:[%s5 + $0x3c8] sm:$0xff]
  %v2684 = vld [vmem:[%s5 + $0x3d0] sm:$0xff]
  %v2685 = vld [vmem:[%s5 + $0x3d8] sm:$0xff]
  %v2686 = vld [vmem:[%s5 + $0x3e0] sm:$0xff]
  %v2687 = vld [vmem:[%s5 + $0x3e8] sm:$0xff]
  %v2688 = vld [vmem:[%s5 + $0x3f0] sm:$0xff]
  %v2689 = vld [vmem:[%s5 + $0x3f8] sm:$0xff]
  %v2690 = vld [vmem:[%s5 + $0x400] sm:$0xff]
  %v2691 = vld [vmem:[%s5 + $0x408] sm:$0xff]
  %v2692 = vld [vmem:[%s5 + $0x410] sm:$0xff]
  %v2693 = vld [vmem:[%s5 + $0x418] sm:$0xff]
  %v2694 = vld [vmem:[%s5 + $0x420] sm:$0xff]
  %v2695 = vld [vmem:[%s5 + $0x428] sm:$0xff]
  %v2696 = vld [vmem:[%s5 + $0x430] sm:$0xff]
  %v2697 = vld [vmem:[%s5 + $0x438] sm:$0xff]
  %v2698 = vld [vmem:[%s5 + $0x440] sm:$0xff]
  %v2699 = vld [vmem:[%s5 + $0x448] sm:$0xff]
  %v2700 = vld [vmem:[%s5 + $0x450] sm:$0xff]
  %v2701 = vld [vmem:[%s5 + $0x458] sm:$0xff]
  %v2702 = vld [vmem:[%s5 + $0x460] sm:$0xff]
  %v2703 = vld [vmem:[%s5 + $0x468] sm:$0xff]
  %v2704 = vld [vmem:[%s5 + $0x470] sm:$0xff]
  %v2705 = vld [vmem:[%s5 + $0x478] sm:$0xff]
  %v2706 = vld [vmem:[%s5 + $0x480] sm:$0xff]
  %v2707 = vld [vmem:[%s5 + $0x488] sm:$0xff]
  %v2708 = vld [vmem:[%s5 + $0x490] sm:$0xff]
  %v2709 = vld [vmem:[%s5 + $0x498] sm:$0xff]
  %v2710 = vld [vmem:[%s5 + $0x4a0] sm:$0xff]
  %v2711 = vld [vmem:[%s5 + $0x4a8] sm:$0xff]
  %v2712 = vld [vmem:[%s5 + $0x4b0] sm:$0xff]
  %v2713 = vld [vmem:[%s5 + $0x4b8] sm:$0xff]
  %v2714 = vld [vmem:[%s5 + $0x4c0] sm:$0xff]
  %v2715 = vld [vmem:[%s5 + $0x4c8] sm:$0xff]
  %v2716 = vld [vmem:[%s5 + $0x4d0] sm:$0xff]
  %v2717 = vld [vmem:[%s5 + $0x4d8] sm:$0xff]
  %v2718 = vld [vmem:[%s5 + $0x4e0] sm:$0xff]
  %v2719 = vld [vmem:[%s5 + $0x4e8] sm:$0xff]
  %v2720 = vld [vmem:[%s5 + $0x4f0] sm:$0xff]
  %v2721 = vld [vmem:[%s5 + $0x4f8] sm:$0xff]
  %v2722 = vld [vmem:[%s5 + $0x500] sm:$0xff]
  %v2723 = vld [vmem:[%s5 + $0x508] sm:$0xff]
  %v2724 = vld [vmem:[%s5 + $0x510] sm:$0xff]
  %v2725 = vld [vmem:[%s5 + $0x518] sm:$0xff]
  %v2726 = vld [vmem:[%s5 + $0x520] sm:$0xff]
  %v2727 = vld [vmem:[%s5 + $0x528] sm:$0xff]
  %v2728 = vld [vmem:[%s5 + $0x530] sm:$0xff]
  %v2729 = vld [vmem:[%s5 + $0x538] sm:$0xff]
  %v2730 = vld [vmem:[%s5 + $0x540] sm:$0xff]
  %v2731 = vld [vmem:[%s5 + $0x548] sm:$0xff]
  %v2732 = vld [vmem:[%s5 + $0x550] sm:$0xff]
  %v2733 = vld [vmem:[%s5 + $0x558] sm:$0xff]
  %v2734 = vld [vmem:[%s5 + $0x560] sm:$0xff]
  %v2735 = vld [vmem:[%s5 + $0x568] sm:$0xff]
  %v2736 = vld [vmem:[%s5 + $0x570] sm:$0xff]
  %v2737 = vld [vmem:[%s5 + $0x578] sm:$0xff]
  %v2738 = vld [vmem:[%s5 + $0x580] sm:$0xff]
  %v2739 = vld [vmem:[%s5 + $0x588] sm:$0xff]
  %v2740 = vld [vmem:[%s5 + $0x590] sm:$0xff]
  %v2741 = vld [vmem:[%s5 + $0x598] sm:$0xff]
  %v2742 = vld [vmem:[%s5 + $0x5a0] sm:$0xff]
  %v2743 = vld [vmem:[%s5 + $0x5a8] sm:$0xff]
  %v2744 = vld [vmem:[%s5 + $0x5b0] sm:$0xff]
  %v2745 = vld [vmem:[%s5 + $0x5b8] sm:$0xff]
  %v2746 = vld [vmem:[%s5 + $0x5c0] sm:$0xff]
  %v2747 = vld [vmem:[%s5 + $0x5c8] sm:$0xff]
  %v2748 = vld [vmem:[%s5 + $0x5d0] sm:$0xff]
  %v2749 = vld [vmem:[%s5 + $0x5d8] sm:$0xff]
  %v2750 = vld [vmem:[%s5 + $0x5e0] sm:$0xff]
  %v2751 = vld [vmem:[%s5 + $0x5e8] sm:$0xff]
  %v2752 = vld [vmem:[%s5 + $0x5f0] sm:$0xff]
  %v2753 = vld [vmem:[%s5 + $0x5f8] sm:$0xff]
  %v2754 = vld [vmem:[%s5 + $0x600] sm:$0xff]
  %v2755 = vld [vmem:[%s5 + $0x608] sm:$0xff]
  %v2756 = vld [vmem:[%s5 + $0x610] sm:$0xff]
  %v2757 = vld [vmem:[%s5 + $0x618] sm:$0xff]
  %v2758 = vld [vmem:[%s5 + $0x620] sm:$0xff]
  %v2759 = vld [vmem:[%s5 + $0x628] sm:$0xff]
  %v2760 = vld [vmem:[%s5 + $0x630] sm:$0xff]
  %v2761 = vld [vmem:[%s5 + $0x638] sm:$0xff]
  %s2762 = scalar_lea.vmem %s6, 80
  %v2763 = vld [vmem:[%s2762] ss:$8 sm:$0xf]
  %v2764 = vld [vmem:[%s2762] ss:$8 sm:$0x10]
  %v2765 = vor.u32 %v2763, %v2764
  %v2767 = vlaneseq
  %v2768 = vshrl.u32 %v2767, 7
  %v2769 = vsub.s32 0, %v2768
  %v2770 = vrot.slane %v2765, %v2769
  %v2771 = vlaneseq
  %v2772 = vshrl.u32 %v2771, 7
  %v2773 = vsub.s32 1, %v2772
  %v2774 = vrot.slane %v2765, %v2773
  %v2775 = vlaneseq
  %v2776 = vshrl.u32 %v2775, 7
  %v2777 = vsub.s32 2, %v2776
  %v2778 = vrot.slane %v2765, %v2777
  %v2779 = vlaneseq
  %v2780 = vshrl.u32 %v2779, 7
  %v2781 = vsub.s32 3, %v2780
  %v2782 = vrot.slane %v2765, %v2781
  %v2783 = vlaneseq
  %v2784 = vshrl.u32 %v2783, 7
  %v2785 = vsub.s32 4, %v2784
  %v2786 = vrot.slane %v2765, %v2785
  %v2793 = vsel %vm723, %v2561, 0
  %2795 = vmatprep.subr.mxu0 %v2638
  %2796 = vmatpush1.msra.mxu0 %v2637
  %2797 = vmatprep.subr.mxu0 %v2633
  %2798 = vmatpush1.msra.mxu0 %v2632
  %2799 = vmatprep.subr.mxu0 %v2628
  %2800 = vmatpush1.msra.mxu0 %v2627
  %2801 = vmatprep.subr.mxu0 %v2623
  %2802 = vmatpush1.msra.mxu0 %v2622
  %2803 = vmatprep.subr.mxu0 %v2618
  %2804 = vmatpush1.msra.mxu0 %v2617
  %2805 = vmatprep.subr.mxu0 %v2613
  %2806 = vmatpush1.msra.mxu0 %v2612
  %2807 = vmatprep.subr.mxu0 %v2608
  %2808 = vmatpush1.msra.mxu0 %v2607
  %2809 = vmatprep.subr.mxu0 %v2603
  %2810 = vmatpush1.msra.mxu0 %v2602
  %2811 = vmatprep.subr.mxu0 %v2598
  %2812 = vmatpush1.msra.mxu0 %v2597
  %2813 = vmatprep.subr.mxu0 %v2593
  %2814 = vmatpush1.msra.mxu0 %v2592
  %2815 = vmatprep.subr.mxu0 %v2588
  %2816 = vmatpush1.msra.mxu0 %v2587
  %2817 = vmatprep.subr.mxu0 %v2583
  %2818 = vmatpush1.msra.mxu0 %v2582
  %2819 = vmatprep.subr.mxu0 %v2578
  %2820 = vmatpush1.msra.mxu0 %v2577
  %2821 = vmatprep.subr.mxu0 %v2573
  %2822 = vmatpush1.msra.mxu0 %v2572
  %2823 = vmatprep.subr.mxu0 %v2568
  %2824 = vmatpush1.msra.mxu0 %v2567
  %2825 = vmatprep.subr.mxu0 %v2563
  %2826 = vmatpush1.msra.mxu0 %v2562
  %2827 = vmatprep.subr.mxu0 %v2718
  %2828 = vmatpush2.msra.mxu0 %v2717
  %2829 = vmatprep.subr.mxu0 %v2713
  %2830 = vmatpush2.msra.mxu0 %v2712
  %2831 = vmatprep.subr.mxu0 %v2708
  %2832 = vmatpush2.msra.mxu0 %v2707
  %2833 = vmatprep.subr.mxu0 %v2703
  %2834 = vmatpush2.msra.mxu0 %v2702
  %2835 = vmatprep.subr.mxu0 %v2698
  %2836 = vmatpush2.msra.mxu0 %v2697
  %2837 = vmatprep.subr.mxu0 %v2693
  %2838 = vmatpush2.msra.mxu0 %v2692
  %2839 = vmatprep.subr.mxu0 %v2688
  %2840 = vmatpush2.msra.mxu0 %v2687
  %2841 = vmatprep.subr.mxu0 %v2683
  %2842 = vmatpush2.msra.mxu0 %v2682
  %2843 = vmatprep.subr.mxu0 %v2678
  %2844 = vmatpush2.msra.mxu0 %v2677
  %2845 = vmatprep.subr.mxu0 %v2673
  %2846 = vmatpush2.msra.mxu0 %v2672
  %2847 = vmatprep.subr.mxu0 %v2668
  %2848 = vmatpush2.msra.mxu0 %v2667
  %2849 = vmatprep.subr.mxu0 %v2663
  %2850 = vmatpush2.msra.mxu0 %v2662
  %2851 = vmatprep.subr.mxu0 %v2658
  %2852 = vmatpush2.msra.mxu0 %v2657
  %2853 = vmatprep.subr.mxu0 %v2653
  %2854 = vmatpush2.msra.mxu0 %v2652
  %2855 = vmatprep.subr.mxu0 %v2648
  %2856 = vmatpush2.msra.mxu0 %v2647
  %2857 = vmatprep.subr.mxu0 %v2643
  %2858 = vmatpush2.msra.mxu0 %v2642
  %2859 = vmatprep.mubr.f32.mxu0 %v2560
  %2860 = vmatmul.mubr.f32.gmra.mxu0 %v2559
  %v2861 = vpop.f32.mrf.mxu0
  %v2862 = vadd.f32 %v2770, %v2861
  %v2863 = vpop.f32.mrf.mxu0
  %v2864 = vadd.f32 %v2774, %v2863
  %2865 = vdwg.mxu0
  %2866 = vmatprep.subr.mxu0 0.0
  %2867 = vmatpush1.msra.mxu0 0.0
  %2868 = vmatprep.subr.mxu0 0.0
  %2869 = vmatpush1.msra.mxu0 0.0
  %2870 = vmatprep.subr.mxu0 0.0
  %2871 = vmatpush1.msra.mxu0 0.0
  %2872 = vmatprep.subr.mxu0 0.0
  %2873 = vmatpush1.msra.mxu0 0.0
  %2874 = vmatprep.subr.mxu0 0.0
  %2875 = vmatpush1.msra.mxu0 0.0
  %2876 = vmatprep.subr.mxu0 0.0
  %2877 = vmatpush1.msra.mxu0 0.0
  %2878 = vmatprep.subr.mxu0 0.0
  %2879 = vmatpush1.msra.mxu0 0.0
  %2880 = vmatprep.subr.mxu0 0.0
  %2881 = vmatpush1.msra.mxu0 0.0
  %2882 = vmatprep.subr.mxu0 %v2758
  %2883 = vmatpush1.msra.mxu0 %v2757
  %2884 = vmatprep.subr.mxu0 %v2753
  %2885 = vmatpush1.msra.mxu0 %v2752
  %2886 = vmatprep.subr.mxu0 %v2748
  %2887 = vmatpush1.msra.mxu0 %v2747
  %2888 = vmatprep.subr.mxu0 %v2743
  %2889 = vmatpush1.msra.mxu0 %v2742
  %2890 = vmatprep.subr.mxu0 %v2738
  %2891 = vmatpush1.msra.mxu0 %v2737
  %2892 = vmatprep.subr.mxu0 %v2733
  %2893 = vmatpush1.msra.mxu0 %v2732
  %2894 = vmatprep.subr.mxu0 %v2728
  %2895 = vmatpush1.msra.mxu0 %v2727
  %2896 = vmatprep.subr.mxu0 %v2723
  %2897 = vmatpush1.msra.mxu0 %v2722
  %2898 = vmatprep.subr.mxu0 0.0
  %2899 = vmatpush2.msra.mxu0 0.0
  %2900 = vmatprep.subr.mxu0 0.0
  %2901 = vmatpush2.msra.mxu0 0.0
  %2902 = vmatprep.subr.mxu0 0.0
  %2903 = vmatpush2.msra.mxu0 0.0
  %2904 = vmatprep.subr.mxu0 0.0
  %2905 = vmatpush2.msra.mxu0 0.0
  %2906 = vmatprep.subr.mxu0 0.0
  %2907 = vmatpush2.msra.mxu0 0.0
  %2908 = vmatprep.subr.mxu0 0.0
  %2909 = vmatpush2.msra.mxu0 0.0
  %2910 = vmatprep.subr.mxu0 0.0
  %2911 = vmatpush2.msra.mxu0 0.0
  %2912 = vmatprep.subr.mxu0 0.0
  %2913 = vmatpush2.msra.mxu0 0.0
  %2914 = vmatprep.subr.mxu0 0.0
  %2915 = vmatpush2.msra.mxu0 0.0
  %2916 = vmatprep.subr.mxu0 0.0
  %2917 = vmatpush2.msra.mxu0 0.0
  %2918 = vmatprep.subr.mxu0 0.0
  %2919 = vmatpush2.msra.mxu0 0.0
  %2920 = vmatprep.subr.mxu0 0.0
  %2921 = vmatpush2.msra.mxu0 0.0
  %2922 = vmatprep.subr.mxu0 0.0
  %2923 = vmatpush2.msra.mxu0 0.0
  %2924 = vmatprep.subr.mxu0 0.0
  %2925 = vmatpush2.msra.mxu0 0.0
  %2926 = vmatprep.subr.mxu0 0.0
  %2927 = vmatpush2.msra.mxu0 0.0
  %2928 = vmatprep.subr.mxu0 0.0
  %2929 = vmatpush2.msra.mxu0 0.0
  %2930 = vmatprep.mubr.f32.mxu0 0.0
  %2931 = vmatmul.mubr.f32.gmra.mxu0 %v2793
  %v2932 = vpop.f32.mrf.mxu0
  %v2933 = vadd.f32 %v2862, %v2932
  %v2934 = vpop.f32.mrf.mxu0
  %v2935 = vadd.f32 %v2864, %v2934
  %2936 = vdwg.mxu0
  %2937 = vmatprep.subr.mxu0 %v2640
  %2938 = vmatpush1.msra.mxu0 %v2639
  %2939 = vmatprep.subr.mxu0 %v2635
  %2940 = vmatpush1.msra.mxu0 %v2634
  %2941 = vmatprep.subr.mxu0 %v2630
  %2942 = vmatpush1.msra.mxu0 %v2629
  %2943 = vmatprep.subr.mxu0 %v2625
  %2944 = vmatpush1.msra.mxu0 %v2624
  %2945 = vmatprep.subr.mxu0 %v2620
  %2946 = vmatpush1.msra.mxu0 %v2619
  %2947 = vmatprep.subr.mxu0 %v2615
  %2948 = vmatpush1.msra.mxu0 %v2614
  %2949 = vmatprep.subr.mxu0 %v2610
  %2950 = vmatpush1.msra.mxu0 %v2609
  %2951 = vmatprep.subr.mxu0 %v2605
  %2952 = vmatpush1.msra.mxu0 %v2604
  %2953 = vmatprep.subr.mxu0 %v2600
  %2954 = vmatpush1.msra.mxu0 %v2599
  %2955 = vmatprep.subr.mxu0 %v2595
  %2956 = vmatpush1.msra.mxu0 %v2594
  %2957 = vmatprep.subr.mxu0 %v2590
  %2958 = vmatpush1.msra.mxu0 %v2589
  %2959 = vmatprep.subr.mxu0 %v2585
  %2960 = vmatpush1.msra.mxu0 %v2584
  %2961 = vmatprep.subr.mxu0 %v2580
  %2962 = vmatpush1.msra.mxu0 %v2579
  %2963 = vmatprep.subr.mxu0 %v2575
  %2964 = vmatpush1.msra.mxu0 %v2574
  %2965 = vmatprep.subr.mxu0 %v2570
  %2966 = vmatpush1.msra.mxu0 %v2569
  %2967 = vmatprep.subr.mxu0 %v2565
  %2968 = vmatpush1.msra.mxu0 %v2564
  %2969 = vmatprep.subr.mxu0 %v2720
  %2970 = vmatpush2.msra.mxu0 %v2719
  %2971 = vmatprep.subr.mxu0 %v2715
  %2972 = vmatpush2.msra.mxu0 %v2714
  %2973 = vmatprep.subr.mxu0 %v2710
  %2974 = vmatpush2.msra.mxu0 %v2709
  %2975 = vmatprep.subr.mxu0 %v2705
  %2976 = vmatpush2.msra.mxu0 %v2704
  %2977 = vmatprep.subr.mxu0 %v2700
  %2978 = vmatpush2.msra.mxu0 %v2699
  %2979 = vmatprep.subr.mxu0 %v2695
  %2980 = vmatpush2.msra.mxu0 %v2694
  %2981 = vmatprep.subr.mxu0 %v2690
  %2982 = vmatpush2.msra.mxu0 %v2689
  %2983 = vmatprep.subr.mxu0 %v2685
  %2984 = vmatpush2.msra.mxu0 %v2684
  %2985 = vmatprep.subr.mxu0 %v2680
  %2986 = vmatpush2.msra.mxu0 %v2679
  %2987 = vmatprep.subr.mxu0 %v2675
  %2988 = vmatpush2.msra.mxu0 %v2674
  %2989 = vmatprep.subr.mxu0 %v2670
  %2990 = vmatpush2.msra.mxu0 %v2669
  %2991 = vmatprep.subr.mxu0 %v2665
  %2992 = vmatpush2.msra.mxu0 %v2664
  %2993 = vmatprep.subr.mxu0 %v2660
  %2994 = vmatpush2.msra.mxu0 %v2659
  %2995 = vmatprep.subr.mxu0 %v2655
  %2996 = vmatpush2.msra.mxu0 %v2654
  %2997 = vmatprep.subr.mxu0 %v2650
  %2998 = vmatpush2.msra.mxu0 %v2649
  %2999 = vmatprep.subr.mxu0 %v2645
  %3000 = vmatpush2.msra.mxu0 %v2644
  %3001 = vmatprep.mubr.f32.mxu0 %v2560
  %3002 = vmatmul.mubr.f32.gmra.mxu0 %v2559
  %v3003 = vpop.f32.mrf.mxu0
  %v3004 = vadd.f32 %v2778, %v3003
  %v3005 = vpop.f32.mrf.mxu0
  %v3006 = vadd.f32 %v2782, %v3005
  %3007 = vdwg.mxu0
  %3008 = vmatprep.subr.mxu0 0.0
  %3009 = vmatpush1.msra.mxu0 0.0
  %3010 = vmatprep.subr.mxu0 0.0
  %3011 = vmatpush1.msra.mxu0 0.0
  %3012 = vmatprep.subr.mxu0 0.0
  %3013 = vmatpush1.msra.mxu0 0.0
  %3014 = vmatprep.subr.mxu0 0.0
  %3015 = vmatpush1.msra.mxu0 0.0
  %3016 = vmatprep.subr.mxu0 0.0
  %3017 = vmatpush1.msra.mxu0 0.0
  %3018 = vmatprep.subr.mxu0 0.0
  %3019 = vmatpush1.msra.mxu0 0.0
  %3020 = vmatprep.subr.mxu0 0.0
  %3021 = vmatpush1.msra.mxu0 0.0
  %3022 = vmatprep.subr.mxu0 0.0
  %3023 = vmatpush1.msra.mxu0 0.0
  %3024 = vmatprep.subr.mxu0 %v2760
  %3025 = vmatpush1.msra.mxu0 %v2759
  %3026 = vmatprep.subr.mxu0 %v2755
  %3027 = vmatpush1.msra.mxu0 %v2754
  %3028 = vmatprep.subr.mxu0 %v2750
  %3029 = vmatpush1.msra.mxu0 %v2749
  %3030 = vmatprep.subr.mxu0 %v2745
  %3031 = vmatpush1.msra.mxu0 %v2744
  %3032 = vmatprep.subr.mxu0 %v2740
  %3033 = vmatpush1.msra.mxu0 %v2739
  %3034 = vmatprep.subr.mxu0 %v2735
  %3035 = vmatpush1.msra.mxu0 %v2734
  %3036 = vmatprep.subr.mxu0 %v2730
  %3037 = vmatpush1.msra.mxu0 %v2729
  %3038 = vmatprep.subr.mxu0 %v2725
  %3039 = vmatpush1.msra.mxu0 %v2724
  %3040 = vmatprep.subr.mxu0 0.0
  %3041 = vmatpush2.msra.mxu0 0.0
  %3042 = vmatprep.subr.mxu0 0.0
  %3043 = vmatpush2.msra.mxu0 0.0
  %3044 = vmatprep.subr.mxu0 0.0
  %3045 = vmatpush2.msra.mxu0 0.0
  %3046 = vmatprep.subr.mxu0 0.0
  %3047 = vmatpush2.msra.mxu0 0.0
  %3048 = vmatprep.subr.mxu0 0.0
  %3049 = vmatpush2.msra.mxu0 0.0
  %3050 = vmatprep.subr.mxu0 0.0
  %3051 = vmatpush2.msra.mxu0 0.0
  %3052 = vmatprep.subr.mxu0 0.0
  %3053 = vmatpush2.msra.mxu0 0.0
  %3054 = vmatprep.subr.mxu0 0.0
  %3055 = vmatpush2.msra.mxu0 0.0
  %3056 = vmatprep.subr.mxu0 0.0
  %3057 = vmatpush2.msra.mxu0 0.0
  %3058 = vmatprep.subr.mxu0 0.0
  %3059 = vmatpush2.msra.mxu0 0.0
  %3060 = vmatprep.subr.mxu0 0.0
  %3061 = vmatpush2.msra.mxu0 0.0
  %3062 = vmatprep.subr.mxu0 0.0
  %3063 = vmatpush2.msra.mxu0 0.0
  %3064 = vmatprep.subr.mxu0 0.0
  %3065 = vmatpush2.msra.mxu0 0.0
  %3066 = vmatprep.subr.mxu0 0.0
  %3067 = vmatpush2.msra.mxu0 0.0
  %3068 = vmatprep.subr.mxu0 0.0
  %3069 = vmatpush2.msra.mxu0 0.0
  %3070 = vmatprep.subr.mxu0 0.0
  %3071 = vmatpush2.msra.mxu0 0.0
  %3072 = vmatprep.mubr.f32.mxu0 0.0
  %3073 = vmatmul.mubr.f32.gmra.mxu0 %v2793
  %v3074 = vpop.f32.mrf.mxu0
  %v3075 = vadd.f32 %v3004, %v3074
  %v3076 = vpop.f32.mrf.mxu0
  %v3077 = vadd.f32 %v3006, %v3076
  %3078 = vdwg.mxu0
  %3079 = vmatprep.subr.mxu0 0.0
  %3080 = vmatpush1.msra.mxu0 %v2641
  %3081 = vmatprep.subr.mxu0 0.0
  %3082 = vmatpush1.msra.mxu0 %v2636
  %3083 = vmatprep.subr.mxu0 0.0
  %3084 = vmatpush1.msra.mxu0 %v2631
  %3085 = vmatprep.subr.mxu0 0.0
  %3086 = vmatpush1.msra.mxu0 %v2626
  %3087 = vmatprep.subr.mxu0 0.0
  %3088 = vmatpush1.msra.mxu0 %v2621
  %3089 = vmatprep.subr.mxu0 0.0
  %3090 = vmatpush1.msra.mxu0 %v2616
  %3091 = vmatprep.subr.mxu0 0.0
  %3092 = vmatpush1.msra.mxu0 %v2611
  %3093 = vmatprep.subr.mxu0 0.0
  %3094 = vmatpush1.msra.mxu0 %v2606
  %3095 = vmatprep.subr.mxu0 0.0
  %3096 = vmatpush1.msra.mxu0 %v2601
  %3097 = vmatprep.subr.mxu0 0.0
  %3098 = vmatpush1.msra.mxu0 %v2596
  %3099 = vmatprep.subr.mxu0 0.0
  %3100 = vmatpush1.msra.mxu0 %v2591
  %3101 = vmatprep.subr.mxu0 0.0
  %3102 = vmatpush1.msra.mxu0 %v2586
  %3103 = vmatprep.subr.mxu0 0.0
  %3104 = vmatpush1.msra.mxu0 %v2581
  %3105 = vmatprep.subr.mxu0 0.0
  %3106 = vmatpush1.msra.mxu0 %v2576
  %3107 = vmatprep.subr.mxu0 0.0
  %3108 = vmatpush1.msra.mxu0 %v2571
  %3109 = vmatprep.subr.mxu0 0.0
  %3110 = vmatpush1.msra.mxu0 %v2566
  %3111 = vmatprep.subr.mxu0 0.0
  %3112 = vmatpush2.msra.mxu0 %v2721
  %3113 = vmatprep.subr.mxu0 0.0
  %3114 = vmatpush2.msra.mxu0 %v2716
  %3115 = vmatprep.subr.mxu0 0.0
  %3116 = vmatpush2.msra.mxu0 %v2711
  %3117 = vmatprep.subr.mxu0 0.0
  %3118 = vmatpush2.msra.mxu0 %v2706
  %3119 = vmatprep.subr.mxu0 0.0
  %3120 = vmatpush2.msra.mxu0 %v2701
  %3121 = vmatprep.subr.mxu0 0.0
  %3122 = vmatpush2.msra.mxu0 %v2696
  %3123 = vmatprep.subr.mxu0 0.0
  %3124 = vmatpush2.msra.mxu0 %v2691
  %3125 = vmatprep.subr.mxu0 0.0
  %3126 = vmatpush2.msra.mxu0 %v2686
  %3127 = vmatprep.subr.mxu0 0.0
  %3128 = vmatpush2.msra.mxu0 %v2681
  %3129 = vmatprep.subr.mxu0 0.0
  %3130 = vmatpush2.msra.mxu0 %v2676
  %3131 = vmatprep.subr.mxu0 0.0
  %3132 = vmatpush2.msra.mxu0 %v2671
  %3133 = vmatprep.subr.mxu0 0.0
  %3134 = vmatpush2.msra.mxu0 %v2666
  %3135 = vmatprep.subr.mxu0 0.0
  %3136 = vmatpush2.msra.mxu0 %v2661
  %3137 = vmatprep.subr.mxu0 0.0
  %3138 = vmatpush2.msra.mxu0 %v2656
  %3139 = vmatprep.subr.mxu0 0.0
  %3140 = vmatpush2.msra.mxu0 %v2651
  %3141 = vmatprep.subr.mxu0 0.0
  %3142 = vmatpush2.msra.mxu0 %v2646
  %3143 = vmatprep.mubr.f32.mxu0 %v2560
  %3144 = vmatmul.mubr.f32.gmra.mxu0 %v2559
  %v3145 = vpop.f32.mrf.mxu0
  %v3146 = vadd.f32 %v2786, %v3145
  %v3147 = vpop.f32.mrf.mxu0
  %3148 = vdwg.mxu0
  %3149 = vmatprep.subr.mxu0 0.0
  %3150 = vmatpush1.msra.mxu0 0.0
  %3151 = vmatprep.subr.mxu0 0.0
  %3152 = vmatpush1.msra.mxu0 0.0
  %3153 = vmatprep.subr.mxu0 0.0
  %3154 = vmatpush1.msra.mxu0 0.0
  %3155 = vmatprep.subr.mxu0 0.0
  %3156 = vmatpush1.msra.mxu0 0.0
  %3157 = vmatprep.subr.mxu0 0.0
  %3158 = vmatpush1.msra.mxu0 0.0
  %3159 = vmatprep.subr.mxu0 0.0
  %3160 = vmatpush1.msra.mxu0 0.0
  %3161 = vmatprep.subr.mxu0 0.0
  %3162 = vmatpush1.msra.mxu0 0.0
  %3163 = vmatprep.subr.mxu0 0.0
  %3164 = vmatpush1.msra.mxu0 0.0
  %3165 = vmatprep.subr.mxu0 0.0
  %3166 = vmatpush1.msra.mxu0 %v2761
  %3167 = vmatprep.subr.mxu0 0.0
  %3168 = vmatpush1.msra.mxu0 %v2756
  %3169 = vmatprep.subr.mxu0 0.0
  %3170 = vmatpush1.msra.mxu0 %v2751
  %3171 = vmatprep.subr.mxu0 0.0
  %3172 = vmatpush1.msra.mxu0 %v2746
  %3173 = vmatprep.subr.mxu0 0.0
  %3174 = vmatpush1.msra.mxu0 %v2741
  %3175 = vmatprep.subr.mxu0 0.0
  %3176 = vmatpush1.msra.mxu0 %v2736
  %3177 = vmatprep.subr.mxu0 0.0
  %3178 = vmatpush1.msra.mxu0 %v2731
  %3179 = vmatprep.subr.mxu0 0.0
  %3180 = vmatpush1.msra.mxu0 %v2726
  %3181 = vmatprep.subr.mxu0 0.0
  %3182 = vmatpush2.msra.mxu0 0.0
  %3183 = vmatprep.subr.mxu0 0.0
  %3184 = vmatpush2.msra.mxu0 0.0
  %3185 = vmatprep.subr.mxu0 0.0
  %3186 = vmatpush2.msra.mxu0 0.0
  %3187 = vmatprep.subr.mxu0 0.0
  %3188 = vmatpush2.msra.mxu0 0.0
  %3189 = vmatprep.subr.mxu0 0.0
  %3190 = vmatpush2.msra.mxu0 0.0
  %3191 = vmatprep.subr.mxu0 0.0
  %3192 = vmatpush2.msra.mxu0 0.0
  %3193 = vmatprep.subr.mxu0 0.0
  %3194 = vmatpush2.msra.mxu0 0.0
  %3195 = vmatprep.subr.mxu0 0.0
  %3196 = vmatpush2.msra.mxu0 0.0
  %3197 = vmatprep.subr.mxu0 0.0
  %3198 = vmatpush2.msra.mxu0 0.0
  %3199 = vmatprep.subr.mxu0 0.0
  %3200 = vmatpush2.msra.mxu0 0.0
  %3201 = vmatprep.subr.mxu0 0.0
  %3202 = vmatpush2.msra.mxu0 0.0
  %3203 = vmatprep.subr.mxu0 0.0
  %3204 = vmatpush2.msra.mxu0 0.0
  %3205 = vmatprep.subr.mxu0 0.0
  %3206 = vmatpush2.msra.mxu0 0.0
  %3207 = vmatprep.subr.mxu0 0.0
  %3208 = vmatpush2.msra.mxu0 0.0
  %3209 = vmatprep.subr.mxu0 0.0
  %3210 = vmatpush2.msra.mxu0 0.0
  %3211 = vmatprep.subr.mxu0 0.0
  %3212 = vmatpush2.msra.mxu0 0.0
  %3213 = vmatprep.mubr.f32.mxu0 0.0
  %3214 = vmatmul.mubr.f32.gmra.mxu0 %v2793
  %v3215 = vpop.f32.mrf.mxu0
  %v3216 = vadd.f32 %v3146, %v3215
  %v3217 = vpop.f32.mrf.mxu0
  %3218 = vdwg.mxu0
  %v3219 = vtanh.pop %v2933
  %v3220 = vtanh.pop %v2935
  %v3221 = vtanh.pop %v3075
  %v3222 = vtanh.pop %v3077
  %v3223 = vtanh.pop %v3216
  %v3225 = vrot.slane %v3220, 7
  %v3228 = vrot.slane %v3221, 6
  %v3231 = vrot.slane %v3222, 5
  %v3234 = vrot.slane %v3223, 4
  %v3237 = vrot.slane %v3219, 4
  %v3239 = vrot.slane %v3220, 3
  %v3241 = vrot.slane %v3221, 2
  %v3243 = vrot.slane %v3222, 1
  %v3245 = vsel %vm1157, %v3219, %v3225
  %v3246 = vsel %vm279, %v3245, %v3228
  %vm3247 = vcmask 1042432
  %v3248 = vsel %vm3247, %v3246, %v3231
  %v3249 = vsel %vm311, %v3248, %v3234
  %vm3250 = vcmask 1044480
  %v3251 = vsel %vm3250, %v3249, %v3237
  %v3252 = vsel %vm342, %v3251, %v3239
  %vm3253 = vcmask 1046528
  %v3254 = vsel %vm3253, %v3252, %v3241
  %v3255 = vsel %vm1157, %v3243, %v3223
  %v3256 = vld [vmem:[%s4] sm:$0xff]
  %v3257 = vld [vmem:[%s4 + $0x8] sm:$0xff]
  %v3258 = vld [vmem:[%s4 + $0x18] sm:$0xff]
  %v3259 = vld [vmem:[%s4 + $0x20] sm:$0xff]
  %v3260 = vld [vmem:[%s4 + $0x30] sm:$0xff]
  %v3261 = vld [vmem:[%s4 + $0x38] sm:$0xff]
  %v3262 = vld [vmem:[%s4 + $0x48] sm:$0xff]
  %v3263 = vld [vmem:[%s4 + $0x50] sm:$0xff]
  %v3264 = vld [vmem:[%s4 + $0x60] sm:$0xff]
  %v3265 = vld [vmem:[%s4 + $0x68] sm:$0xff]
  %v3266 = vld [vmem:[%s4 + $0x78] sm:$0xff]
  %v3267 = vld [vmem:[%s4 + $0x80] sm:$0xff]
  %v3268 = vld [vmem:[%s4 + $0x90] sm:$0xff]
  %v3269 = vld [vmem:[%s4 + $0x98] sm:$0xff]
  %v3270 = vld [vmem:[%s4 + $0xa8] sm:$0xff]
  %v3271 = vld [vmem:[%s4 + $0xb0] sm:$0xff]
  %v3272 = vld [vmem:[%s4 + $0xc0] sm:$0xff]
  %v3273 = vld [vmem:[%s4 + $0xc8] sm:$0xff]
  %v3274 = vld [vmem:[%s4 + $0xd8] sm:$0xff]
  %v3275 = vld [vmem:[%s4 + $0xe0] sm:$0xff]
  %v3276 = vld [vmem:[%s4 + $0xf0] sm:$0xff]
  %v3277 = vld [vmem:[%s4 + $0xf8] sm:$0xff]
  %v3278 = vld [vmem:[%s4 + $0x108] sm:$0xff]
  %v3279 = vld [vmem:[%s4 + $0x110] sm:$0xff]
  %v3280 = vld [vmem:[%s4 + $0x120] sm:$0xff]
  %v3281 = vld [vmem:[%s4 + $0x128] sm:$0xff]
  %v3282 = vld [vmem:[%s4 + $0x138] sm:$0xff]
  %v3283 = vld [vmem:[%s4 + $0x140] sm:$0xff]
  %v3284 = vld [vmem:[%s4 + $0x150] sm:$0xff]
  %v3285 = vld [vmem:[%s4 + $0x158] sm:$0xff]
  %v3286 = vld [vmem:[%s4 + $0x168] sm:$0xff]
  %v3287 = vld [vmem:[%s4 + $0x170] sm:$0xff]
  %3288 = vmatprep.subr.mxu0 %v3287
  %3289 = vmatpush1.msra.mxu0 %v3286
  %3290 = vmatprep.subr.mxu0 %v3285
  %3291 = vmatpush1.msra.mxu0 %v3284
  %3292 = vmatprep.subr.mxu0 %v3283
  %3293 = vmatpush1.msra.mxu0 %v3282
  %3294 = vmatprep.subr.mxu0 %v3281
  %3295 = vmatpush1.msra.mxu0 %v3280
  %3296 = vmatprep.subr.mxu0 %v3279
  %3297 = vmatpush1.msra.mxu0 %v3278
  %3298 = vmatprep.subr.mxu0 %v3277
  %3299 = vmatpush1.msra.mxu0 %v3276
  %3300 = vmatprep.subr.mxu0 %v3275
  %3301 = vmatpush1.msra.mxu0 %v3274
  %3302 = vmatprep.subr.mxu0 %v3273
  %3303 = vmatpush1.msra.mxu0 %v3272
  %3304 = vmatprep.subr.mxu0 %v3271
  %3305 = vmatpush1.msra.mxu0 %v3270
  %3306 = vmatprep.subr.mxu0 %v3269
  %3307 = vmatpush1.msra.mxu0 %v3268
  %3308 = vmatprep.subr.mxu0 %v3267
  %3309 = vmatpush1.msra.mxu0 %v3266
  %3310 = vmatprep.subr.mxu0 %v3265
  %3311 = vmatpush1.msra.mxu0 %v3264
  %3312 = vmatprep.subr.mxu0 %v3263
  %3313 = vmatpush1.msra.mxu0 %v3262
  %3314 = vmatprep.subr.mxu0 %v3261
  %3315 = vmatpush1.msra.mxu0 %v3260
  %3316 = vmatprep.subr.mxu0 %v3259
  %3317 = vmatpush1.msra.mxu0 %v3258
  %3318 = vmatprep.subr.mxu0 %v3257
  %3319 = vmatpush1.msra.mxu0 %v3256
  %3320 = vmatprep.subr.mxu0 0.0
  %3321 = vmatpush2.msra.mxu0 0.0
  %3322 = vmatprep.subr.mxu0 0.0
  %3323 = vmatpush2.msra.mxu0 0.0
  %3324 = vmatprep.subr.mxu0 0.0
  %3325 = vmatpush2.msra.mxu0 0.0
  %3326 = vmatprep.subr.mxu0 0.0
  %3327 = vmatpush2.msra.mxu0 0.0
  %3328 = vmatprep.subr.mxu0 0.0
  %3329 = vmatpush2.msra.mxu0 0.0
  %3330 = vmatprep.subr.mxu0 0.0
  %3331 = vmatpush2.msra.mxu0 0.0
  %3332 = vmatprep.subr.mxu0 0.0
  %3333 = vmatpush2.msra.mxu0 0.0
  %3334 = vmatprep.subr.mxu0 0.0
  %3335 = vmatpush2.msra.mxu0 0.0
  %3336 = vmatprep.subr.mxu0 0.0
  %3337 = vmatpush2.msra.mxu0 0.0
  %3338 = vmatprep.subr.mxu0 0.0
  %3339 = vmatpush2.msra.mxu0 0.0
  %3340 = vmatprep.subr.mxu0 0.0
  %3341 = vmatpush2.msra.mxu0 0.0
  %3342 = vmatprep.subr.mxu0 0.0
  %3343 = vmatpush2.msra.mxu0 0.0
  %3344 = vmatprep.subr.mxu0 0.0
  %3345 = vmatpush2.msra.mxu0 0.0
  %3346 = vmatprep.subr.mxu0 0.0
  %3347 = vmatpush2.msra.mxu0 0.0
  %3348 = vmatprep.subr.mxu0 0.0
  %3349 = vmatpush2.msra.mxu0 0.0
  %3350 = vmatprep.subr.mxu0 0.0
  %3351 = vmatpush2.msra.mxu0 0.0
  %3352 = vmatprep.mubr.f32.mxu0 0.0
  %3353 = vmatmul.mubr.f32.gmra.mxu0 %v3254
  %v3354 = vpop.f32.mrf.mxu0
  %v3355 = vadd.f32 0.0, %v3354
  %v3356 = vpop.f32.mrf.mxu0
  %v3357 = vadd.f32 0.0, %v3356
  %3358 = vmatprep.mubr.f32.mxu0 0.0
  %3359 = vmatmul.mubr.f32.gmra.mxu0 %v3255
  %v3360 = vpop.f32.mrf.mxu0
  %v3361 = vadd.f32 0.0, %v3360
  %v3362 = vpop.f32.mrf.mxu0
  %v3363 = vadd.f32 0.0, %v3362
  %3364 = vdwg.mxu0
  %v3367 = vrot.slane %v3355, 6
  %v3368 = vrot.slane %v3361, 6
  %v3369 = vsel %vm279, %v3367, %v3368
  %3370 = vrot.lane.b32.xlu0 %v3367, 64
  %v3371 = vpop.permute.xlu0 %3370
  %3372 = vrot.lane.b32.xlu0 %v3369, 64
  %v3373 = vpop.permute.xlu0 %3372
  %v3378 = vrot.slane %v3357, 4
  %v3379 = vrot.slane %v3363, 4
  %v3380 = vsel %vm311, %v3378, %v3379
  %v3383 = vrot.slane %v3357, 2
  %v3384 = vrot.slane %v3363, 2
  %v3385 = vsel %vm342, %v3383, %v3384
  %3386 = vrot.lane.b32.xlu0 %v3383, 64
  %v3387 = vpop.permute.xlu0 %3386
  %3388 = vrot.lane.b32.xlu0 %v3385, 64
  %v3389 = vpop.permute.xlu0 %3388
  %v3392 = vsel %vm279, %v3361, %v3371
  %v3393 = vsel %vm311, %v3373, %v3378
  %v3394 = vsel %vm342, %v3380, %v3387
  %v3395 = vld [vmem:[%s1 + $0x100] sm:$0xff]
  %v3396 = vld [vmem:[%s1 + $0x108] sm:$0xff]
  %v3397 = vld [vmem:[%s1 + $0x110] sm:$0xff]
  %v3398 = vld [vmem:[%s6 + $0x51] ss:$0 sm:$0xff]
  %vm3399 = vcmask 326656
  %v3401 = vsel %vm3399, %v3395, 0
  %v3404 = vsel %vm3399, %v3396, 0
  %v3407 = vsel %vm3399, %v3397, 0
  %3409 = vmatprep.subr.mxu0 0.0
  %3410 = vmatpush1.msra.mxu0 0.0
  %3411 = vmatprep.subr.mxu0 0.0
  %3412 = vmatpush1.msra.mxu0 0.0
  %3413 = vmatprep.subr.mxu0 0.0
  %3414 = vmatpush1.msra.mxu0 0.0
  %3415 = vmatprep.subr.mxu0 0.0
  %3416 = vmatpush1.msra.mxu0 0.0
  %3417 = vmatprep.subr.mxu0 0.0
  %3418 = vmatpush1.msra.mxu0 0.0
  %3419 = vmatprep.subr.mxu0 0.0
  %3420 = vmatpush1.msra.mxu0 0.0
  %3421 = vmatprep.subr.mxu0 0.0
  %3422 = vmatpush1.msra.mxu0 0.0
  %3423 = vmatprep.subr.mxu0 0.0
  %3424 = vmatpush1.msra.mxu0 0.0
  %3425 = vmatprep.subr.mxu0 0.0
  %3426 = vmatpush1.msra.mxu0 0.0
  %3427 = vmatprep.subr.mxu0 0.0
  %3428 = vmatpush1.msra.mxu0 0.0
  %3429 = vmatprep.subr.mxu0 0.0
  %3430 = vmatpush1.msra.mxu0 0.0
  %3431 = vmatprep.subr.mxu0 0.0
  %3432 = vmatpush1.msra.mxu0 %v3389
  %3433 = vmatprep.subr.mxu0 0.0
  %3434 = vmatpush1.msra.mxu0 %v3394
  %3435 = vmatprep.subr.mxu0 0.0
  %3436 = vmatpush1.msra.mxu0 %v3393
  %3437 = vmatprep.subr.mxu0 0.0
  %3438 = vmatpush1.msra.mxu0 %v3392
  %3439 = vmatprep.subr.mxu0 0.0
  %3440 = vmatpush1.msra.mxu0 %v3355
  %3441 = vmatprep.subr.mxu0 0.0
  %3442 = vmatpush2.msra.mxu0 0.0
  %3443 = vmatprep.subr.mxu0 0.0
  %3444 = vmatpush2.msra.mxu0 0.0
  %3445 = vmatprep.subr.mxu0 0.0
  %3446 = vmatpush2.msra.mxu0 0.0
  %3447 = vmatprep.subr.mxu0 0.0
  %3448 = vmatpush2.msra.mxu0 0.0
  %3449 = vmatprep.subr.mxu0 0.0
  %3450 = vmatpush2.msra.mxu0 0.0
  %3451 = vmatprep.subr.mxu0 0.0
  %3452 = vmatpush2.msra.mxu0 0.0
  %3453 = vmatprep.subr.mxu0 0.0
  %3454 = vmatpush2.msra.mxu0 0.0
  %3455 = vmatprep.subr.mxu0 0.0
  %3456 = vmatpush2.msra.mxu0 0.0
  %3457 = vmatprep.subr.mxu0 0.0
  %3458 = vmatpush2.msra.mxu0 0.0
  %3459 = vmatprep.subr.mxu0 0.0
  %3460 = vmatpush2.msra.mxu0 0.0
  %3461 = vmatprep.subr.mxu0 0.0
  %3462 = vmatpush2.msra.mxu0 0.0
  %3463 = vmatprep.subr.mxu0 0.0
  %3464 = vmatpush2.msra.mxu0 0.0
  %3465 = vmatprep.subr.mxu0 0.0
  %3466 = vmatpush2.msra.mxu0 0.0
  %3467 = vmatprep.subr.mxu0 0.0
  %3468 = vmatpush2.msra.mxu0 0.0
  %3469 = vmatprep.subr.mxu0 0.0
  %3470 = vmatpush2.msra.mxu0 0.0
  %3471 = vmatprep.subr.mxu0 0.0
  %3472 = vmatpush2.msra.mxu0 0.0
  %3473 = vmatprep.mubr.f32.mxu0 0.0
  %3474 = vmatmul.mubr.f32.gmra.mxu0 %v3401
  %v3475 = vpop.f32.mrf.mxu0
  %v3476 = vadd.f32 %v3398, %v3475
  %v3477 = vpop.f32.mrf.mxu0
  %3478 = vmatprep.mubr.f32.mxu0 0.0
  %3479 = vmatmul.mubr.f32.gmra.mxu0 %v3404
  %v3480 = vpop.f32.mrf.mxu0
  %v3481 = vadd.f32 %v3398, %v3480
  %v3482 = vpop.f32.mrf.mxu0
  %3483 = vmatprep.mubr.f32.mxu0 0.0
  %3484 = vmatmul.mubr.f32.gmra.mxu0 %v3407
  %v3485 = vpop.f32.mrf.mxu0
  %v3486 = vadd.f32 %v3398, %v3485
  %v3487 = vpop.f32.mrf.mxu0
  %3488 = vdwg.mxu0
  %v3489 = vsel %vm723, %v3476, 0.0
  %v3490 = vsel %vm723, %v3481, 0.0
  %v3491 = vadd.f32 %v3489, %v3490
  %v3492 = vsel %vm723, %v3486, 0.0
  %v3493 = vadd.f32 %v3491, %v3492
  %v3494 = vrot.slane %v3493, 4
  %v3495 = vadd.f32 %v3493, %v3494
  %v3496 = vrot.slane %v3495, 2
  %v3497 = vadd.f32 %v3495, %v3496
  %v3498 = vrot.slane %v3497, 1
  %v3499 = vadd.f32 %v3497, %v3498
  %v3500 = vrcp.pop 24.0
  %v3501 = vmul.f32 %v3499, %v3500
  %v3502 = vsub.f32 %v3476, %v3501
  %v3503 = vsub.f32 %v3481, %v3501
  %v3504 = vsub.f32 %v3486, %v3501
  %v3505 = vmul.f32 %v3502, %v3502
  %v3506 = vmul.f32 %v3503, %v3503
  %v3507 = vmul.f32 %v3504, %v3504
  %v3508 = vsel %vm723, %v3505, 0.0
  %v3509 = vsel %vm723, %v3506, 0.0
  %v3510 = vadd.f32 %v3508, %v3509
  %v3511 = vsel %vm723, %v3507, 0.0
  %v3512 = vadd.f32 %v3510, %v3511
  %v3513 = vrot.slane %v3512, 4
  %v3514 = vadd.f32 %v3512, %v3513
  %v3515 = vrot.slane %v3514, 2
  %v3516 = vadd.f32 %v3514, %v3515
  %v3517 = vrot.slane %v3516, 1
  %v3518 = vadd.f32 %v3516, %v3517
  %v3519 = vmul.f32 %v3518, %v3500
  %v3520 = vadd.f32 %v3519, 1e-05
  %v3521 = vrsqrt.pop %v3520
  %v3522 = vld [vmem:[%s6 + $0x52] ss:$0 sm:$0xff]
  %v3523 = vmul.f32 %v3521, %v3522
  %v3524 = vmul.f32 %v3502, %v3523
  %v3525 = vmul.f32 %v3503, %v3523
  %v3526 = vmul.f32 %v3504, %v3523
  %v3527 = vld [vmem:[%s6 + $0x53] ss:$0 sm:$0xff]
  %v3528 = vadd.f32 %v3524, %v3527
  %v3529 = vadd.f32 %v3525, %v3527
  %v3530 = vadd.f32 %v3526, %v3527
  %v3531 = vld [vmem:[%s3 + $0x188] sm:$0xff]
  %v3532 = vld [vmem:[%s3 + $0x190] sm:$0xff]
  %v3533 = vld [vmem:[%s3 + $0x198] sm:$0xff]
  %v3534 = vld [vmem:[%s3 + $0x1a0] sm:$0xff]
  %v3535 = vld [vmem:[%s3 + $0x1a8] sm:$0xff]
  %v3536 = vld [vmem:[%s3 + $0x1b0] sm:$0xff]
  %v3537 = vld [vmem:[%s3 + $0x1b8] sm:$0xff]
  %v3538 = vld [vmem:[%s3 + $0x1c0] sm:$0xff]
  %v3540 = vsel %vm723, %v3528, 0
  %v3543 = vsel %vm723, %v3529, 0
  %v3546 = vsel %vm723, %v3530, 0
  %3548 = vmatprep.subr.mxu0 0.0
  %3549 = vmatpush1.msra.mxu0 0.0
  %3550 = vmatprep.subr.mxu0 0.0
  %3551 = vmatpush1.msra.mxu0 0.0
  %3552 = vmatprep.subr.mxu0 0.0
  %3553 = vmatpush1.msra.mxu0 0.0
  %3554 = vmatprep.subr.mxu0 0.0
  %3555 = vmatpush1.msra.mxu0 0.0
  %3556 = vmatprep.subr.mxu0 0.0
  %3557 = vmatpush1.msra.mxu0 0.0
  %3558 = vmatprep.subr.mxu0 0.0
  %3559 = vmatpush1.msra.mxu0 0.0
  %3560 = vmatprep.subr.mxu0 0.0
  %3561 = vmatpush1.msra.mxu0 0.0
  %3562 = vmatprep.subr.mxu0 0.0
  %3563 = vmatpush1.msra.mxu0 0.0
  %3564 = vmatprep.subr.mxu0 0.0
  %3565 = vmatpush1.msra.mxu0 %v3538
  %3566 = vmatprep.subr.mxu0 0.0
  %3567 = vmatpush1.msra.mxu0 %v3537
  %3568 = vmatprep.subr.mxu0 0.0
  %3569 = vmatpush1.msra.mxu0 %v3536
  %3570 = vmatprep.subr.mxu0 0.0
  %3571 = vmatpush1.msra.mxu0 %v3535
  %3572 = vmatprep.subr.mxu0 0.0
  %3573 = vmatpush1.msra.mxu0 %v3534
  %3574 = vmatprep.subr.mxu0 0.0
  %3575 = vmatpush1.msra.mxu0 %v3533
  %3576 = vmatprep.subr.mxu0 0.0
  %3577 = vmatpush1.msra.mxu0 %v3532
  %3578 = vmatprep.subr.mxu0 0.0
  %3579 = vmatpush1.msra.mxu0 %v3531
  %3580 = vmatprep.subr.mxu0 0.0
  %3581 = vmatpush2.msra.mxu0 0.0
  %3582 = vmatprep.subr.mxu0 0.0
  %3583 = vmatpush2.msra.mxu0 0.0
  %3584 = vmatprep.subr.mxu0 0.0
  %3585 = vmatpush2.msra.mxu0 0.0
  %3586 = vmatprep.subr.mxu0 0.0
  %3587 = vmatpush2.msra.mxu0 0.0
  %3588 = vmatprep.subr.mxu0 0.0
  %3589 = vmatpush2.msra.mxu0 0.0
  %3590 = vmatprep.subr.mxu0 0.0
  %3591 = vmatpush2.msra.mxu0 0.0
  %3592 = vmatprep.subr.mxu0 0.0
  %3593 = vmatpush2.msra.mxu0 0.0
  %3594 = vmatprep.subr.mxu0 0.0
  %3595 = vmatpush2.msra.mxu0 0.0
  %3596 = vmatprep.subr.mxu0 0.0
  %3597 = vmatpush2.msra.mxu0 0.0
  %3598 = vmatprep.subr.mxu0 0.0
  %3599 = vmatpush2.msra.mxu0 0.0
  %3600 = vmatprep.subr.mxu0 0.0
  %3601 = vmatpush2.msra.mxu0 0.0
  %3602 = vmatprep.subr.mxu0 0.0
  %3603 = vmatpush2.msra.mxu0 0.0
  %3604 = vmatprep.subr.mxu0 0.0
  %3605 = vmatpush2.msra.mxu0 0.0
  %3606 = vmatprep.subr.mxu0 0.0
  %3607 = vmatpush2.msra.mxu0 0.0
  %3608 = vmatprep.subr.mxu0 0.0
  %3609 = vmatpush2.msra.mxu0 0.0
  %3610 = vmatprep.subr.mxu0 0.0
  %3611 = vmatpush2.msra.mxu0 0.0
  %3612 = vmatprep.mubr.f32.mxu0 0.0
  %3613 = vmatmul.mubr.f32.gmra.mxu0 %v3540
  %v3614 = vpop.f32.mrf.mxu0
  %v3615 = vadd.f32 0.0, %v3614
  %v3616 = vpop.f32.mrf.mxu0
  %3617 = vmatprep.mubr.f32.mxu0 0.0
  %3618 = vmatmul.mubr.f32.gmra.mxu0 %v3543
  %v3619 = vpop.f32.mrf.mxu0
  %v3620 = vadd.f32 0.0, %v3619
  %v3621 = vpop.f32.mrf.mxu0
  %3622 = vmatprep.mubr.f32.mxu0 0.0
  %3623 = vmatmul.mubr.f32.gmra.mxu0 %v3546
  %v3624 = vpop.f32.mrf.mxu0
  %v3625 = vadd.f32 0.0, %v3624
  %v3626 = vpop.f32.mrf.mxu0
  %3627 = vdwg.mxu0
  %3631 = vrot.lane.b32.xlu0 %v3615, 96
  %v3632 = vpop.permute.xlu0 %3631
  %3633 = vrot.lane.b32.xlu0 %v3620, 96
  %v3634 = vpop.permute.xlu0 %3633
  %3635 = vrot.lane.b32.xlu0 %v3625, 96
  %v3636 = vpop.permute.xlu0 %3635
  %3640 = vrot.lane.b32.xlu0 %v3615, 64
  %v3641 = vpop.permute.xlu0 %3640
  %3642 = vrot.lane.b32.xlu0 %v3620, 64
  %v3643 = vpop.permute.xlu0 %3642
  %3644 = vrot.lane.b32.xlu0 %v3625, 64
  %v3645 = vpop.permute.xlu0 %3644
  %3649 = vrot.lane.b32.xlu0 %v3615, 32
  %v3650 = vpop.permute.xlu0 %3649
  %3651 = vrot.lane.b32.xlu0 %v3620, 32
  %v3652 = vpop.permute.xlu0 %3651
  %3653 = vrot.lane.b32.xlu0 %v3625, 32
  %v3654 = vpop.permute.xlu0 %3653
  %v3658 = vld [vmem:[%s1 + $0x118] sm:$0xff]
  %v3659 = vld [vmem:[%s1 + $0x120] sm:$0xff]
  %v3660 = vld [vmem:[%s1 + $0x128] sm:$0xff]
  %v3661 = vld [vmem:[%s1 + $0x130] sm:$0xff]
  %v3662 = vld [vmem:[%s1 + $0x138] sm:$0xff]
  %v3663 = vld [vmem:[%s1 + $0x140] sm:$0xff]
  %v3664 = vld [vmem:[%s1 + $0x148] sm:$0xff]
  %v3665 = vld [vmem:[%s1 + $0x150] sm:$0xff]
  %v3666 = vld [vmem:[%s1 + $0x158] sm:$0xff]
  %v3667 = vld [vmem:[%s1 + $0x160] sm:$0x3]
  %v3668 = vld [vmem:[%s6 + $0x54] ss:$0 sm:$0xff]
  %v3670 = vsel %vm726, %v3658, 0
  %v3673 = vsel %vm726, %v3659, 0
  %v3676 = vsel %vm726, %v3660, 0
  %v3679 = vsel %vm726, %v3661, 0
  %v3682 = vsel %vm726, %v3662, 0
  %v3685 = vsel %vm726, %v3663, 0
  %v3688 = vsel %vm726, %v3664, 0
  %v3691 = vsel %vm726, %v3665, 0
  %v3694 = vsel %vm726, %v3666, 0
  %v3697 = vsel %vm726, %v3667, 0
  %3699 = vmatprep.subr.mxu0 0.0
  %3700 = vmatpush1.msra.mxu0 0.0
  %3701 = vmatprep.subr.mxu0 0.0
  %3702 = vmatpush1.msra.mxu0 0.0
  %3703 = vmatprep.subr.mxu0 0.0
  %3704 = vmatpush1.msra.mxu0 0.0
  %3705 = vmatprep.subr.mxu0 0.0
  %3706 = vmatpush1.msra.mxu0 0.0
  %3707 = vmatprep.subr.mxu0 0.0
  %3708 = vmatpush1.msra.mxu0 %v3654
  %3709 = vmatprep.subr.mxu0 0.0
  %3710 = vmatpush1.msra.mxu0 %v3652
  %3711 = vmatprep.subr.mxu0 0.0
  %3712 = vmatpush1.msra.mxu0 %v3650
  %3713 = vmatprep.subr.mxu0 0.0
  %3714 = vmatpush1.msra.mxu0 %v3645
  %3715 = vmatprep.subr.mxu0 0.0
  %3716 = vmatpush1.msra.mxu0 %v3643
  %3717 = vmatprep.subr.mxu0 0.0
  %3718 = vmatpush1.msra.mxu0 %v3641
  %3719 = vmatprep.subr.mxu0 0.0
  %3720 = vmatpush1.msra.mxu0 %v3636
  %3721 = vmatprep.subr.mxu0 0.0
  %3722 = vmatpush1.msra.mxu0 %v3634
  %3723 = vmatprep.subr.mxu0 0.0
  %3724 = vmatpush1.msra.mxu0 %v3632
  %3725 = vmatprep.subr.mxu0 0.0
  %3726 = vmatpush1.msra.mxu0 %v3625
  %3727 = vmatprep.subr.mxu0 0.0
  %3728 = vmatpush1.msra.mxu0 %v3620
  %3729 = vmatprep.subr.mxu0 0.0
  %3730 = vmatpush1.msra.mxu0 %v3615
  %3731 = vmatprep.subr.mxu0 0.0
  %3732 = vmatpush2.msra.mxu0 0.0
  %3733 = vmatprep.subr.mxu0 0.0
  %3734 = vmatpush2.msra.mxu0 0.0
  %3735 = vmatprep.subr.mxu0 0.0
  %3736 = vmatpush2.msra.mxu0 0.0
  %3737 = vmatprep.subr.mxu0 0.0
  %3738 = vmatpush2.msra.mxu0 0.0
  %3739 = vmatprep.subr.mxu0 0.0
  %3740 = vmatpush2.msra.mxu0 0.0
  %3741 = vmatprep.subr.mxu0 0.0
  %3742 = vmatpush2.msra.mxu0 0.0
  %3743 = vmatprep.subr.mxu0 0.0
  %3744 = vmatpush2.msra.mxu0 0.0
  %3745 = vmatprep.subr.mxu0 0.0
  %3746 = vmatpush2.msra.mxu0 0.0
  %3747 = vmatprep.subr.mxu0 0.0
  %3748 = vmatpush2.msra.mxu0 0.0
  %3749 = vmatprep.subr.mxu0 0.0
  %3750 = vmatpush2.msra.mxu0 0.0
  %3751 = vmatprep.subr.mxu0 0.0
  %3752 = vmatpush2.msra.mxu0 0.0
  %3753 = vmatprep.subr.mxu0 0.0
  %3754 = vmatpush2.msra.mxu0 0.0
  %3755 = vmatprep.subr.mxu0 0.0
  %3756 = vmatpush2.msra.mxu0 0.0
  %3757 = vmatprep.subr.mxu0 0.0
  %3758 = vmatpush2.msra.mxu0 0.0
  %3759 = vmatprep.subr.mxu0 0.0
  %3760 = vmatpush2.msra.mxu0 0.0
  %3761 = vmatprep.subr.mxu0 0.0
  %3762 = vmatpush2.msra.mxu0 0.0
  %3763 = vmatprep.mubr.f32.mxu0 0.0
  %3764 = vmatmul.mubr.f32.gmra.mxu0 %v3670
  %v3765 = vpop.f32.mrf.mxu0
  %v3766 = vadd.f32 %v3668, %v3765
  %v3767 = vpop.f32.mrf.mxu0
  %3768 = vmatprep.mubr.f32.mxu0 0.0
  %3769 = vmatmul.mubr.f32.gmra.mxu0 %v3673
  %v3770 = vpop.f32.mrf.mxu0
  %v3771 = vadd.f32 %v3668, %v3770
  %v3772 = vpop.f32.mrf.mxu0
  %3773 = vmatprep.mubr.f32.mxu0 0.0
  %3774 = vmatmul.mubr.f32.gmra.mxu0 %v3676
  %v3775 = vpop.f32.mrf.mxu0
  %v3776 = vadd.f32 %v3668, %v3775
  %v3777 = vpop.f32.mrf.mxu0
  %3778 = vmatprep.mubr.f32.mxu0 0.0
  %3779 = vmatmul.mubr.f32.gmra.mxu0 %v3679
  %v3780 = vpop.f32.mrf.mxu0
  %v3781 = vadd.f32 %v3668, %v3780
  %v3782 = vpop.f32.mrf.mxu0
  %3783 = vmatprep.mubr.f32.mxu0 0.0
  %3784 = vmatmul.mubr.f32.gmra.mxu0 %v3682
  %v3785 = vpop.f32.mrf.mxu0
  %v3786 = vadd.f32 %v3668, %v3785
  %v3787 = vpop.f32.mrf.mxu0
  %3788 = vmatprep.mubr.f32.mxu0 0.0
  %3789 = vmatmul.mubr.f32.gmra.mxu0 %v3685
  %v3790 = vpop.f32.mrf.mxu0
  %v3791 = vadd.f32 %v3668, %v3790
  %v3792 = vpop.f32.mrf.mxu0
  %3793 = vmatprep.mubr.f32.mxu0 0.0
  %3794 = vmatmul.mubr.f32.gmra.mxu0 %v3688
  %v3795 = vpop.f32.mrf.mxu0
  %v3796 = vadd.f32 %v3668, %v3795
  %v3797 = vpop.f32.mrf.mxu0
  %3798 = vmatprep.mubr.f32.mxu0 0.0
  %3799 = vmatmul.mubr.f32.gmra.mxu0 %v3691
  %v3800 = vpop.f32.mrf.mxu0
  %v3801 = vadd.f32 %v3668, %v3800
  %v3802 = vpop.f32.mrf.mxu0
  %3803 = vmatprep.mubr.f32.mxu0 0.0
  %3804 = vmatmul.mubr.f32.gmra.mxu0 %v3694
  %v3805 = vpop.f32.mrf.mxu0
  %v3806 = vadd.f32 %v3668, %v3805
  %v3807 = vpop.f32.mrf.mxu0
  %3808 = vmatprep.mubr.f32.mxu0 0.0
  %3809 = vmatmul.mubr.f32.gmra.mxu0 %v3697
  %v3810 = vpop.f32.mrf.mxu0
  %v3811 = vadd.f32 %v3668, %v3810
  %v3812 = vpop.f32.mrf.mxu0
  %3813 = vdwg.mxu0
  %v3814 = vsel %vm496, %v3766, 0.0
  %v3815 = vsel %vm496, %v3771, 0.0
  %v3816 = vadd.f32 %v3814, %v3815
  %v3817 = vsel %vm496, %v3776, 0.0
  %v3818 = vadd.f32 %v3816, %v3817
  %v3819 = vsel %vm496, %v3781, 0.0
  %v3820 = vadd.f32 %v3818, %v3819
  %v3821 = vsel %vm496, %v3786, 0.0
  %v3822 = vadd.f32 %v3820, %v3821
  %v3823 = vsel %vm496, %v3791, 0.0
  %v3824 = vadd.f32 %v3822, %v3823
  %v3825 = vsel %vm496, %v3796, 0.0
  %v3826 = vadd.f32 %v3824, %v3825
  %v3827 = vsel %vm496, %v3801, 0.0
  %v3828 = vadd.f32 %v3826, %v3827
  %v3829 = vsel %vm496, %v3806, 0.0
  %v3830 = vadd.f32 %v3828, %v3829
  %vm3831 = vcmask 254976
  %v3832 = vsel %vm3831, %v3811, 0.0
  %v3833 = vadd.f32 %v3830, %v3832
  %v3834 = vrot.slane %v3833, 4
  %v3835 = vadd.f32 %v3833, %v3834
  %v3836 = vrot.slane %v3835, 2
  %v3837 = vadd.f32 %v3835, %v3836
  %v3838 = vrot.slane %v3837, 1
  %v3839 = vadd.f32 %v3837, %v3838
  %v3840 = vrcp.pop 74.0
  %v3841 = vmul.f32 %v3839, %v3840
  %v3842 = vsub.f32 %v3766, %v3841
  %v3843 = vsub.f32 %v3771, %v3841
  %v3844 = vsub.f32 %v3776, %v3841
  %v3845 = vsub.f32 %v3781, %v3841
  %v3846 = vsub.f32 %v3786, %v3841
  %v3847 = vsub.f32 %v3791, %v3841
  %v3848 = vsub.f32 %v3796, %v3841
  %v3849 = vsub.f32 %v3801, %v3841
  %v3850 = vsub.f32 %v3806, %v3841
  %v3851 = vsub.f32 %v3811, %v3841
  %v3852 = vmul.f32 %v3842, %v3842
  %v3853 = vmul.f32 %v3843, %v3843
  %v3854 = vmul.f32 %v3844, %v3844
  %v3855 = vmul.f32 %v3845, %v3845
  %v3856 = vmul.f32 %v3846, %v3846
  %v3857 = vmul.f32 %v3847, %v3847
  %v3858 = vmul.f32 %v3848, %v3848
  %v3859 = vmul.f32 %v3849, %v3849
  %v3860 = vmul.f32 %v3850, %v3850
  %v3861 = vmul.f32 %v3851, %v3851
  %v3862 = vsel %vm496, %v3852, 0.0
  %v3863 = vsel %vm496, %v3853, 0.0
  %v3864 = vadd.f32 %v3862, %v3863
  %v3865 = vsel %vm496, %v3854, 0.0
  %v3866 = vadd.f32 %v3864, %v3865
  %v3867 = vsel %vm496, %v3855, 0.0
  %v3868 = vadd.f32 %v3866, %v3867
  %v3869 = vsel %vm496, %v3856, 0.0
  %v3870 = vadd.f32 %v3868, %v3869
  %v3871 = vsel %vm496, %v3857, 0.0
  %v3872 = vadd.f32 %v3870, %v3871
  %v3873 = vsel %vm496, %v3858, 0.0
  %v3874 = vadd.f32 %v3872, %v3873
  %v3875 = vsel %vm496, %v3859, 0.0
  %v3876 = vadd.f32 %v3874, %v3875
  %v3877 = vsel %vm496, %v3860, 0.0
  %v3878 = vadd.f32 %v3876, %v3877
  %v3879 = vsel %vm3831, %v3861, 0.0
  %v3880 = vadd.f32 %v3878, %v3879
  %v3881 = vrot.slane %v3880, 4
  %v3882 = vadd.f32 %v3880, %v3881
  %v3883 = vrot.slane %v3882, 2
  %v3884 = vadd.f32 %v3882, %v3883
  %v3885 = vrot.slane %v3884, 1
  %v3886 = vadd.f32 %v3884, %v3885
  %v3887 = vmul.f32 %v3886, %v3840
  %v3888 = vadd.f32 %v3887, 1e-05
  %v3889 = vrsqrt.pop %v3888
  %v3890 = vld [vmem:[%s6 + $0x55] ss:$0 sm:$0xff]
  %v3891 = vmul.f32 %v3889, %v3890
  %v3892 = vmul.f32 %v3842, %v3891
  %v3893 = vmul.f32 %v3843, %v3891
  %v3894 = vmul.f32 %v3844, %v3891
  %v3895 = vmul.f32 %v3845, %v3891
  %v3896 = vmul.f32 %v3846, %v3891
  %v3897 = vmul.f32 %v3847, %v3891
  %v3898 = vmul.f32 %v3848, %v3891
  %v3899 = vmul.f32 %v3849, %v3891
  %v3900 = vmul.f32 %v3850, %v3891
  %v3901 = vmul.f32 %v3851, %v3891
  %v3902 = vld [vmem:[%s6 + $0x56] ss:$0 sm:$0xff]
  %v3903 = vadd.f32 %v3892, %v3902
  %v3904 = vadd.f32 %v3893, %v3902
  %v3905 = vadd.f32 %v3894, %v3902
  %v3906 = vadd.f32 %v3895, %v3902
  %v3907 = vadd.f32 %v3896, %v3902
  %v3908 = vadd.f32 %v3897, %v3902
  %v3909 = vadd.f32 %v3898, %v3902
  %v3910 = vadd.f32 %v3899, %v3902
  %v3911 = vadd.f32 %v3900, %v3902
  %v3912 = vadd.f32 %v3901, %v3902
  %v3913 = vld [vmem:[%s3 + $0x1c8] sm:$0xff]
  %v3914 = vld [vmem:[%s3 + $0x1d0] sm:$0xff]
  %v3915 = vld [vmem:[%s3 + $0x1d8] sm:$0xff]
  %v3916 = vld [vmem:[%s3 + $0x1e0] sm:$0xff]
  %v3918 = vsel %vm496, %v3903, 0
  %v3921 = vsel %vm496, %v3904, 0
  %v3924 = vsel %vm496, %v3905, 0
  %v3927 = vsel %vm496, %v3906, 0
  %v3930 = vsel %vm496, %v3907, 0
  %v3933 = vsel %vm496, %v3908, 0
  %v3936 = vsel %vm496, %v3909, 0
  %v3939 = vsel %vm496, %v3910, 0
  %v3942 = vsel %vm496, %v3911, 0
  %v3945 = vsel %vm496, %v3912, 0
  %3947 = vmatprep.subr.mxu0 0.0
  %3948 = vmatpush1.msra.mxu0 0.0
  %3949 = vmatprep.subr.mxu0 0.0
  %3950 = vmatpush1.msra.mxu0 0.0
  %3951 = vmatprep.subr.mxu0 0.0
  %3952 = vmatpush1.msra.mxu0 0.0
  %3953 = vmatprep.subr.mxu0 0.0
  %3954 = vmatpush1.msra.mxu0 0.0
  %3955 = vmatprep.subr.mxu0 0.0
  %3956 = vmatpush1.msra.mxu0 0.0
  %3957 = vmatprep.subr.mxu0 0.0
  %3958 = vmatpush1.msra.mxu0 0.0
  %3959 = vmatprep.subr.mxu0 0.0
  %3960 = vmatpush1.msra.mxu0 0.0
  %3961 = vmatprep.subr.mxu0 0.0
  %3962 = vmatpush1.msra.mxu0 0.0
  %3963 = vmatprep.subr.mxu0 0.0
  %3964 = vmatpush1.msra.mxu0 0.0
  %3965 = vmatprep.subr.mxu0 0.0
  %3966 = vmatpush1.msra.mxu0 0.0
  %3967 = vmatprep.subr.mxu0 0.0
  %3968 = vmatpush1.msra.mxu0 0.0
  %3969 = vmatprep.subr.mxu0 0.0
  %3970 = vmatpush1.msra.mxu0 0.0
  %3971 = vmatprep.subr.mxu0 0.0
  %3972 = vmatpush1.msra.mxu0 %v3916
  %3973 = vmatprep.subr.mxu0 0.0
  %3974 = vmatpush1.msra.mxu0 %v3915
  %3975 = vmatprep.subr.mxu0 0.0
  %3976 = vmatpush1.msra.mxu0 %v3914
  %3977 = vmatprep.subr.mxu0 0.0
  %3978 = vmatpush1.msra.mxu0 %v3913
  %3979 = vmatprep.subr.mxu0 0.0
  %3980 = vmatpush2.msra.mxu0 0.0
  %3981 = vmatprep.subr.mxu0 0.0
  %3982 = vmatpush2.msra.mxu0 0.0
  %3983 = vmatprep.subr.mxu0 0.0
  %3984 = vmatpush2.msra.mxu0 0.0
  %3985 = vmatprep.subr.mxu0 0.0
  %3986 = vmatpush2.msra.mxu0 0.0
  %3987 = vmatprep.subr.mxu0 0.0
  %3988 = vmatpush2.msra.mxu0 0.0
  %3989 = vmatprep.subr.mxu0 0.0
  %3990 = vmatpush2.msra.mxu0 0.0
  %3991 = vmatprep.subr.mxu0 0.0
  %3992 = vmatpush2.msra.mxu0 0.0
  %3993 = vmatprep.subr.mxu0 0.0
  %3994 = vmatpush2.msra.mxu0 0.0
  %3995 = vmatprep.subr.mxu0 0.0
  %3996 = vmatpush2.msra.mxu0 0.0
  %3997 = vmatprep.subr.mxu0 0.0
  %3998 = vmatpush2.msra.mxu0 0.0
  %3999 = vmatprep.subr.mxu0 0.0
  %4000 = vmatpush2.msra.mxu0 0.0
  %4001 = vmatprep.subr.mxu0 0.0
  %4002 = vmatpush2.msra.mxu0 0.0
  %4003 = vmatprep.subr.mxu0 0.0
  %4004 = vmatpush2.msra.mxu0 0.0
  %4005 = vmatprep.subr.mxu0 0.0
  %4006 = vmatpush2.msra.mxu0 0.0
  %4007 = vmatprep.subr.mxu0 0.0
  %4008 = vmatpush2.msra.mxu0 0.0
  %4009 = vmatprep.subr.mxu0 0.0
  %4010 = vmatpush2.msra.mxu0 0.0
  %4011 = vmatprep.mubr.f32.mxu0 0.0
  %4012 = vmatmul.mubr.f32.gmra.mxu0 %v3918
  %v4013 = vpop.f32.mrf.mxu0
  %v4014 = vadd.f32 0.0, %v4013
  %v4015 = vpop.f32.mrf.mxu0
  %4016 = vmatprep.mubr.f32.mxu0 0.0
  %4017 = vmatmul.mubr.f32.gmra.mxu0 %v3921
  %v4018 = vpop.f32.mrf.mxu0
  %v4019 = vadd.f32 0.0, %v4018
  %v4020 = vpop.f32.mrf.mxu0
  %4021 = vmatprep.mubr.f32.mxu0 0.0
  %4022 = vmatmul.mubr.f32.gmra.mxu0 %v3924
  %v4023 = vpop.f32.mrf.mxu0
  %v4024 = vadd.f32 0.0, %v4023
  %v4025 = vpop.f32.mrf.mxu0
  %4026 = vmatprep.mubr.f32.mxu0 0.0
  %4027 = vmatmul.mubr.f32.gmra.mxu0 %v3927
  %v4028 = vpop.f32.mrf.mxu0
  %v4029 = vadd.f32 0.0, %v4028
  %v4030 = vpop.f32.mrf.mxu0
  %4031 = vmatprep.mubr.f32.mxu0 0.0
  %4032 = vmatmul.mubr.f32.gmra.mxu0 %v3930
  %v4033 = vpop.f32.mrf.mxu0
  %v4034 = vadd.f32 0.0, %v4033
  %v4035 = vpop.f32.mrf.mxu0
  %4036 = vmatprep.mubr.f32.mxu0 0.0
  %4037 = vmatmul.mubr.f32.gmra.mxu0 %v3933
  %v4038 = vpop.f32.mrf.mxu0
  %v4039 = vadd.f32 0.0, %v4038
  %v4040 = vpop.f32.mrf.mxu0
  %4041 = vmatprep.mubr.f32.mxu0 0.0
  %4042 = vmatmul.mubr.f32.gmra.mxu0 %v3936
  %v4043 = vpop.f32.mrf.mxu0
  %v4044 = vadd.f32 0.0, %v4043
  %v4045 = vpop.f32.mrf.mxu0
  %4046 = vmatprep.mubr.f32.mxu0 0.0
  %4047 = vmatmul.mubr.f32.gmra.mxu0 %v3939
  %v4048 = vpop.f32.mrf.mxu0
  %v4049 = vadd.f32 0.0, %v4048
  %v4050 = vpop.f32.mrf.mxu0
  %4051 = vmatprep.mubr.f32.mxu0 0.0
  %4052 = vmatmul.mubr.f32.gmra.mxu0 %v3942
  %v4053 = vpop.f32.mrf.mxu0
  %v4054 = vadd.f32 0.0, %v4053
  %v4055 = vpop.f32.mrf.mxu0
  %4056 = vmatprep.mubr.f32.mxu0 0.0
  %4057 = vmatmul.mubr.f32.gmra.mxu0 %v3945
  %v4058 = vpop.f32.mrf.mxu0
  %v4059 = vadd.f32 0.0, %v4058
  %v4060 = vpop.f32.mrf.mxu0
  %4061 = vdwg.mxu0
  %v4072 = vrot.slane %v4014, 6
  %v4073 = vrot.slane %v4019, 6
  %v4074 = vsel %vm279, %v4072, %v4073
  %v4075 = vrot.slane %v4024, 6
  %v4076 = vsel %vm279, %v4073, %v4075
  %v4077 = vrot.slane %v4029, 6
  %v4078 = vsel %vm279, %v4075, %v4077
  %v4079 = vrot.slane %v4034, 6
  %v4080 = vsel %vm279, %v4077, %v4079
  %v4081 = vrot.slane %v4039, 6
  %v4082 = vsel %vm279, %v4079, %v4081
  %v4083 = vrot.slane %v4044, 6
  %v4084 = vsel %vm279, %v4081, %v4083
  %v4085 = vrot.slane %v4049, 6
  %v4086 = vsel %vm279, %v4083, %v4085
  %v4087 = vrot.slane %v4054, 6
  %v4088 = vsel %vm279, %v4085, %v4087
  %v4089 = vrot.slane %v4059, 6
  %v4090 = vsel %vm279, %v4087, %v4089
  %4091 = vrot.lane.b32.xlu0 %v4072, 127
  %v4092 = vpop.permute.xlu0 %4091
  %4093 = vrot.lane.b32.xlu0 %v4074, 127
  %v4094 = vpop.permute.xlu0 %4093
  %4095 = vrot.lane.b32.xlu0 %v4076, 127
  %v4096 = vpop.permute.xlu0 %4095
  %4097 = vrot.lane.b32.xlu0 %v4078, 127
  %v4098 = vpop.permute.xlu0 %4097
  %4099 = vrot.lane.b32.xlu0 %v4080, 127
  %v4100 = vpop.permute.xlu0 %4099
  %4101 = vrot.lane.b32.xlu0 %v4082, 127
  %v4102 = vpop.permute.xlu0 %4101
  %4103 = vrot.lane.b32.xlu0 %v4084, 127
  %v4104 = vpop.permute.xlu0 %4103
  %4105 = vrot.lane.b32.xlu0 %v4086, 127
  %v4106 = vpop.permute.xlu0 %4105
  %4107 = vrot.lane.b32.xlu0 %v4088, 127
  %v4108 = vpop.permute.xlu0 %4107
  %4109 = vrot.lane.b32.xlu0 %v4090, 127
  %v4110 = vpop.permute.xlu0 %4109
  %v4121 = vrot.slane %v4014, 4
  %v4122 = vrot.slane %v4019, 4
  %v4123 = vsel %vm311, %v4121, %v4122
  %v4124 = vrot.slane %v4024, 4
  %v4125 = vsel %vm311, %v4122, %v4124
  %v4126 = vrot.slane %v4029, 4
  %v4127 = vsel %vm311, %v4124, %v4126
  %v4128 = vrot.slane %v4034, 4
  %v4129 = vsel %vm311, %v4126, %v4128
  %v4130 = vrot.slane %v4039, 4
  %v4131 = vsel %vm311, %v4128, %v4130
  %v4132 = vrot.slane %v4044, 4
  %v4133 = vsel %vm311, %v4130, %v4132
  %v4134 = vrot.slane %v4049, 4
  %v4135 = vsel %vm311, %v4132, %v4134
  %v4136 = vrot.slane %v4054, 4
  %v4137 = vsel %vm311, %v4134, %v4136
  %v4138 = vrot.slane %v4059, 4
  %v4139 = vsel %vm311, %v4136, %v4138
  %4140 = vrot.lane.b32.xlu0 %v4121, 126
  %v4141 = vpop.permute.xlu0 %4140
  %4142 = vrot.lane.b32.xlu0 %v4123, 126
  %v4143 = vpop.permute.xlu0 %4142
  %4144 = vrot.lane.b32.xlu0 %v4125, 126
  %v4145 = vpop.permute.xlu0 %4144
  %4146 = vrot.lane.b32.xlu0 %v4127, 126
  %v4147 = vpop.permute.xlu0 %4146
  %4148 = vrot.lane.b32.xlu0 %v4129, 126
  %v4149 = vpop.permute.xlu0 %4148
  %4150 = vrot.lane.b32.xlu0 %v4131, 126
  %v4151 = vpop.permute.xlu0 %4150
  %4152 = vrot.lane.b32.xlu0 %v4133, 126
  %v4153 = vpop.permute.xlu0 %4152
  %4154 = vrot.lane.b32.xlu0 %v4135, 126
  %v4155 = vpop.permute.xlu0 %4154
  %4156 = vrot.lane.b32.xlu0 %v4137, 126
  %v4157 = vpop.permute.xlu0 %4156
  %4158 = vrot.lane.b32.xlu0 %v4139, 126
  %v4159 = vpop.permute.xlu0 %4158
  %v4170 = vrot.slane %v4014, 2
  %v4171 = vrot.slane %v4019, 2
  %v4172 = vsel %vm342, %v4170, %v4171
  %v4173 = vrot.slane %v4024, 2
  %v4174 = vsel %vm342, %v4171, %v4173
  %v4175 = vrot.slane %v4029, 2
  %v4176 = vsel %vm342, %v4173, %v4175
  %v4177 = vrot.slane %v4034, 2
  %v4178 = vsel %vm342, %v4175, %v4177
  %v4179 = vrot.slane %v4039, 2
  %v4180 = vsel %vm342, %v4177, %v4179
  %v4181 = vrot.slane %v4044, 2
  %v4182 = vsel %vm342, %v4179, %v4181
  %v4183 = vrot.slane %v4049, 2
  %v4184 = vsel %vm342, %v4181, %v4183
  %v4185 = vrot.slane %v4054, 2
  %v4186 = vsel %vm342, %v4183, %v4185
  %v4187 = vrot.slane %v4059, 2
  %v4188 = vsel %vm342, %v4185, %v4187
  %4189 = vrot.lane.b32.xlu0 %v4170, 125
  %v4190 = vpop.permute.xlu0 %4189
  %4191 = vrot.lane.b32.xlu0 %v4172, 125
  %v4192 = vpop.permute.xlu0 %4191
  %4193 = vrot.lane.b32.xlu0 %v4174, 125
  %v4194 = vpop.permute.xlu0 %4193
  %4195 = vrot.lane.b32.xlu0 %v4176, 125
  %v4196 = vpop.permute.xlu0 %4195
  %4197 = vrot.lane.b32.xlu0 %v4178, 125
  %v4198 = vpop.permute.xlu0 %4197
  %4199 = vrot.lane.b32.xlu0 %v4180, 125
  %v4200 = vpop.permute.xlu0 %4199
  %4201 = vrot.lane.b32.xlu0 %v4182, 125
  %v4202 = vpop.permute.xlu0 %4201
  %4203 = vrot.lane.b32.xlu0 %v4184, 125
  %v4204 = vpop.permute.xlu0 %4203
  %4205 = vrot.lane.b32.xlu0 %v4186, 125
  %v4206 = vpop.permute.xlu0 %4205
  %4207 = vrot.lane.b32.xlu0 %v4188, 125
  %v4208 = vpop.permute.xlu0 %4207
  %4219 = vrot.lane.b32.xlu0 %v4014, 124
  %v4220 = vpop.permute.xlu0 %4219
  %4221 = vrot.lane.b32.xlu0 %v4019, 124
  %v4222 = vpop.permute.xlu0 %4221
  %4223 = vrot.lane.b32.xlu0 %v4024, 124
  %v4224 = vpop.permute.xlu0 %4223
  %4225 = vrot.lane.b32.xlu0 %v4029, 124
  %v4226 = vpop.permute.xlu0 %4225
  %4227 = vrot.lane.b32.xlu0 %v4034, 124
  %v4228 = vpop.permute.xlu0 %4227
  %4229 = vrot.lane.b32.xlu0 %v4039, 124
  %v4230 = vpop.permute.xlu0 %4229
  %4231 = vrot.lane.b32.xlu0 %v4044, 124
  %v4232 = vpop.permute.xlu0 %4231
  %4233 = vrot.lane.b32.xlu0 %v4049, 124
  %v4234 = vpop.permute.xlu0 %4233
  %4235 = vrot.lane.b32.xlu0 %v4054, 124
  %v4236 = vpop.permute.xlu0 %4235
  %4237 = vrot.lane.b32.xlu0 %v4059, 124
  %v4238 = vpop.permute.xlu0 %4237
  %v4248 = vsel %vm279, %v4059, %v4092
  %v4249 = vsel %vm311, %v4110, %v4141
  %v4250 = vsel %vm342, %v4159, %v4190
  %v4251 = vld [vmem:[%s2] sm:$0xff]
  %v4252 = vld [vmem:[%s2 + $0x8] sm:$0xff]
  %v4253 = vld [vmem:[%s2 + $0x10] sm:$0xff]
  %v4254 = vld [vmem:[%s2 + $0x18] sm:$0xff]
  %v4255 = vld [vmem:[%s2 + $0x20] sm:$0xff]
  %v4256 = vld [vmem:[%s2 + $0x28] sm:$0xff]
  %v4257 = vld [vmem:[%s2 + $0x30] sm:$0xff]
  %v4258 = vld [vmem:[%s2 + $0x38] sm:$0xff]
  %v4259 = vld [vmem:[%s2 + $0x40] sm:$0xff]
  %v4260 = vld [vmem:[%s2 + $0x48] sm:$0xff]
  %v4261 = vld [vmem:[%s2 + $0x50] sm:$0xff]
  %v4262 = vld [vmem:[%s2 + $0x58] sm:$0xff]
  %v4263 = vld [vmem:[%s2 + $0x60] sm:$0xff]
  %v4264 = vld [vmem:[%s2 + $0x68] sm:$0xff]
  %v4265 = vld [vmem:[%s2 + $0x70] sm:$0xff]
  %v4266 = vld [vmem:[%s2 + $0x78] sm:$0xff]
  %v4267 = vld [vmem:[%s2 + $0x80] sm:$0xff]
  %v4268 = vld [vmem:[%s2 + $0x88] sm:$0xff]
  %v4269 = vld [vmem:[%s2 + $0x90] sm:$0xff]
  %v4270 = vld [vmem:[%s2 + $0x98] sm:$0xff]
  %v4271 = vld [vmem:[%s2 + $0xa0] sm:$0xff]
  %v4272 = vld [vmem:[%s2 + $0xa8] sm:$0xff]
  %v4273 = vld [vmem:[%s2 + $0xb0] sm:$0xff]
  %v4274 = vld [vmem:[%s2 + $0xb8] sm:$0xff]
  %v4275 = vld [vmem:[%s2 + $0xc0] sm:$0xff]
  %v4276 = vld [vmem:[%s2 + $0xc8] sm:$0xff]
  %v4277 = vld [vmem:[%s2 + $0xd0] sm:$0xff]
  %v4278 = vld [vmem:[%s2 + $0xd8] sm:$0xff]
  %v4279 = vld [vmem:[%s2 + $0xe0] sm:$0xff]
  %v4280 = vld [vmem:[%s2 + $0xe8] sm:$0xff]
  %v4281 = vld [vmem:[%s2 + $0xf0] sm:$0x3]
  %v4282 = vld [vmem:[%s2 + $0xf8] sm:$0x3]
  %v4283 = vld [vmem:[%s2 + $0x100] sm:$0x3]
  %vm4284 = vcmask 932864
  %v4286 = vsel %vm4284, %v4253, 0
  %v4289 = vsel %vm4284, %v4256, 0
  %v4292 = vsel %vm4284, %v4259, 0
  %v4295 = vsel %vm4284, %v4262, 0
  %v4298 = vsel %vm4284, %v4265, 0
  %v4301 = vsel %vm4284, %v4268, 0
  %v4304 = vsel %vm4284, %v4271, 0
  %v4307 = vsel %vm4284, %v4274, 0
  %v4310 = vsel %vm4284, %v4277, 0
  %v4313 = vsel %vm4284, %v4280, 0
  %v4316 = vsel %vm4284, %v4283, 0
  %v4318 = vsel %vm279, %v4238, 0
  %4320 = vmatprep.subr.mxu0 0.0
  %4321 = vmatpush1.msra.mxu0 %v4104
  %4322 = vmatprep.subr.mxu0 0.0
  %4323 = vmatpush1.msra.mxu0 %v4102
  %4324 = vmatprep.subr.mxu0 0.0
  %4325 = vmatpush1.msra.mxu0 %v4100
  %4326 = vmatprep.subr.mxu0 0.0
  %4327 = vmatpush1.msra.mxu0 %v4098
  %4328 = vmatprep.subr.mxu0 0.0
  %4329 = vmatpush1.msra.mxu0 %v4096
  %4330 = vmatprep.subr.mxu0 0.0
  %4331 = vmatpush1.msra.mxu0 %v4094
  %4332 = vmatprep.subr.mxu0 0.0
  %4333 = vmatpush1.msra.mxu0 %v4248
  %4334 = vmatprep.subr.mxu0 0.0
  %4335 = vmatpush1.msra.mxu0 %v4054
  %4336 = vmatprep.subr.mxu0 0.0
  %4337 = vmatpush1.msra.mxu0 %v4049
  %4338 = vmatprep.subr.mxu0 0.0
  %4339 = vmatpush1.msra.mxu0 %v4044
  %4340 = vmatprep.subr.mxu0 0.0
  %4341 = vmatpush1.msra.mxu0 %v4039
  %4342 = vmatprep.subr.mxu0 0.0
  %4343 = vmatpush1.msra.mxu0 %v4034
  %4344 = vmatprep.subr.mxu0 0.0
  %4345 = vmatpush1.msra.mxu0 %v4029
  %4346 = vmatprep.subr.mxu0 0.0
  %4347 = vmatpush1.msra.mxu0 %v4024
  %4348 = vmatprep.subr.mxu0 0.0
  %4349 = vmatpush1.msra.mxu0 %v4019
  %4350 = vmatprep.subr.mxu0 0.0
  %4351 = vmatpush1.msra.mxu0 %v4014
  %4352 = vmatprep.subr.mxu0 0.0
  %4353 = vmatpush2.msra.mxu0 %v4198
  %4354 = vmatprep.subr.mxu0 0.0
  %4355 = vmatpush2.msra.mxu0 %v4196
  %4356 = vmatprep.subr.mxu0 0.0
  %4357 = vmatpush2.msra.mxu0 %v4194
  %4358 = vmatprep.subr.mxu0 0.0
  %4359 = vmatpush2.msra.mxu0 %v4192
  %4360 = vmatprep.subr.mxu0 0.0
  %4361 = vmatpush2.msra.mxu0 %v4250
  %4362 = vmatprep.subr.mxu0 0.0
  %4363 = vmatpush2.msra.mxu0 %v4157
  %4364 = vmatprep.subr.mxu0 0.0
  %4365 = vmatpush2.msra.mxu0 %v4155
  %4366 = vmatprep.subr.mxu0 0.0
  %4367 = vmatpush2.msra.mxu0 %v4153
  %4368 = vmatprep.subr.mxu0 0.0
  %4369 = vmatpush2.msra.mxu0 %v4151
  %4370 = vmatprep.subr.mxu0 0.0
  %4371 = vmatpush2.msra.mxu0 %v4149
  %4372 = vmatprep.subr.mxu0 0.0
  %4373 = vmatpush2.msra.mxu0 %v4147
  %4374 = vmatprep.subr.mxu0 0.0
  %4375 = vmatpush2.msra.mxu0 %v4145
  %4376 = vmatprep.subr.mxu0 0.0
  %4377 = vmatpush2.msra.mxu0 %v4143
  %4378 = vmatprep.subr.mxu0 0.0
  %4379 = vmatpush2.msra.mxu0 %v4249
  %4380 = vmatprep.subr.mxu0 0.0
  %4381 = vmatpush2.msra.mxu0 %v4108
  %4382 = vmatprep.subr.mxu0 0.0
  %4383 = vmatpush2.msra.mxu0 %v4106
  %4384 = vmatprep.mubr.f32.mxu0 %v4252
  %4385 = vmatmul.mubr.f32.gmra.mxu0 %v4251
  %v4386 = vpop.f32.mrf.mxu0
  %v4387 = vadd.f32 0.0, %v4386
  %v4388 = vpop.f32.mrf.mxu0
  %4389 = vmatprep.mubr.f32.mxu0 %v4255
  %4390 = vmatmul.mubr.f32.gmra.mxu0 %v4254
  %v4391 = vpop.f32.mrf.mxu0
  %v4392 = vadd.f32 0.0, %v4391
  %v4393 = vpop.f32.mrf.mxu0
  %4394 = vmatprep.mubr.f32.mxu0 %v4258
  %4395 = vmatmul.mubr.f32.gmra.mxu0 %v4257
  %v4396 = vpop.f32.mrf.mxu0
  %v4397 = vadd.f32 0.0, %v4396
  %v4398 = vpop.f32.mrf.mxu0
  %4399 = vmatprep.mubr.f32.mxu0 %v4261
  %4400 = vmatmul.mubr.f32.gmra.mxu0 %v4260
  %v4401 = vpop.f32.mrf.mxu0
  %v4402 = vadd.f32 0.0, %v4401
  %v4403 = vpop.f32.mrf.mxu0
  %4404 = vmatprep.mubr.f32.mxu0 %v4264
  %4405 = vmatmul.mubr.f32.gmra.mxu0 %v4263
  %v4406 = vpop.f32.mrf.mxu0
  %v4407 = vadd.f32 0.0, %v4406
  %v4408 = vpop.f32.mrf.mxu0
  %4409 = vmatprep.mubr.f32.mxu0 %v4267
  %4410 = vmatmul.mubr.f32.gmra.mxu0 %v4266
  %v4411 = vpop.f32.mrf.mxu0
  %v4412 = vadd.f32 0.0, %v4411
  %v4413 = vpop.f32.mrf.mxu0
  %4414 = vmatprep.mubr.f32.mxu0 %v4270
  %4415 = vmatmul.mubr.f32.gmra.mxu0 %v4269
  %v4416 = vpop.f32.mrf.mxu0
  %v4417 = vadd.f32 0.0, %v4416
  %v4418 = vpop.f32.mrf.mxu0
  %4419 = vmatprep.mubr.f32.mxu0 %v4273
  %4420 = vmatmul.mubr.f32.gmra.mxu0 %v4272
  %v4421 = vpop.f32.mrf.mxu0
  %v4422 = vadd.f32 0.0, %v4421
  %v4423 = vpop.f32.mrf.mxu0
  %4424 = vmatprep.mubr.f32.mxu0 %v4276
  %4425 = vmatmul.mubr.f32.gmra.mxu0 %v4275
  %v4426 = vpop.f32.mrf.mxu0
  %v4427 = vadd.f32 0.0, %v4426
  %v4428 = vpop.f32.mrf.mxu0
  %4429 = vmatprep.mubr.f32.mxu0 %v4279
  %4430 = vmatmul.mubr.f32.gmra.mxu0 %v4278
  %v4431 = vpop.f32.mrf.mxu0
  %v4432 = vadd.f32 0.0, %v4431
  %v4433 = vpop.f32.mrf.mxu0
  %4434 = vmatprep.mubr.f32.mxu0 %v4282
  %4435 = vmatmul.mubr.f32.gmra.mxu0 %v4281
  %v4436 = vpop.f32.mrf.mxu0
  %v4437 = vadd.f32 0.0, %v4436
  %v4438 = vpop.f32.mrf.mxu0
  %4439 = vdwg.mxu0
  %4440 = vmatprep.subr.mxu0 0.0
  %4441 = vmatpush1.msra.mxu0 0.0
  %4442 = vmatprep.subr.mxu0 0.0
  %4443 = vmatpush1.msra.mxu0 %v4318
  %4444 = vmatprep.subr.mxu0 0.0
  %4445 = vmatpush1.msra.mxu0 %v4236
  %4446 = vmatprep.subr.mxu0 0.0
  %4447 = vmatpush1.msra.mxu0 %v4234
  %4448 = vmatprep.subr.mxu0 0.0
  %4449 = vmatpush1.msra.mxu0 %v4232
  %4450 = vmatprep.subr.mxu0 0.0
  %4451 = vmatpush1.msra.mxu0 %v4230
  %4452 = vmatprep.subr.mxu0 0.0
  %4453 = vmatpush1.msra.mxu0 %v4228
  %4454 = vmatprep.subr.mxu0 0.0
  %4455 = vmatpush1.msra.mxu0 %v4226
  %4456 = vmatprep.subr.mxu0 0.0
  %4457 = vmatpush1.msra.mxu0 %v4224
  %4458 = vmatprep.subr.mxu0 0.0
  %4459 = vmatpush1.msra.mxu0 %v4222
  %4460 = vmatprep.subr.mxu0 0.0
  %4461 = vmatpush1.msra.mxu0 %v4220
  %4462 = vmatprep.subr.mxu0 0.0
  %4463 = vmatpush1.msra.mxu0 %v4208
  %4464 = vmatprep.subr.mxu0 0.0
  %4465 = vmatpush1.msra.mxu0 %v4206
  %4466 = vmatprep.subr.mxu0 0.0
  %4467 = vmatpush1.msra.mxu0 %v4204
  %4468 = vmatprep.subr.mxu0 0.0
  %4469 = vmatpush1.msra.mxu0 %v4202
  %4470 = vmatprep.subr.mxu0 0.0
  %4471 = vmatpush1.msra.mxu0 %v4200
  %4472 = vmatprep.subr.mxu0 0.0
  %4473 = vmatpush2.msra.mxu0 0.0
  %4474 = vmatprep.subr.mxu0 0.0
  %4475 = vmatpush2.msra.mxu0 0.0
  %4476 = vmatprep.subr.mxu0 0.0
  %4477 = vmatpush2.msra.mxu0 0.0
  %4478 = vmatprep.subr.mxu0 0.0
  %4479 = vmatpush2.msra.mxu0 0.0
  %4480 = vmatprep.subr.mxu0 0.0
  %4481 = vmatpush2.msra.mxu0 0.0
  %4482 = vmatprep.subr.mxu0 0.0
  %4483 = vmatpush2.msra.mxu0 0.0
  %4484 = vmatprep.subr.mxu0 0.0
  %4485 = vmatpush2.msra.mxu0 0.0
  %4486 = vmatprep.subr.mxu0 0.0
  %4487 = vmatpush2.msra.mxu0 0.0
  %4488 = vmatprep.subr.mxu0 0.0
  %4489 = vmatpush2.msra.mxu0 0.0
  %4490 = vmatprep.subr.mxu0 0.0
  %4491 = vmatpush2.msra.mxu0 0.0
  %4492 = vmatprep.subr.mxu0 0.0
  %4493 = vmatpush2.msra.mxu0 0.0
  %4494 = vmatprep.subr.mxu0 0.0
  %4495 = vmatpush2.msra.mxu0 0.0
  %4496 = vmatprep.subr.mxu0 0.0
  %4497 = vmatpush2.msra.mxu0 0.0
  %4498 = vmatprep.subr.mxu0 0.0
  %4499 = vmatpush2.msra.mxu0 0.0
  %4500 = vmatprep.subr.mxu0 0.0
  %4501 = vmatpush2.msra.mxu0 0.0
  %4502 = vmatprep.subr.mxu0 0.0
  %4503 = vmatpush2.msra.mxu0 0.0
  %4504 = vmatprep.mubr.f32.mxu0 0.0
  %4505 = vmatmul.mubr.f32.gmra.mxu0 %v4286
  %v4506 = vpop.f32.mrf.mxu0
  %v4507 = vadd.f32 %v4387, %v4506
  %v4508 = vpop.f32.mrf.mxu0
  %4509 = vmatprep.mubr.f32.mxu0 0.0
  %4510 = vmatmul.mubr.f32.gmra.mxu0 %v4289
  %v4511 = vpop.f32.mrf.mxu0
  %v4512 = vadd.f32 %v4392, %v4511
  %v4513 = vpop.f32.mrf.mxu0
  %4514 = vmatprep.mubr.f32.mxu0 0.0
  %4515 = vmatmul.mubr.f32.gmra.mxu0 %v4292
  %v4516 = vpop.f32.mrf.mxu0
  %v4517 = vadd.f32 %v4397, %v4516
  %v4518 = vpop.f32.mrf.mxu0
  %4519 = vmatprep.mubr.f32.mxu0 0.0
  %4520 = vmatmul.mubr.f32.gmra.mxu0 %v4295
  %v4521 = vpop.f32.mrf.mxu0
  %v4522 = vadd.f32 %v4402, %v4521
  %v4523 = vpop.f32.mrf.mxu0
  %4524 = vmatprep.mubr.f32.mxu0 0.0
  %4525 = vmatmul.mubr.f32.gmra.mxu0 %v4298
  %v4526 = vpop.f32.mrf.mxu0
  %v4527 = vadd.f32 %v4407, %v4526
  %v4528 = vpop.f32.mrf.mxu0
  %4529 = vmatprep.mubr.f32.mxu0 0.0
  %4530 = vmatmul.mubr.f32.gmra.mxu0 %v4301
  %v4531 = vpop.f32.mrf.mxu0
  %v4532 = vadd.f32 %v4412, %v4531
  %v4533 = vpop.f32.mrf.mxu0
  %4534 = vmatprep.mubr.f32.mxu0 0.0
  %4535 = vmatmul.mubr.f32.gmra.mxu0 %v4304
  %v4536 = vpop.f32.mrf.mxu0
  %v4537 = vadd.f32 %v4417, %v4536
  %v4538 = vpop.f32.mrf.mxu0
  %4539 = vmatprep.mubr.f32.mxu0 0.0
  %4540 = vmatmul.mubr.f32.gmra.mxu0 %v4307
  %v4541 = vpop.f32.mrf.mxu0
  %v4542 = vadd.f32 %v4422, %v4541
  %v4543 = vpop.f32.mrf.mxu0
  %4544 = vmatprep.mubr.f32.mxu0 0.0
  %4545 = vmatmul.mubr.f32.gmra.mxu0 %v4310
  %v4546 = vpop.f32.mrf.mxu0
  %v4547 = vadd.f32 %v4427, %v4546
  %v4548 = vpop.f32.mrf.mxu0
  %4549 = vmatprep.mubr.f32.mxu0 0.0
  %4550 = vmatmul.mubr.f32.gmra.mxu0 %v4313
  %v4551 = vpop.f32.mrf.mxu0
  %v4552 = vadd.f32 %v4432, %v4551
  %v4553 = vpop.f32.mrf.mxu0
  %4554 = vmatprep.mubr.f32.mxu0 0.0
  %4555 = vmatmul.mubr.f32.gmra.mxu0 %v4316
  %v4556 = vpop.f32.mrf.mxu0
  %v4557 = vadd.f32 %v4437, %v4556
  %v4558 = vpop.f32.mrf.mxu0
  %4559 = vdwg.mxu0
  %4560 = vxpose.xlu0.b32.start [1/16] %v4507, 128
  %4561 = vxpose.xlu0.b32.cont [2/16] %v4512, 128
  %4562 = vxpose.xlu0.b32.cont [3/16] %v4517, 128
  %4563 = vxpose.xlu0.b32.cont [4/16] %v4522, 128
  %4564 = vxpose.xlu0.b32.cont [5/16] %v4527, 128
  %4565 = vxpose.xlu0.b32.cont [6/16] %v4532, 128
  %4566 = vxpose.xlu0.b32.cont [7/16] %v4537, 128
  %4567 = vxpose.xlu0.b32.cont [8/16] %v4542, 128
  %4568 = vxpose.xlu0.b32.cont [9/16] %v4547, 128
  %4569 = vxpose.xlu0.b32.cont [10/16] %v4552, 128
  %4570 = vxpose.xlu0.b32.cont [11/16] %v4557, 128
  %4571 = vxpose.xlu0.b32.cont [12/16] 0.0, 128
  %4572 = vxpose.xlu0.b32.cont [13/16] 0.0, 128
  %4573 = vxpose.xlu0.b32.cont [14/16] 0.0, 128
  %4574 = vxpose.xlu0.b32.cont [15/16] 0.0, 128
  %4575 = vxpose.xlu0.b32.end [16/16] 0.0, 128
  %v4576 = vpop.trf.xlu0
  %v4577 = vpop.trf.xlu0
  %v4578 = vpop.trf.xlu0
  %v4579 = vpop.trf.xlu0
  %v4580 = vpop.trf.xlu0
  %v4581 = vpop.trf.xlu0
  %v4582 = vpop.trf.xlu0
  %v4583 = vpop.trf.xlu0
  %v4584 = vpop.trf.xlu0
  %v4585 = vpop.trf.xlu0
  %v4586 = vpop.trf.xlu0
  %v4587 = vpop.trf.xlu0
  %v4588 = vpop.trf.xlu0
  %v4589 = vpop.trf.xlu0
  %v4590 = vpop.trf.xlu0
  %v4591 = vpop.trf.xlu0
  %v4592 = vld [vmem:[%s6 + $0x57] ss:$0 sm:$0xff]
  %4594 = vset.pattern.permute.xlu0 0
  %4595 = vperm.xlu0 %4594, %v4592
  %v4596 = vpop.permute.xlu0 %4595
  %v4598 = vadd.f32 %v4576, %v4596
  %v4599 = vtanh.pop %v4598
  %vm4600 = vcmask 663552
  %4601 = vst.msk [vmem:[%s7] sm:$0x1] %vm4600, %v4599
  // Predicated region
  $region30: #{conv1d_ae_forward.1} parent=0 // pred_check
    _
  $region31: #{conv1d_ae_forward.1} parent=0 // pred_check_branch
    %4603 = sbr.rel (0) target = $region33
  $region32: #{conv1d_ae_forward.1} parent=0 // pred_region
    _
  $region33: #{conv1d_ae_forward.1} parent=0 // pred_fallthru
    _
  // Predicated region
  $region34: #{conv1d_ae_forward.1} parent=0 // pred_check
    _
  $region35: #{conv1d_ae_forward.1} parent=0 // pred_check_branch
    %4605 = sbr.rel (0) target = $region37
  $region36: #{conv1d_ae_forward.1} parent=0 // pred_region
    _
  $region37: #{conv1d_ae_forward.1} parent=0 // pred_fallthru
    _

</llo_original>
